<compile_context>
chip_gen: v5e
topology: v5e:2x2
jax: 0.10.0
libtpu: 0.0.40
codegen_flags: <defaults>
</compile_context>

<pallas_src>
import math
import functools

import jax
import jax.numpy as jnp
from jax import lax
from jax.experimental import pallas as pl
from jax.experimental.pallas import tpu as pltpu


# ----------------------------- numerics helpers -----------------------------
def _sigmoid(x):
    return 1.0 / (1.0 + jnp.exp(-x))


def _silu(x):
    return x * _sigmoid(x)


def _softplus(x):
    # numerically stable softplus built from ops that lower cleanly on TPU
    return jnp.maximum(x, 0.0) + jnp.log(1.0 + jnp.exp(-jnp.abs(x)))


_PAD = 8      # 8-aligned history rows kept at the top of the conv staging buf


# --------------------------------- kernel -----------------------------------
def mamba_kernel(h_ref, w_in_ref, conv_w_ref, conv_b_ref, w_dtx_ref, w_b_ref,
                 w_c_ref, w_dt_ref, dt_bias_ref, At_ref, D_ref, w_out_ref,
                 out_ref,
                 xpad_s, xconv_s, delta_s, z_s, y_s, b_s, c_s, h_s,
                 *, seq_tile, d_inner, d_state, d_conv, chunk, lane_block):
    TL = seq_tile
    CH = chunk
    DB = lane_block
    n_db = d_inner // DB
    lt = pl.program_id(1)                               # sequence-tile index

    # ---- per-sequence init (first tile) / conv-tail carry (later tiles) ----
    @pl.when(lt == 0)
    def _():
        h_s[...] = jnp.zeros_like(h_s)
        xpad_s[pl.ds(0, _PAD), :] = jnp.zeros((_PAD, d_inner), jnp.float32)

    @pl.when(lt > 0)
    def _():
        # carry the last _PAD conv-input rows of the previous tile (8-aligned)
        xpad_s[pl.ds(0, _PAD), :] = xpad_s[pl.ds(TL, _PAD), :]

    # ---- in_proj: xz = h @ W_in (bf16 MXU, f32 accumulate) ------------------
    hmat = h_ref[0].astype(jnp.bfloat16)                # (TL, d_model)
    xz = jnp.dot(hmat, w_in_ref[...], preferred_element_type=jnp.float32)
    x = xz[:, :d_inner]                                 # (TL, d_inner)
    z_s[...] = xz[:, d_inner:]                          # (TL, d_inner)

    # ---- causal depthwise conv1d (kernel=d_conv) + SiLU ---------------------
    xpad_s[pl.ds(_PAD, TL), :] = x
    acc = jnp.zeros((TL, d_inner), jnp.float32)
    for k in range(d_conv):                             # static unroll
        off = _PAD - (d_conv - 1) + k
        acc = acc + xpad_s[pl.ds(off, TL), :] * conv_w_ref[k:k + 1, :]
    xconv = _silu(acc + conv_b_ref[...])                # (TL, d_inner)
    xconv_s[...] = xconv
    xconv_bf = xconv.astype(jnp.bfloat16)

    # ---- x_proj split into three lane-aligned matmuls -----------------------
    b_s[...] = jnp.dot(xconv_bf, w_b_ref[...],
                       preferred_element_type=jnp.float32)   # (TL, d_state)
    c_s[...] = jnp.dot(xconv_bf, w_c_ref[...],
                       preferred_element_type=jnp.float32)   # (TL, d_state)
    x_dt = jnp.dot(xconv_bf, w_dtx_ref[...],
                   preferred_element_type=jnp.float32)       # (TL, dt_rank)

    # ---- dt_proj + softplus (delta_softplus=True, bias folded in) -----------
    dt = jnp.dot(x_dt.astype(jnp.bfloat16), w_dt_ref[...],
                 preferred_element_type=jnp.float32)         # (TL, d_inner)
    delta_s[...] = _softplus(dt + dt_bias_ref[...])

    # ---- chunked, lane-blocked selective scan over the tile ------------------
    At = At_ref[...]                                    # (d_state, d_inner)
    D_row = D_ref[...]                                  # (1, d_inner)

    def chunk_body(ci, carry):
        c = pl.multiple_of(ci * CH, CH)
        delta_c = delta_s[pl.ds(c, CH), :]              # (CH, d_inner)
        u_c = xconv_s[pl.ds(c, CH), :]                  # (CH, d_inner)
        du_c = delta_c * u_c                            # (CH, d_inner)
        bb = b_s[pl.ds(c, CH), :][:, :, None]           # (CH, d_state, 1)
        cb = c_s[pl.ds(c, CH), :][:, :, None]           # (CH, d_state, 1)
        z_c = z_s[pl.ds(c, CH), :]                      # (CH, d_inner)

        y_parts = []
        for db in range(n_db):                          # static lane-block loop
            sl = slice(db * DB, (db + 1) * DB)
            # hoisted EUP / broadcast work for the whole chunk
            dA = jnp.exp(delta_c[:, None, sl] * At[None, :, sl])  # (CH,N,DB)
            dBu = du_c[:, None, sl] * bb                           # (CH,N,DB)
            h = h_s[:, sl]                                         # (N, DB)
            hs = []
            for i in range(CH):                         # pure-VPU serial carry
                h = h * dA[i] + dBu[i]
                hs.append(h)
            h_s[:, sl] = h
            h_all = jnp.stack(hs, axis=0)                          # (CH,N,DB)
            y_parts.append(jnp.sum(h_all * cb, axis=1))            # (CH, DB)

        y_c = y_parts[0] if n_db == 1 else jnp.concatenate(y_parts, axis=-1)
        # fused D-skip + SiLU(z) gate at chunk granularity
        y_c = (y_c + D_row * u_c) * _silu(z_c)
        y_s[pl.ds(c, CH), :] = y_c.astype(y_s.dtype)
        return carry

    n_chunks = TL // CH
    unroll = 2 if (n_chunks > 1 and n_chunks % 2 == 0) else 1
    lax.fori_loop(0, n_chunks, chunk_body, 0, unroll=unroll)

    # ---- out_proj ------------------------------------------------------------
    out_ref[0] = jnp.dot(y_s[...].astype(jnp.bfloat16), w_out_ref[...],
                         preferred_element_type=jnp.float32)


# --------------------------------- wrapper ----------------------------------
def _choose_seq_tile(L, target):
    t = max(8, min(L, target))
    t -= t % 8
    while t >= 8:
        if L % t == 0:
            return t
        t -= 8
    raise ValueError(f"seqlen {L} needs a multiple-of-8 divisor >= 8")


def mamba_forward(hidden_states, params, *, d_state, d_conv, dt_rank,
                  seq_tile_target=None, single_buffer_weights=True):
    B, L, d_model = hidden_states.shape
    W_in, conv_w, conv_b, W_x, W_dt, dt_bias, At, Dvec, W_out = params
    d_inner = W_in.shape[1] // 2
    assert d_conv - 1 <= _PAD

    # VMEM capacity (v5e/v6e 128 MiB, v7x 64 MiB per TC); safe fallback.
    try:
        vmem_cap = int(pltpu.get_tpu_info().vmem_capacity_bytes)
    except Exception:
        vmem_cap = 64 * 2 ** 20

    if seq_tile_target is None:
        seq_tile_target = 128 if vmem_cap <= 64 * 2 ** 20 else 256

    TL = _choose_seq_tile(L, seq_tile_target)
    n_lt = L // TL
    CH = 16 if TL % 16 == 0 else 8                      # chunk length
    DB = d_inner                                        # lane-block width
    if d_inner > 512:
        for cand in (512, 256, 128):
            if d_inner % cand == 0:
                DB = cand
                break
    # bf16 y staging only when chunk stores stay 16-row aligned (packed tiles)
    y_dtype = jnp.bfloat16 if CH % 16 == 0 else jnp.float32

    # bf16 weights for the MXU; accumulation stays f32.  x_proj is split into
    # dt / B / C pieces so every matmul output is lane-aligned.
    bf = jnp.bfloat16
    W_in_b = W_in.astype(bf)
    W_dtx_b = W_x[:, :dt_rank].astype(bf)
    W_b_b = W_x[:, dt_rank:dt_rank + d_state].astype(bf)
    W_c_b = W_x[:, dt_rank + d_state:dt_rank + 2 * d_state].astype(bf)
    W_dt_b = W_dt.astype(bf)
    W_out_b = W_out.astype(bf)

    kernel = functools.partial(
        mamba_kernel, seq_tile=TL, d_inner=d_inner, d_state=d_state,
        d_conv=d_conv, chunk=CH, lane_block=DB)

    def const_spec(shape):
        nd = len(shape)
        idx = lambda b, t, _nd=nd: (0,) * _nd
        if single_buffer_weights:
            # block index never changes -> a second pipeline buffer is waste
            return pl.BlockSpec(shape, idx, pipeline_mode=pl.Buffered(1))
        return pl.BlockSpec(shape, idx)

    grid_spec = pltpu.PrefetchScalarGridSpec(
        num_scalar_prefetch=0,
        grid=(B, n_lt),
        in_specs=[
            pl.BlockSpec((1, TL, d_model), lambda b, t: (b, t, 0)),
            const_spec((d_model, 2 * d_inner)),          # W_in
            const_spec((d_conv, d_inner)),               # conv weight
            const_spec((1, d_inner)),                    # conv bias
            const_spec((d_inner, dt_rank)),              # W_x (dt part)
            const_spec((d_inner, d_state)),              # W_x (B part)
            const_spec((d_inner, d_state)),              # W_x (C part)
            const_spec((dt_rank, d_inner)),              # W_dt
            const_spec((1, d_inner)),                    # dt bias
            const_spec((d_state, d_inner)),              # A^T
            const_spec((1, d_inner)),                    # D
            const_spec((d_inner, d_model)),              # W_out
        ],
        out_specs=pl.BlockSpec((1, TL, d_model), lambda b, t: (b, t, 0)),
        scratch_shapes=[
            pltpu.VMEM((_PAD + TL, d_inner), jnp.float32),   # conv staging+tail
            pltpu.VMEM((TL, d_inner), jnp.float32),          # xconv
            pltpu.VMEM((TL, d_inner), jnp.float32),          # delta
            pltpu.VMEM((TL, d_inner), jnp.float32),          # z
            pltpu.VMEM((TL, d_inner), y_dtype),              # y (pre-out_proj)
            pltpu.VMEM((TL, d_state), jnp.float32),          # B
            pltpu.VMEM((TL, d_state), jnp.float32),          # C
            pltpu.VMEM((d_state, d_inner), jnp.float32),     # SSM state (carried)
        ],
    )

    # VMEM budget: scratch + double-buffered activation blocks + weights.
    f32b, bf16b = 4, 2
    ybytes = 2 if y_dtype == jnp.bfloat16 else 4
    scr = (f32b * ((_PAD + TL) * d_inner + 3 * TL * d_inner
                   + 2 * TL * d_state + d_state * d_inner)
           + ybytes * TL * d_inner)
    blk = 2 * 2 * f32b * TL * d_model
    nbuf = 1 if single_buffer_weights else 2
    wgt = nbuf * (bf16b * (d_model * 2 * d_inner
                           + d_inner * (dt_rank + 2 * d_state)
                           + dt_rank * d_inner + d_inner * d_model)
                  + f32b * (d_conv * d_inner + 3 * d_inner + d_state * d_inner))
    need = scr + blk + wgt
    vmem_limit = int(max(16 * 2 ** 20,
                         min(vmem_cap - 8 * 2 ** 20,
                             max(32 * 2 ** 20, 2 * need))))

    return pl.pallas_call(
        kernel,
        out_shape=jax.ShapeDtypeStruct((B, L, d_model), jnp.float32),
        grid_spec=grid_spec,
        compiler_params=pltpu.CompilerParams(
            # batch parallel (megacore), recurrent sequence-tile axis ordered
            dimension_semantics=("parallel", "arbitrary"),
            vmem_limit_bytes=vmem_limit),
    )(hidden_states, W_in_b, conv_w, conv_b, W_dtx_b, W_b_b, W_c_b, W_dt_b,
      dt_bias, At, Dvec, W_out_b)


# ------------------------- pure-JAX reference (check) ------------------------
def mamba_reference(h, params, *, d_state, d_conv, dt_rank):
    W_in, conv_w, conv_b, W_x, W_dt, dt_bias, At, Dvec, W_out = params
    B, L, d_model = h.shape
    d_inner = W_in.shape[1] // 2
    bf, f32 = jnp.bfloat16, jnp.float32

    xz = jnp.einsum('bld,de->ble', h.astype(bf), W_in.astype(bf),
                    preferred_element_type=f32)
    x, z = xz[..., :d_inner], xz[..., d_inner:]

    xpad = jnp.pad(x, ((0, 0), (d_conv - 1, 0), (0, 0)))
    conv = sum(xpad[:, k:k + L, :] * conv_w[k][None, None, :]
               for k in range(d_conv)) + conv_b[None]
    xc = _silu(conv)

    x_dbl = jnp.einsum('bld,de->ble', xc.astype(bf), W_x.astype(bf),
                       preferred_element_type=f32)
    dt_in = x_dbl[..., :dt_rank]
    Bm = x_dbl[..., dt_rank:dt_rank + d_state]
    Cm = x_dbl[..., dt_rank + d_state:]
    delta = _softplus(jnp.einsum('blr,rd->bld', dt_in.astype(bf),
                                 W_dt.astype(bf), preferred_element_type=f32)
                      + dt_bias[None])

    A = At.T                                                  # (d_inner, d_state)

    def scan_one(xc_b, delta_b, B_b, C_b):
        def step(hst, inputs):
            d_l, x_l, b_l, c_l = inputs
            dA = jnp.exp(d_l[:, None] * A)
            hst = hst * dA + (d_l * x_l)[:, None] * b_l[None, :]
            y_l = jnp.sum(hst * c_l[None, :], axis=1)
            return hst, y_l
        _, ys = lax.scan(step, jnp.zeros((d_inner, d_state), jnp.float32),
                         (delta_b, xc_b, B_b, C_b))
        return ys

    y = jax.vmap(scan_one)(xc, delta, Bm, Cm)
    y = y + Dvec * xc
    y = y * _silu(z)
    return jnp.einsum('bld,de->ble', y.astype(bf), W_out.astype(bf),
                      preferred_element_type=f32)


# --------------------------------- main --------------------------------------
if __name__ == "__main__":
    d_model, d_state, d_conv, expand = 32, 16, 4, 2
    d_inner = expand * d_model
    dt_rank = math.ceil(d_model / 16)
    B, L = 2, 16
    dt_min, dt_max, dt_init_floor = 0.001, 0.1, 1e-4

    key = jax.random.PRNGKey(0)
    ks = jax.random.split(key, 8)

    def uni(k, shape, bound):
        return jax.random.uniform(k, shape, jnp.float32, -bound, bound)

    # Parameters (shapes match the PyTorch module; pre-transposed for x @ W).
    W_in = uni(ks[0], (d_model, 2 * d_inner), 1.0 / math.sqrt(d_model))
    conv_w = uni(ks[1], (d_conv, d_inner), 1.0 / math.sqrt(d_conv))
    conv_b = uni(ks[2], (1, d_inner), 1.0 / math.sqrt(d_conv))
    W_x = uni(ks[3], (d_inner, dt_rank + 2 * d_state), 1.0 / math.sqrt(d_inner))
    dt_init_std = dt_rank ** (-0.5)
    W_dt = uni(ks[4], (dt_rank, d_inner), dt_init_std)
    # dt_proj.bias = inverse-softplus of dt sampled log-uniform in [dt_min, dt_max]
    dt = jnp.exp(jax.random.uniform(ks[5], (d_inner,), jnp.float32)
                 * (math.log(dt_max) - math.log(dt_min)) + math.log(dt_min))
    dt = jnp.maximum(dt, dt_init_floor)
    dt_bias = (dt + jnp.log(-jnp.expm1(-dt))).reshape(1, d_inner)
    # A_log = log(arange(1..d_state)) broadcast over d_inner; A = -exp(A_log)
    A_log = jnp.log(jnp.broadcast_to(
        jnp.arange(1, d_state + 1, dtype=jnp.float32)[None, :],
        (d_inner, d_state)))
    At = (-jnp.exp(A_log)).T                                  # (d_state, d_inner)
    Dvec = jnp.ones((1, d_inner), jnp.float32)
    W_out = uni(ks[6], (d_inner, d_model), 1.0 / math.sqrt(d_inner))

    params = (W_in, conv_w, conv_b, W_x, W_dt, dt_bias, At, Dvec, W_out)

    hidden_states = jax.random.normal(ks[7], (B, L, d_model), jnp.float32)

    # seq_tile_target=8 with L=16 exercises the multi-tile carry path
    # (conv tail + SSM state handed across sequence tiles).
    run = functools.partial(
        mamba_forward, hidden_states, params,
        d_state=d_state, d_conv=d_conv, dt_rank=dt_rank, seq_tile_target=8)
    try:
        out = jax.block_until_ready(run(single_buffer_weights=True))
    except Exception:
        # pipeline_mode=pl.Buffered(1) not supported on this jax build; fall
        # back to default double-buffered weight blocks (identical numerics).
        out = jax.block_until_ready(run(single_buffer_weights=False))

    ref = jax.block_until_ready(
        mamba_reference(hidden_states, params,
                        d_state=d_state, d_conv=d_conv, dt_rank=dt_rank))

    assert out.shape == (B, L, d_model)
    assert bool(jnp.all(jnp.isfinite(out)))
    assert bool(jnp.allclose(out, ref, rtol=2e-2, atol=2e-2)), \
        float(jnp.max(jnp.abs(out - ref)))

    print("KERNEL_OK")
</pallas_src>

<mosaic_0001>
module attributes {stable_mosaic.version = 11 : i64} {
  func.func @mamba_kernel(%arg0: i32, %arg1: i32, %arg2: memref<1x8x32xf32, #tpu.memory_space<vmem>>, %arg3: memref<32x128xbf16, #tpu.memory_space<vmem>>, %arg4: memref<4x64xf32, #tpu.memory_space<vmem>>, %arg5: memref<1x64xf32, #tpu.memory_space<vmem>>, %arg6: memref<64x2xbf16, #tpu.memory_space<vmem>>, %arg7: memref<64x16xbf16, #tpu.memory_space<vmem>>, %arg8: memref<64x16xbf16, #tpu.memory_space<vmem>>, %arg9: memref<2x64xbf16, #tpu.memory_space<vmem>>, %arg10: memref<1x64xf32, #tpu.memory_space<vmem>>, %arg11: memref<16x64xf32, #tpu.memory_space<vmem>>, %arg12: memref<1x64xf32, #tpu.memory_space<vmem>>, %arg13: memref<64x32xbf16, #tpu.memory_space<vmem>>, %arg14: memref<1x8x32xf32, #tpu.memory_space<vmem>>, %arg15: memref<16x64xf32, #tpu.memory_space<vmem>>, %arg16: memref<8x64xf32, #tpu.memory_space<vmem>>, %arg17: memref<8x64xf32, #tpu.memory_space<vmem>>, %arg18: memref<8x64xf32, #tpu.memory_space<vmem>>, %arg19: memref<8x64xf32, #tpu.memory_space<vmem>>, %arg20: memref<8x16xf32, #tpu.memory_space<vmem>>, %arg21: memref<8x16xf32, #tpu.memory_space<vmem>>, %arg22: memref<16x64xf32, #tpu.memory_space<vmem>>) attributes {dimension_semantics = [#tpu.dimension_semantics<parallel>, #tpu.dimension_semantics<arbitrary>], iteration_bounds = array<i64: 2, 2>, scalar_prefetch = 0 : i64, scratch_operands = 8 : i64, tpu.core_type = #tpu.core_type<tc>, window_params = [{transform_indices = @transform_0, window_bounds = array<i64: 1, 8, 32>}, {pipeline_mode = #tpu.pipeline_mode<synchronous>, transform_indices = @transform_1, window_bounds = array<i64: 32, 128>}, {pipeline_mode = #tpu.pipeline_mode<synchronous>, transform_indices = @transform_2, window_bounds = array<i64: 4, 64>}, {pipeline_mode = #tpu.pipeline_mode<synchronous>, transform_indices = @transform_3, window_bounds = array<i64: 1, 64>}, {pipeline_mode = #tpu.pipeline_mode<synchronous>, transform_indices = @transform_4, window_bounds = array<i64: 64, 2>}, {pipeline_mode = #tpu.pipeline_mode<synchronous>, transform_indices = @transform_5, window_bounds = array<i64: 64, 16>}, {pipeline_mode = #tpu.pipeline_mode<synchronous>, transform_indices = @transform_6, window_bounds = array<i64: 64, 16>}, {pipeline_mode = #tpu.pipeline_mode<synchronous>, transform_indices = @transform_7, window_bounds = array<i64: 2, 64>}, {pipeline_mode = #tpu.pipeline_mode<synchronous>, transform_indices = @transform_8, window_bounds = array<i64: 1, 64>}, {pipeline_mode = #tpu.pipeline_mode<synchronous>, transform_indices = @transform_9, window_bounds = array<i64: 16, 64>}, {pipeline_mode = #tpu.pipeline_mode<synchronous>, transform_indices = @transform_10, window_bounds = array<i64: 1, 64>}, {pipeline_mode = #tpu.pipeline_mode<synchronous>, transform_indices = @transform_11, window_bounds = array<i64: 64, 32>}, {transform_indices = @transform_12, window_bounds = array<i64: 1, 8, 32>}]} {
    %c0_i32 = arith.constant 0 : i32
    %0 = arith.cmpi eq, %arg1, %c0_i32 : i32
    %1 = arith.extui %0 : i1 to i32
    %c0_i32_0 = arith.constant 0 : i32
    %2 = arith.cmpi ne, %1, %c0_i32_0 : i32
    scf.if %2 {
      %cst_78 = arith.constant 0.000000e+00 : f32
      %184 = vector.broadcast %cst_78 : f32 to vector<16x64xf32>
      %c0_79 = arith.constant 0 : index
      %c0_80 = arith.constant 0 : index
      %185 = vector.load %arg22[%c0_79, %c0_80] : memref<16x64xf32, #tpu.memory_space<vmem>>, vector<16x64xf32>
      tpu.vector_store %arg22[%c0_79, %c0_80], %184 {strides = array<i32>} : memref<16x64xf32, #tpu.memory_space<vmem>>, vector<16x64xf32>,
      %cst_81 = arith.constant 0.000000e+00 : f32
      %186 = vector.broadcast %cst_81 : f32 to vector<8x64xf32>
      %c0_82 = arith.constant 0 : index
      %c0_83 = arith.constant 0 : index
      %187 = vector.load %arg15[%c0_82, %c0_83] : memref<16x64xf32, #tpu.memory_space<vmem>>, vector<8x64xf32>
      tpu.vector_store %arg15[%c0_82, %c0_83], %186 {strides = array<i32>} : memref<16x64xf32, #tpu.memory_space<vmem>>, vector<8x64xf32>,
    } else {
    }
    %c0_i32_1 = arith.constant 0 : i32
    %3 = arith.cmpi sgt, %arg1, %c0_i32_1 : i32
    %4 = arith.extui %3 : i1 to i32
    %c0_i32_2 = arith.constant 0 : i32
    %5 = arith.cmpi ne, %4, %c0_i32_2 : i32
    scf.if %5 {
      %c8_78 = arith.constant 8 : index
      %c0_79 = arith.constant 0 : index
      %184 = vector.load %arg15[%c8_78, %c0_79] : memref<16x64xf32, #tpu.memory_space<vmem>>, vector<8x64xf32>
      %c0_80 = arith.constant 0 : index
      %c0_81 = arith.constant 0 : index
      %185 = vector.load %arg15[%c0_80, %c0_81] : memref<16x64xf32, #tpu.memory_space<vmem>>, vector<8x64xf32>
      tpu.vector_store %arg15[%c0_80, %c0_81], %184 {strides = array<i32>} : memref<16x64xf32, #tpu.memory_space<vmem>>, vector<8x64xf32>,
    } else {
    }
    %c0 = arith.constant 0 : index
    %c0_3 = arith.constant 0 : index
    %c0_4 = arith.constant 0 : index
    %6 = vector.load %arg2[%c0, %c0_3, %c0_4] : memref<1x8x32xf32, #tpu.memory_space<vmem>>, vector<1x8x32xf32>
    %7 = vector.shape_cast %6 : vector<1x8x32xf32> to vector<8x32xf32>
    %8 = arith.truncf %7 : vector<8x32xf32> to vector<8x32xbf16>
    %c0_5 = arith.constant 0 : index
    %c0_6 = arith.constant 0 : index
    %9 = vector.load %arg3[%c0_5, %c0_6] : memref<32x128xbf16, #tpu.memory_space<vmem>>, vector<32x128xbf16>
    %cst = arith.constant dense<0.000000e+00> : vector<8x128xf32>
    %10 = tpu.matmul %8, %9, %cst {dimension_numbers = #tpu.dot_dimension_numbers<[1], [0], [0], [1], [0, 0, 1, 1], [], []>} : vector<8x32xbf16>, vector<32x128xbf16>, vector<8x128xf32> -> vector<8x128xf32>
    %11 = vector.extract_strided_slice %10 {offsets = [0, 0], sizes = [8, 64], strides = [1, 1]} : vector<8x128xf32> to vector<8x64xf32>
    %12 = vector.extract_strided_slice %10 {offsets = [0, 64], sizes = [8, 64], strides = [1, 1]} : vector<8x128xf32> to vector<8x64xf32>
    %c0_7 = arith.constant 0 : index
    %c0_8 = arith.constant 0 : index
    %13 = vector.load %arg18[%c0_7, %c0_8] : memref<8x64xf32, #tpu.memory_space<vmem>>, vector<8x64xf32>
    tpu.vector_store %arg18[%c0_7, %c0_8], %12 {strides = array<i32>} : memref<8x64xf32, #tpu.memory_space<vmem>>, vector<8x64xf32>,
    %c8 = arith.constant 8 : index
    %c0_9 = arith.constant 0 : index
    %14 = vector.load %arg15[%c8, %c0_9] : memref<16x64xf32, #tpu.memory_space<vmem>>, vector<8x64xf32>
    tpu.vector_store %arg15[%c8, %c0_9], %11 {strides = array<i32>} : memref<16x64xf32, #tpu.memory_space<vmem>>, vector<8x64xf32>,
    %cst_10 = arith.constant 0.000000e+00 : f32
    %15 = vector.broadcast %cst_10 : f32 to vector<8x64xf32>
    %c5 = arith.constant 5 : index
    %c0_11 = arith.constant 0 : index
    %16 = vector.load %arg15[%c5, %c0_11] : memref<16x64xf32, #tpu.memory_space<vmem>>, vector<8x64xf32>
    %c0_12 = arith.constant 0 : index
    %c0_13 = arith.constant 0 : index
    %17 = vector.load %arg4[%c0_12, %c0_13] : memref<4x64xf32, #tpu.memory_space<vmem>>, vector<1x64xf32>
    %18 = vector.broadcast %17 : vector<1x64xf32> to vector<8x64xf32>
    %19 = arith.mulf %16, %18 : vector<8x64xf32>
    %20 = arith.addf %15, %19 : vector<8x64xf32>
    %c6 = arith.constant 6 : index
    %c0_14 = arith.constant 0 : index
    %21 = vector.load %arg15[%c6, %c0_14] : memref<16x64xf32, #tpu.memory_space<vmem>>, vector<8x64xf32>
    %c1 = arith.constant 1 : index
    %c0_15 = arith.constant 0 : index
    %22 = vector.load %arg4[%c1, %c0_15] : memref<4x64xf32, #tpu.memory_space<vmem>>, vector<1x64xf32>
    %23 = vector.broadcast %22 : vector<1x64xf32> to vector<8x64xf32>
    %24 = arith.mulf %21, %23 : vector<8x64xf32>
    %25 = arith.addf %20, %24 : vector<8x64xf32>
    %c7 = arith.constant 7 : index
    %c0_16 = arith.constant 0 : index
    %26 = vector.load %arg15[%c7, %c0_16] : memref<16x64xf32, #tpu.memory_space<vmem>>, vector<8x64xf32>
    %c2 = arith.constant 2 : index
    %c0_17 = arith.constant 0 : index
    %27 = vector.load %arg4[%c2, %c0_17] : memref<4x64xf32, #tpu.memory_space<vmem>>, vector<1x64xf32>
    %28 = vector.broadcast %27 : vector<1x64xf32> to vector<8x64xf32>
    %29 = arith.mulf %26, %28 : vector<8x64xf32>
    %30 = arith.addf %25, %29 : vector<8x64xf32>
    %c8_18 = arith.constant 8 : index
    %c0_19 = arith.constant 0 : index
    %31 = vector.load %arg15[%c8_18, %c0_19] : memref<16x64xf32, #tpu.memory_space<vmem>>, vector<8x64xf32>
    %c3 = arith.constant 3 : index
    %c0_20 = arith.constant 0 : index
    %32 = vector.load %arg4[%c3, %c0_20] : memref<4x64xf32, #tpu.memory_space<vmem>>, vector<1x64xf32>
    %33 = vector.broadcast %32 : vector<1x64xf32> to vector<8x64xf32>
    %34 = arith.mulf %31, %33 : vector<8x64xf32>
    %35 = arith.addf %30, %34 : vector<8x64xf32>
    %c0_21 = arith.constant 0 : index
    %c0_22 = arith.constant 0 : index
    %36 = vector.load %arg5[%c0_21, %c0_22] : memref<1x64xf32, #tpu.memory_space<vmem>>, vector<1x64xf32>
    %37 = vector.broadcast %36 : vector<1x64xf32> to vector<8x64xf32>
    %38 = arith.addf %35, %37 : vector<8x64xf32>
    %cst_23 = arith.constant 0.000000e+00 : f32
    %39 = vector.broadcast %cst_23 : f32 to vector<8x64xf32>
    %40 = arith.subf %39, %38 : vector<8x64xf32>
    %41 = math.exp %40 : vector<8x64xf32>
    %cst_24 = arith.constant 1.000000e+00 : f32
    %42 = vector.broadcast %cst_24 : f32 to vector<8x64xf32>
    %43 = arith.addf %42, %41 : vector<8x64xf32>
    %cst_25 = arith.constant 1.000000e+00 : f32
    %44 = vector.broadcast %cst_25 : f32 to vector<8x64xf32>
    %45 = arith.divf %44, %43 : vector<8x64xf32>
    %46 = arith.mulf %38, %45 : vector<8x64xf32>
    %c0_26 = arith.constant 0 : index
    %c0_27 = arith.constant 0 : index
    %47 = vector.load %arg16[%c0_26, %c0_27] : memref<8x64xf32, #tpu.memory_space<vmem>>, vector<8x64xf32>
    tpu.vector_store %arg16[%c0_26, %c0_27], %46 {strides = array<i32>} : memref<8x64xf32, #tpu.memory_space<vmem>>, vector<8x64xf32>,
    %48 = arith.truncf %46 : vector<8x64xf32> to vector<8x64xbf16>
    %c0_28 = arith.constant 0 : index
    %c0_29 = arith.constant 0 : index
    %49 = vector.load %arg7[%c0_28, %c0_29] : memref<64x16xbf16, #tpu.memory_space<vmem>>, vector<64x16xbf16>
    %cst_30 = arith.constant dense<0.000000e+00> : vector<8x16xf32>
    %50 = tpu.matmul %48, %49, %cst_30 {dimension_numbers = #tpu.dot_dimension_numbers<[1], [0], [0], [1], [0, 0, 1, 1], [], []>} : vector<8x64xbf16>, vector<64x16xbf16>, vector<8x16xf32> -> vector<8x16xf32>
    %c0_31 = arith.constant 0 : index
    %c0_32 = arith.constant 0 : index
    %51 = vector.load %arg20[%c0_31, %c0_32] : memref<8x16xf32, #tpu.memory_space<vmem>>, vector<8x16xf32>
    tpu.vector_store %arg20[%c0_31, %c0_32], %50 {strides = array<i32>} : memref<8x16xf32, #tpu.memory_space<vmem>>, vector<8x16xf32>,
    %c0_33 = arith.constant 0 : index
    %c0_34 = arith.constant 0 : index
    %52 = vector.load %arg8[%c0_33, %c0_34] : memref<64x16xbf16, #tpu.memory_space<vmem>>, vector<64x16xbf16>
    %cst_35 = arith.constant dense<0.000000e+00> : vector<8x16xf32>
    %53 = tpu.matmul %48, %52, %cst_35 {dimension_numbers = #tpu.dot_dimension_numbers<[1], [0], [0], [1], [0, 0, 1, 1], [], []>} : vector<8x64xbf16>, vector<64x16xbf16>, vector<8x16xf32> -> vector<8x16xf32>
    %c0_36 = arith.constant 0 : index
    %c0_37 = arith.constant 0 : index
    %54 = vector.load %arg21[%c0_36, %c0_37] : memref<8x16xf32, #tpu.memory_space<vmem>>, vector<8x16xf32>
    tpu.vector_store %arg21[%c0_36, %c0_37], %53 {strides = array<i32>} : memref<8x16xf32, #tpu.memory_space<vmem>>, vector<8x16xf32>,
    %c0_38 = arith.constant 0 : index
    %c0_39 = arith.constant 0 : index
    %55 = vector.load %arg6[%c0_38, %c0_39] : memref<64x2xbf16, #tpu.memory_space<vmem>>, vector<64x2xbf16>
    %cst_40 = arith.constant dense<0.000000e+00> : vector<8x2xf32>
    %56 = tpu.matmul %48, %55, %cst_40 {dimension_numbers = #tpu.dot_dimension_numbers<[1], [0], [0], [1], [0, 0, 1, 1], [], []>} : vector<8x64xbf16>, vector<64x2xbf16>, vector<8x2xf32> -> vector<8x2xf32>
    %57 = arith.truncf %56 : vector<8x2xf32> to vector<8x2xbf16>
    %c0_41 = arith.constant 0 : index
    %c0_42 = arith.constant 0 : index
    %58 = vector.load %arg9[%c0_41, %c0_42] : memref<2x64xbf16, #tpu.memory_space<vmem>>, vector<2x64xbf16>
    %cst_43 = arith.constant dense<0.000000e+00> : vector<8x64xf32>
    %59 = tpu.matmul %57, %58, %cst_43 {dimension_numbers = #tpu.dot_dimension_numbers<[1], [0], [0], [1], [0, 0, 1, 1], [], []>} : vector<8x2xbf16>, vector<2x64xbf16>, vector<8x64xf32> -> vector<8x64xf32>
    %c0_44 = arith.constant 0 : index
    %c0_45 = arith.constant 0 : index
    %60 = vector.load %arg10[%c0_44, %c0_45] : memref<1x64xf32, #tpu.memory_space<vmem>>, vector<1x64xf32>
    %61 = vector.broadcast %60 : vector<1x64xf32> to vector<8x64xf32>
    %62 = arith.addf %59, %61 : vector<8x64xf32>
    %cst_46 = arith.constant 0.000000e+00 : f32
    %63 = vector.broadcast %cst_46 : f32 to vector<8x64xf32>
    %64 = arith.maximumf %62, %63 : vector<8x64xf32>
    %65 = math.absf %62 : vector<8x64xf32>
    %cst_47 = arith.constant 0.000000e+00 : f32
    %66 = vector.broadcast %cst_47 : f32 to vector<8x64xf32>
    %67 = arith.subf %66, %65 : vector<8x64xf32>
    %68 = math.exp %67 : vector<8x64xf32>
    %cst_48 = arith.constant 1.000000e+00 : f32
    %69 = vector.broadcast %cst_48 : f32 to vector<8x64xf32>
    %70 = arith.addf %69, %68 : vector<8x64xf32>
    %71 = math.log %70 : vector<8x64xf32>
    %72 = arith.addf %64, %71 : vector<8x64xf32>
    %c0_49 = arith.constant 0 : index
    %c0_50 = arith.constant 0 : index
    %73 = vector.load %arg17[%c0_49, %c0_50] : memref<8x64xf32, #tpu.memory_space<vmem>>, vector<8x64xf32>
    tpu.vector_store %arg17[%c0_49, %c0_50], %72 {strides = array<i32>} : memref<8x64xf32, #tpu.memory_space<vmem>>, vector<8x64xf32>,
    %c0_51 = arith.constant 0 : index
    %c0_52 = arith.constant 0 : index
    %74 = vector.load %arg11[%c0_51, %c0_52] : memref<16x64xf32, #tpu.memory_space<vmem>>, vector<16x64xf32>
    %c0_53 = arith.constant 0 : index
    %c0_54 = arith.constant 0 : index
    %75 = vector.load %arg12[%c0_53, %c0_54] : memref<1x64xf32, #tpu.memory_space<vmem>>, vector<1x64xf32>
    %c0_i32_55 = arith.constant 0 : i32
    %c8_i32 = arith.constant 8 : i32
    %76 = arith.muli %c0_i32_55, %c8_i32 : i32
    %77 = tpu.assume_multiple %76, 8 : i32
    %78 = arith.index_cast %77 : i32 to index
    %c0_56 = arith.constant 0 : index
    %79 = vector.load %arg17[%78, %c0_56] : memref<8x64xf32, #tpu.memory_space<vmem>>, vector<8x64xf32>
    %80 = arith.index_cast %77 : i32 to index
    %c0_57 = arith.constant 0 : index
    %81 = vector.load %arg16[%80, %c0_57] : memref<8x64xf32, #tpu.memory_space<vmem>>, vector<8x64xf32>
    %82 = arith.mulf %79, %81 : vector<8x64xf32>
    %83 = arith.index_cast %77 : i32 to index
    %c0_58 = arith.constant 0 : index
    %84 = vector.load %arg20[%83, %c0_58] : memref<8x16xf32, #tpu.memory_space<vmem>>, vector<8x16xf32>
    %85 = vector.shape_cast %84 : vector<8x16xf32> to vector<8x16x1xf32>
    %86 = arith.index_cast %77 : i32 to index
    %c0_59 = arith.constant 0 : index
    %87 = vector.load %arg21[%86, %c0_59] : memref<8x16xf32, #tpu.memory_space<vmem>>, vector<8x16xf32>
    %88 = vector.shape_cast %87 : vector<8x16xf32> to vector<8x16x1xf32>
    %89 = arith.index_cast %77 : i32 to index
    %c0_60 = arith.constant 0 : index
    %90 = vector.load %arg18[%89, %c0_60] : memref<8x64xf32, #tpu.memory_space<vmem>>, vector<8x64xf32>
    %91 = vector.shape_cast %79 : vector<8x64xf32> to vector<8x1x64xf32>
    %92 = vector.shape_cast %74 : vector<16x64xf32> to vector<1x16x64xf32>
    %93 = vector.broadcast %91 : vector<8x1x64xf32> to vector<8x16x64xf32>
    %94 = vector.broadcast %92 : vector<1x16x64xf32> to vector<8x16x64xf32>
    %95 = arith.mulf %93, %94 : vector<8x16x64xf32>
    %96 = math.exp %95 : vector<8x16x64xf32>
    %97 = vector.shape_cast %82 : vector<8x64xf32> to vector<8x1x64xf32>
    %98 = vector.broadcast %97 : vector<8x1x64xf32> to vector<8x16x64xf32>
    %99 = vector.broadcast %85 : vector<8x16x1xf32> to vector<8x16x64xf32>
    %100 = arith.mulf %98, %99 : vector<8x16x64xf32>
    %c0_61 = arith.constant 0 : index
    %c0_62 = arith.constant 0 : index
    %101 = vector.load %arg22[%c0_61, %c0_62] : memref<16x64xf32, #tpu.memory_space<vmem>>, vector<16x64xf32>
    %102 = vector.extract_strided_slice %96 {offsets = [0, 0, 0], sizes = [1, 16, 64], strides = [1, 1, 1]} : vector<8x16x64xf32> to vector<1x16x64xf32>
    %103 = vector.shape_cast %102 : vector<1x16x64xf32> to vector<16x64xf32>
    %104 = arith.mulf %101, %103 : vector<16x64xf32>
    %105 = vector.extract_strided_slice %100 {offsets = [0, 0, 0], sizes = [1, 16, 64], strides = [1, 1, 1]} : vector<8x16x64xf32> to vector<1x16x64xf32>
    %106 = vector.shape_cast %105 : vector<1x16x64xf32> to vector<16x64xf32>
    %107 = arith.addf %104, %106 : vector<16x64xf32>
    %108 = vector.extract_strided_slice %96 {offsets = [1, 0, 0], sizes = [1, 16, 64], strides = [1, 1, 1]} : vector<8x16x64xf32> to vector<1x16x64xf32>
    %109 = vector.shape_cast %108 : vector<1x16x64xf32> to vector<16x64xf32>
    %110 = arith.mulf %107, %109 : vector<16x64xf32>
    %111 = vector.extract_strided_slice %100 {offsets = [1, 0, 0], sizes = [1, 16, 64], strides = [1, 1, 1]} : vector<8x16x64xf32> to vector<1x16x64xf32>
    %112 = vector.shape_cast %111 : vector<1x16x64xf32> to vector<16x64xf32>
    %113 = arith.addf %110, %112 : vector<16x64xf32>
    %114 = vector.extract_strided_slice %96 {offsets = [2, 0, 0], sizes = [1, 16, 64], strides = [1, 1, 1]} : vector<8x16x64xf32> to vector<1x16x64xf32>
    %115 = vector.shape_cast %114 : vector<1x16x64xf32> to vector<16x64xf32>
    %116 = arith.mulf %113, %115 : vector<16x64xf32>
    %117 = vector.extract_strided_slice %100 {offsets = [2, 0, 0], sizes = [1, 16, 64], strides = [1, 1, 1]} : vector<8x16x64xf32> to vector<1x16x64xf32>
    %118 = vector.shape_cast %117 : vector<1x16x64xf32> to vector<16x64xf32>
    %119 = arith.addf %116, %118 : vector<16x64xf32>
    %120 = vector.extract_strided_slice %96 {offsets = [3, 0, 0], sizes = [1, 16, 64], strides = [1, 1, 1]} : vector<8x16x64xf32> to vector<1x16x64xf32>
    %121 = vector.shape_cast %120 : vector<1x16x64xf32> to vector<16x64xf32>
    %122 = arith.mulf %119, %121 : vector<16x64xf32>
    %123 = vector.extract_strided_slice %100 {offsets = [3, 0, 0], sizes = [1, 16, 64], strides = [1, 1, 1]} : vector<8x16x64xf32> to vector<1x16x64xf32>
    %124 = vector.shape_cast %123 : vector<1x16x64xf32> to vector<16x64xf32>
    %125 = arith.addf %122, %124 : vector<16x64xf32>
    %126 = vector.extract_strided_slice %96 {offsets = [4, 0, 0], sizes = [1, 16, 64], strides = [1, 1, 1]} : vector<8x16x64xf32> to vector<1x16x64xf32>
    %127 = vector.shape_cast %126 : vector<1x16x64xf32> to vector<16x64xf32>
    %128 = arith.mulf %125, %127 : vector<16x64xf32>
    %129 = vector.extract_strided_slice %100 {offsets = [4, 0, 0], sizes = [1, 16, 64], strides = [1, 1, 1]} : vector<8x16x64xf32> to vector<1x16x64xf32>
    %130 = vector.shape_cast %129 : vector<1x16x64xf32> to vector<16x64xf32>
    %131 = arith.addf %128, %130 : vector<16x64xf32>
    %132 = vector.extract_strided_slice %96 {offsets = [5, 0, 0], sizes = [1, 16, 64], strides = [1, 1, 1]} : vector<8x16x64xf32> to vector<1x16x64xf32>
    %133 = vector.shape_cast %132 : vector<1x16x64xf32> to vector<16x64xf32>
    %134 = arith.mulf %131, %133 : vector<16x64xf32>
    %135 = vector.extract_strided_slice %100 {offsets = [5, 0, 0], sizes = [1, 16, 64], strides = [1, 1, 1]} : vector<8x16x64xf32> to vector<1x16x64xf32>
    %136 = vector.shape_cast %135 : vector<1x16x64xf32> to vector<16x64xf32>
    %137 = arith.addf %134, %136 : vector<16x64xf32>
    %138 = vector.extract_strided_slice %96 {offsets = [6, 0, 0], sizes = [1, 16, 64], strides = [1, 1, 1]} : vector<8x16x64xf32> to vector<1x16x64xf32>
    %139 = vector.shape_cast %138 : vector<1x16x64xf32> to vector<16x64xf32>
    %140 = arith.mulf %137, %139 : vector<16x64xf32>
    %141 = vector.extract_strided_slice %100 {offsets = [6, 0, 0], sizes = [1, 16, 64], strides = [1, 1, 1]} : vector<8x16x64xf32> to vector<1x16x64xf32>
    %142 = vector.shape_cast %141 : vector<1x16x64xf32> to vector<16x64xf32>
    %143 = arith.addf %140, %142 : vector<16x64xf32>
    %144 = vector.extract_strided_slice %96 {offsets = [7, 0, 0], sizes = [1, 16, 64], strides = [1, 1, 1]} : vector<8x16x64xf32> to vector<1x16x64xf32>
    %145 = vector.shape_cast %144 : vector<1x16x64xf32> to vector<16x64xf32>
    %146 = arith.mulf %143, %145 : vector<16x64xf32>
    %147 = vector.extract_strided_slice %100 {offsets = [7, 0, 0], sizes = [1, 16, 64], strides = [1, 1, 1]} : vector<8x16x64xf32> to vector<1x16x64xf32>
    %148 = vector.shape_cast %147 : vector<1x16x64xf32> to vector<16x64xf32>
    %149 = arith.addf %146, %148 : vector<16x64xf32>
    %c0_63 = arith.constant 0 : index
    %c0_64 = arith.constant 0 : index
    %150 = vector.load %arg22[%c0_63, %c0_64] : memref<16x64xf32, #tpu.memory_space<vmem>>, vector<16x64xf32>
    tpu.vector_store %arg22[%c0_63, %c0_64], %149 {strides = array<i32>} : memref<16x64xf32, #tpu.memory_space<vmem>>, vector<16x64xf32>,
    %151 = vector.shape_cast %107 : vector<16x64xf32> to vector<1x16x64xf32>
    %152 = vector.shape_cast %113 : vector<16x64xf32> to vector<1x16x64xf32>
    %153 = vector.shape_cast %119 : vector<16x64xf32> to vector<1x16x64xf32>
    %154 = vector.shape_cast %125 : vector<16x64xf32> to vector<1x16x64xf32>
    %155 = vector.shape_cast %131 : vector<16x64xf32> to vector<1x16x64xf32>
    %156 = vector.shape_cast %137 : vector<16x64xf32> to vector<1x16x64xf32>
    %157 = vector.shape_cast %143 : vector<16x64xf32> to vector<1x16x64xf32>
    %158 = vector.shape_cast %149 : vector<16x64xf32> to vector<1x16x64xf32>
    %159 = tpu.concatenate %151, %152, %153, %154, %155, %156, %157, %158 in 0 : vector<1x16x64xf32>, vector<1x16x64xf32>, vector<1x16x64xf32>, vector<1x16x64xf32>, vector<1x16x64xf32>, vector<1x16x64xf32>, vector<1x16x64xf32>, vector<1x16x64xf32> -> vector<8x16x64xf32>
    %160 = vector.broadcast %88 : vector<8x16x1xf32> to vector<8x16x64xf32>
    %161 = arith.mulf %159, %160 : vector<8x16x64xf32>
    %cst_65 = arith.constant dense<0.000000e+00> : vector<8x64xf32>
    %162 = vector.multi_reduction <add>, %161, %cst_65 [1] : vector<8x16x64xf32> to vector<8x64xf32>
    %163 = vector.broadcast %75 : vector<1x64xf32> to vector<8x64xf32>
    %164 = arith.mulf %163, %81 : vector<8x64xf32>
    %165 = arith.addf %162, %164 : vector<8x64xf32>
    %cst_66 = arith.constant 0.000000e+00 : f32
    %166 = vector.broadcast %cst_66 : f32 to vector<8x64xf32>
    %167 = arith.subf %166, %90 : vector<8x64xf32>
    %168 = math.exp %167 : vector<8x64xf32>
    %cst_67 = arith.constant 1.000000e+00 : f32
    %169 = vector.broadcast %cst_67 : f32 to vector<8x64xf32>
    %170 = arith.addf %169, %168 : vector<8x64xf32>
    %cst_68 = arith.constant 1.000000e+00 : f32
    %171 = vector.broadcast %cst_68 : f32 to vector<8x64xf32>
    %172 = arith.divf %171, %170 : vector<8x64xf32>
    %173 = arith.mulf %90, %172 : vector<8x64xf32>
    %174 = arith.mulf %165, %173 : vector<8x64xf32>
    %175 = arith.index_cast %77 : i32 to index
    %c0_69 = arith.constant 0 : index
    %176 = vector.load %arg19[%175, %c0_69] : memref<8x64xf32, #tpu.memory_space<vmem>>, vector<8x64xf32>
    tpu.vector_store %arg19[%175, %c0_69], %174 {strides = array<i32>} : memref<8x64xf32, #tpu.memory_space<vmem>>, vector<8x64xf32>,
    %c1_i32 = arith.constant 1 : i32
    %c0_70 = arith.constant 0 : index
    %c0_71 = arith.constant 0 : index
    %177 = vector.load %arg19[%c0_70, %c0_71] : memref<8x64xf32, #tpu.memory_space<vmem>>, vector<8x64xf32>
    %178 = arith.truncf %177 : vector<8x64xf32> to vector<8x64xbf16>
    %c0_72 = arith.constant 0 : index
    %c0_73 = arith.constant 0 : index
    %179 = vector.load %arg13[%c0_72, %c0_73] : memref<64x32xbf16, #tpu.memory_space<vmem>>, vector<64x32xbf16>
    %cst_74 = arith.constant dense<0.000000e+00> : vector<8x32xf32>
    %180 = tpu.matmul %178, %179, %cst_74 {dimension_numbers = #tpu.dot_dimension_numbers<[1], [0], [0], [1], [0, 0, 1, 1], [], []>} : vector<8x64xbf16>, vector<64x32xbf16>, vector<8x32xf32> -> vector<8x32xf32>
    %c0_75 = arith.constant 0 : index
    %c0_76 = arith.constant 0 : index
    %c0_77 = arith.constant 0 : index
    %181 = vector.load %arg14[%c0_75, %c0_76, %c0_77] : memref<1x8x32xf32, #tpu.memory_space<vmem>>, vector<1x8x32xf32>
    %182 = vector.shape_cast %181 : vector<1x8x32xf32> to vector<8x32xf32>
    %183 = vector.shape_cast %180 : vector<8x32xf32> to vector<1x8x32xf32>
    tpu.vector_store %arg14[%c0_75, %c0_76, %c0_77], %183 {strides = array<i32>} : memref<1x8x32xf32, #tpu.memory_space<vmem>>, vector<1x8x32xf32>,
    return
  }
  func.func @transform_0(%arg0: i32, %arg1: i32) -> (i32, i32, i32) {
    %c0_i32 = arith.constant 0 : i32
    %c0_i32_0 = arith.constant 0 : i32
    return %arg0, %arg1, %c0_i32 : i32, i32, i32
  }
  func.func @transform_1(%arg0: i32, %arg1: i32) -> (i32, i32) {
    %c0_i32 = arith.constant 0 : i32
    %c0_i32_0 = arith.constant 0 : i32
    %c0_i32_1 = arith.constant 0 : i32
    return %c0_i32, %c0_i32_0 : i32, i32
  }
  func.func @transform_2(%arg0: i32, %arg1: i32) -> (i32, i32) {
    %c0_i32 = arith.constant 0 : i32
    %c0_i32_0 = arith.constant 0 : i32
    %c0_i32_1 = arith.constant 0 : i32
    return %c0_i32, %c0_i32_0 : i32, i32
  }
  func.func @transform_3(%arg0: i32, %arg1: i32) -> (i32, i32) {
    %c0_i32 = arith.constant 0 : i32
    %c0_i32_0 = arith.constant 0 : i32
    %c0_i32_1 = arith.constant 0 : i32
    return %c0_i32, %c0_i32_0 : i32, i32
  }
  func.func @transform_4(%arg0: i32, %arg1: i32) -> (i32, i32) {
    %c0_i32 = arith.constant 0 : i32
    %c0_i32_0 = arith.constant 0 : i32
    %c0_i32_1 = arith.constant 0 : i32
    return %c0_i32, %c0_i32_0 : i32, i32
  }
  func.func @transform_5(%arg0: i32, %arg1: i32) -> (i32, i32) {
    %c0_i32 = arith.constant 0 : i32
    %c0_i32_0 = arith.constant 0 : i32
    %c0_i32_1 = arith.constant 0 : i32
    return %c0_i32, %c0_i32_0 : i32, i32
  }
  func.func @transform_6(%arg0: i32, %arg1: i32) -> (i32, i32) {
    %c0_i32 = arith.constant 0 : i32
    %c0_i32_0 = arith.constant 0 : i32
    %c0_i32_1 = arith.constant 0 : i32
    return %c0_i32, %c0_i32_0 : i32, i32
  }
  func.func @transform_7(%arg0: i32, %arg1: i32) -> (i32, i32) {
    %c0_i32 = arith.constant 0 : i32
    %c0_i32_0 = arith.constant 0 : i32
    %c0_i32_1 = arith.constant 0 : i32
    return %c0_i32, %c0_i32_0 : i32, i32
  }
  func.func @transform_8(%arg0: i32, %arg1: i32) -> (i32, i32) {
    %c0_i32 = arith.constant 0 : i32
    %c0_i32_0 = arith.constant 0 : i32
    %c0_i32_1 = arith.constant 0 : i32
    return %c0_i32, %c0_i32_0 : i32, i32
  }
  func.func @transform_9(%arg0: i32, %arg1: i32) -> (i32, i32) {
    %c0_i32 = arith.constant 0 : i32
    %c0_i32_0 = arith.constant 0 : i32
    %c0_i32_1 = arith.constant 0 : i32
    return %c0_i32, %c0_i32_0 : i32, i32
  }
  func.func @transform_10(%arg0: i32, %arg1: i32) -> (i32, i32) {
    %c0_i32 = arith.constant 0 : i32
    %c0_i32_0 = arith.constant 0 : i32
    %c0_i32_1 = arith.constant 0 : i32
    return %c0_i32, %c0_i32_0 : i32, i32
  }
  func.func @transform_11(%arg0: i32, %arg1: i32) -> (i32, i32) {
    %c0_i32 = arith.constant 0 : i32
    %c0_i32_0 = arith.constant 0 : i32
    %c0_i32_1 = arith.constant 0 : i32
    return %c0_i32, %c0_i32_0 : i32, i32
  }
  func.func @transform_12(%arg0: i32, %arg1: i32) -> (i32, i32, i32) {
    %c0_i32 = arith.constant 0 : i32
    %c0_i32_0 = arith.constant 0 : i32
    return %arg0, %arg1, %c0_i32 : i32, i32, i32
  }
}

module attributes {stable_mosaic.version = 11 : i64} {
  func.func @mamba_kernel(%arg0: i32, %arg1: i32, %arg2: memref<1x8x32xf32, #tpu.memory_space<vmem>>, %arg3: memref<32x128xbf16, #tpu.memory_space<vmem>>, %arg4: memref<4x64xf32, #tpu.memory_space<vmem>>, %arg5: memref<1x64xf32, #tpu.memory_space<vmem>>, %arg6: memref<64x2xbf16, #tpu.memory_space<vmem>>, %arg7: memref<64x16xbf16, #tpu.memory_space<vmem>>, %arg8: memref<64x16xbf16, #tpu.memory_space<vmem>>, %arg9: memref<2x64xbf16, #tpu.memory_space<vmem>>, %arg10: memref<1x64xf32, #tpu.memory_space<vmem>>, %arg11: memref<16x64xf32, #tpu.memory_space<vmem>>, %arg12: memref<1x64xf32, #tpu.memory_space<vmem>>, %arg13: memref<64x32xbf16, #tpu.memory_space<vmem>>, %arg14: memref<1x8x32xf32, #tpu.memory_space<vmem>>, %arg15: memref<16x64xf32, #tpu.memory_space<vmem>>, %arg16: memref<8x64xf32, #tpu.memory_space<vmem>>, %arg17: memref<8x64xf32, #tpu.memory_space<vmem>>, %arg18: memref<8x64xf32, #tpu.memory_space<vmem>>, %arg19: memref<8x64xf32, #tpu.memory_space<vmem>>, %arg20: memref<8x16xf32, #tpu.memory_space<vmem>>, %arg21: memref<8x16xf32, #tpu.memory_space<vmem>>, %arg22: memref<16x64xf32, #tpu.memory_space<vmem>>) attributes {dimension_semantics = [#tpu.dimension_semantics<parallel>, #tpu.dimension_semantics<arbitrary>], iteration_bounds = array<i64: 2, 2>, scalar_prefetch = 0 : i64, scratch_operands = 8 : i64, tpu.core_type = #tpu.core_type<tc>, window_params = [{transform_indices = @transform_0, window_bounds = array<i64: 1, 8, 32>}, {pipeline_mode = #tpu.pipeline_mode<synchronous>, transform_indices = @transform_1, window_bounds = array<i64: 32, 128>}, {pipeline_mode = #tpu.pipeline_mode<synchronous>, transform_indices = @transform_2, window_bounds = array<i64: 4, 64>}, {pipeline_mode = #tpu.pipeline_mode<synchronous>, transform_indices = @transform_3, window_bounds = array<i64: 1, 64>}, {pipeline_mode = #tpu.pipeline_mode<synchronous>, transform_indices = @transform_4, window_bounds = array<i64: 64, 2>}, {pipeline_mode = #tpu.pipeline_mode<synchronous>, transform_indices = @transform_5, window_bounds = array<i64: 64, 16>}, {pipeline_mode = #tpu.pipeline_mode<synchronous>, transform_indices = @transform_6, window_bounds = array<i64: 64, 16>}, {pipeline_mode = #tpu.pipeline_mode<synchronous>, transform_indices = @transform_7, window_bounds = array<i64: 2, 64>}, {pipeline_mode = #tpu.pipeline_mode<synchronous>, transform_indices = @transform_8, window_bounds = array<i64: 1, 64>}, {pipeline_mode = #tpu.pipeline_mode<synchronous>, transform_indices = @transform_9, window_bounds = array<i64: 16, 64>}, {pipeline_mode = #tpu.pipeline_mode<synchronous>, transform_indices = @transform_10, window_bounds = array<i64: 1, 64>}, {pipeline_mode = #tpu.pipeline_mode<synchronous>, transform_indices = @transform_11, window_bounds = array<i64: 64, 32>}, {transform_indices = @transform_12, window_bounds = array<i64: 1, 8, 32>}]} {
    %c0_i32 = arith.constant 0 : i32
    %0 = arith.cmpi eq, %arg1, %c0_i32 : i32
    %1 = arith.extui %0 : i1 to i32
    %c0_i32_0 = arith.constant 0 : i32
    %2 = arith.cmpi ne, %1, %c0_i32_0 : i32
    scf.if %2 {
      %cst_78 = arith.constant 0.000000e+00 : f32
      %184 = vector.broadcast %cst_78 : f32 to vector<16x64xf32>
      %c0_79 = arith.constant 0 : index
      %c0_80 = arith.constant 0 : index
      %185 = vector.load %arg22[%c0_79, %c0_80] : memref<16x64xf32, #tpu.memory_space<vmem>>, vector<16x64xf32>
      tpu.vector_store %arg22[%c0_79, %c0_80], %184 {strides = array<i32>} : memref<16x64xf32, #tpu.memory_space<vmem>>, vector<16x64xf32>,
      %cst_81 = arith.constant 0.000000e+00 : f32
      %186 = vector.broadcast %cst_81 : f32 to vector<8x64xf32>
      %c0_82 = arith.constant 0 : index
      %c0_83 = arith.constant 0 : index
      %187 = vector.load %arg15[%c0_82, %c0_83] : memref<16x64xf32, #tpu.memory_space<vmem>>, vector<8x64xf32>
      tpu.vector_store %arg15[%c0_82, %c0_83], %186 {strides = array<i32>} : memref<16x64xf32, #tpu.memory_space<vmem>>, vector<8x64xf32>,
    } else {
    }
    %c0_i32_1 = arith.constant 0 : i32
    %3 = arith.cmpi sgt, %arg1, %c0_i32_1 : i32
    %4 = arith.extui %3 : i1 to i32
    %c0_i32_2 = arith.constant 0 : i32
    %5 = arith.cmpi ne, %4, %c0_i32_2 : i32
    scf.if %5 {
      %c8_78 = arith.constant 8 : index
      %c0_79 = arith.constant 0 : index
      %184 = vector.load %arg15[%c8_78, %c0_79] : memref<16x64xf32, #tpu.memory_space<vmem>>, vector<8x64xf32>
      %c0_80 = arith.constant 0 : index
      %c0_81 = arith.constant 0 : index
      %185 = vector.load %arg15[%c0_80, %c0_81] : memref<16x64xf32, #tpu.memory_space<vmem>>, vector<8x64xf32>
      tpu.vector_store %arg15[%c0_80, %c0_81], %184 {strides = array<i32>} : memref<16x64xf32, #tpu.memory_space<vmem>>, vector<8x64xf32>,
    } else {
    }
    %c0 = arith.constant 0 : index
    %c0_3 = arith.constant 0 : index
    %c0_4 = arith.constant 0 : index
    %6 = vector.load %arg2[%c0, %c0_3, %c0_4] : memref<1x8x32xf32, #tpu.memory_space<vmem>>, vector<1x8x32xf32>
    %7 = vector.shape_cast %6 : vector<1x8x32xf32> to vector<8x32xf32>
    %8 = arith.truncf %7 : vector<8x32xf32> to vector<8x32xbf16>
    %c0_5 = arith.constant 0 : index
    %c0_6 = arith.constant 0 : index
    %9 = vector.load %arg3[%c0_5, %c0_6] : memref<32x128xbf16, #tpu.memory_space<vmem>>, vector<32x128xbf16>
    %cst = arith.constant dense<0.000000e+00> : vector<8x128xf32>
    %10 = tpu.matmul %8, %9, %cst {dimension_numbers = #tpu.dot_dimension_numbers<[1], [0], [0], [1], [0, 0, 1, 1], [], []>} : vector<8x32xbf16>, vector<32x128xbf16>, vector<8x128xf32> -> vector<8x128xf32>
    %11 = vector.extract_strided_slice %10 {offsets = [0, 0], sizes = [8, 64], strides = [1, 1]} : vector<8x128xf32> to vector<8x64xf32>
    %12 = vector.extract_strided_slice %10 {offsets = [0, 64], sizes = [8, 64], strides = [1, 1]} : vector<8x128xf32> to vector<8x64xf32>
    %c0_7 = arith.constant 0 : index
    %c0_8 = arith.constant 0 : index
    %13 = vector.load %arg18[%c0_7, %c0_8] : memref<8x64xf32, #tpu.memory_space<vmem>>, vector<8x64xf32>
    tpu.vector_store %arg18[%c0_7, %c0_8], %12 {strides = array<i32>} : memref<8x64xf32, #tpu.memory_space<vmem>>, vector<8x64xf32>,
    %c8 = arith.constant 8 : index
    %c0_9 = arith.constant 0 : index
    %14 = vector.load %arg15[%c8, %c0_9] : memref<16x64xf32, #tpu.memory_space<vmem>>, vector<8x64xf32>
    tpu.vector_store %arg15[%c8, %c0_9], %11 {strides = array<i32>} : memref<16x64xf32, #tpu.memory_space<vmem>>, vector<8x64xf32>,
    %cst_10 = arith.constant 0.000000e+00 : f32
    %15 = vector.broadcast %cst_10 : f32 to vector<8x64xf32>
    %c5 = arith.constant 5 : index
    %c0_11 = arith.constant 0 : index
    %16 = vector.load %arg15[%c5, %c0_11] : memref<16x64xf32, #tpu.memory_space<vmem>>, vector<8x64xf32>
    %c0_12 = arith.constant 0 : index
    %c0_13 = arith.constant 0 : index
    %17 = vector.load %arg4[%c0_12, %c0_13] : memref<4x64xf32, #tpu.memory_space<vmem>>, vector<1x64xf32>
    %18 = vector.broadcast %17 : vector<1x64xf32> to vector<8x64xf32>
    %19 = arith.mulf %16, %18 : vector<8x64xf32>
    %20 = arith.addf %15, %19 : vector<8x64xf32>
    %c6 = arith.constant 6 : index
    %c0_14 = arith.constant 0 : index
    %21 = vector.load %arg15[%c6, %c0_14] : memref<16x64xf32, #tpu.memory_space<vmem>>, vector<8x64xf32>
    %c1 = arith.constant 1 : index
    %c0_15 = arith.constant 0 : index
    %22 = vector.load %arg4[%c1, %c0_15] : memref<4x64xf32, #tpu.memory_space<vmem>>, vector<1x64xf32>
    %23 = vector.broadcast %22 : vector<1x64xf32> to vector<8x64xf32>
    %24 = arith.mulf %21, %23 : vector<8x64xf32>
    %25 = arith.addf %20, %24 : vector<8x64xf32>
    %c7 = arith.constant 7 : index
    %c0_16 = arith.constant 0 : index
    %26 = vector.load %arg15[%c7, %c0_16] : memref<16x64xf32, #tpu.memory_space<vmem>>, vector<8x64xf32>
    %c2 = arith.constant 2 : index
    %c0_17 = arith.constant 0 : index
    %27 = vector.load %arg4[%c2, %c0_17] : memref<4x64xf32, #tpu.memory_space<vmem>>, vector<1x64xf32>
    %28 = vector.broadcast %27 : vector<1x64xf32> to vector<8x64xf32>
    %29 = arith.mulf %26, %28 : vector<8x64xf32>
    %30 = arith.addf %25, %29 : vector<8x64xf32>
    %c8_18 = arith.constant 8 : index
    %c0_19 = arith.constant 0 : index
    %31 = vector.load %arg15[%c8_18, %c0_19] : memref<16x64xf32, #tpu.memory_space<vmem>>, vector<8x64xf32>
    %c3 = arith.constant 3 : index
    %c0_20 = arith.constant 0 : index
    %32 = vector.load %arg4[%c3, %c0_20] : memref<4x64xf32, #tpu.memory_space<vmem>>, vector<1x64xf32>
    %33 = vector.broadcast %32 : vector<1x64xf32> to vector<8x64xf32>
    %34 = arith.mulf %31, %33 : vector<8x64xf32>
    %35 = arith.addf %30, %34 : vector<8x64xf32>
    %c0_21 = arith.constant 0 : index
    %c0_22 = arith.constant 0 : index
    %36 = vector.load %arg5[%c0_21, %c0_22] : memref<1x64xf32, #tpu.memory_space<vmem>>, vector<1x64xf32>
    %37 = vector.broadcast %36 : vector<1x64xf32> to vector<8x64xf32>
    %38 = arith.addf %35, %37 : vector<8x64xf32>
    %cst_23 = arith.constant 0.000000e+00 : f32
    %39 = vector.broadcast %cst_23 : f32 to vector<8x64xf32>
    %40 = arith.subf %39, %38 : vector<8x64xf32>
    %41 = math.exp %40 : vector<8x64xf32>
    %cst_24 = arith.constant 1.000000e+00 : f32
    %42 = vector.broadcast %cst_24 : f32 to vector<8x64xf32>
    %43 = arith.addf %42, %41 : vector<8x64xf32>
    %cst_25 = arith.constant 1.000000e+00 : f32
    %44 = vector.broadcast %cst_25 : f32 to vector<8x64xf32>
    %45 = arith.divf %44, %43 : vector<8x64xf32>
    %46 = arith.mulf %38, %45 : vector<8x64xf32>
    %c0_26 = arith.constant 0 : index
    %c0_27 = arith.constant 0 : index
    %47 = vector.load %arg16[%c0_26, %c0_27] : memref<8x64xf32, #tpu.memory_space<vmem>>, vector<8x64xf32>
    tpu.vector_store %arg16[%c0_26, %c0_27], %46 {strides = array<i32>} : memref<8x64xf32, #tpu.memory_space<vmem>>, vector<8x64xf32>,
    %48 = arith.truncf %46 : vector<8x64xf32> to vector<8x64xbf16>
    %c0_28 = arith.constant 0 : index
    %c0_29 = arith.constant 0 : index
    %49 = vector.load %arg7[%c0_28, %c0_29] : memref<64x16xbf16, #tpu.memory_space<vmem>>, vector<64x16xbf16>
    %cst_30 = arith.constant dense<0.000000e+00> : vector<8x16xf32>
    %50 = tpu.matmul %48, %49, %cst_30 {dimension_numbers = #tpu.dot_dimension_numbers<[1], [0], [0], [1], [0, 0, 1, 1], [], []>} : vector<8x64xbf16>, vector<64x16xbf16>, vector<8x16xf32> -> vector<8x16xf32>
    %c0_31 = arith.constant 0 : index
    %c0_32 = arith.constant 0 : index
    %51 = vector.load %arg20[%c0_31, %c0_32] : memref<8x16xf32, #tpu.memory_space<vmem>>, vector<8x16xf32>
    tpu.vector_store %arg20[%c0_31, %c0_32], %50 {strides = array<i32>} : memref<8x16xf32, #tpu.memory_space<vmem>>, vector<8x16xf32>,
    %c0_33 = arith.constant 0 : index
    %c0_34 = arith.constant 0 : index
    %52 = vector.load %arg8[%c0_33, %c0_34] : memref<64x16xbf16, #tpu.memory_space<vmem>>, vector<64x16xbf16>
    %cst_35 = arith.constant dense<0.000000e+00> : vector<8x16xf32>
    %53 = tpu.matmul %48, %52, %cst_35 {dimension_numbers = #tpu.dot_dimension_numbers<[1], [0], [0], [1], [0, 0, 1, 1], [], []>} : vector<8x64xbf16>, vector<64x16xbf16>, vector<8x16xf32> -> vector<8x16xf32>
    %c0_36 = arith.constant 0 : index
    %c0_37 = arith.constant 0 : index
    %54 = vector.load %arg21[%c0_36, %c0_37] : memref<8x16xf32, #tpu.memory_space<vmem>>, vector<8x16xf32>
    tpu.vector_store %arg21[%c0_36, %c0_37], %53 {strides = array<i32>} : memref<8x16xf32, #tpu.memory_space<vmem>>, vector<8x16xf32>,
    %c0_38 = arith.constant 0 : index
    %c0_39 = arith.constant 0 : index
    %55 = vector.load %arg6[%c0_38, %c0_39] : memref<64x2xbf16, #tpu.memory_space<vmem>>, vector<64x2xbf16>
    %cst_40 = arith.constant dense<0.000000e+00> : vector<8x2xf32>
    %56 = tpu.matmul %48, %55, %cst_40 {dimension_numbers = #tpu.dot_dimension_numbers<[1], [0], [0], [1], [0, 0, 1, 1], [], []>} : vector<8x64xbf16>, vector<64x2xbf16>, vector<8x2xf32> -> vector<8x2xf32>
    %57 = arith.truncf %56 : vector<8x2xf32> to vector<8x2xbf16>
    %c0_41 = arith.constant 0 : index
    %c0_42 = arith.constant 0 : index
    %58 = vector.load %arg9[%c0_41, %c0_42] : memref<2x64xbf16, #tpu.memory_space<vmem>>, vector<2x64xbf16>
    %cst_43 = arith.constant dense<0.000000e+00> : vector<8x64xf32>
    %59 = tpu.matmul %57, %58, %cst_43 {dimension_numbers = #tpu.dot_dimension_numbers<[1], [0], [0], [1], [0, 0, 1, 1], [], []>} : vector<8x2xbf16>, vector<2x64xbf16>, vector<8x64xf32> -> vector<8x64xf32>
    %c0_44 = arith.constant 0 : index
    %c0_45 = arith.constant 0 : index
    %60 = vector.load %arg10[%c0_44, %c0_45] : memref<1x64xf32, #tpu.memory_space<vmem>>, vector<1x64xf32>
    %61 = vector.broadcast %60 : vector<1x64xf32> to vector<8x64xf32>
    %62 = arith.addf %59, %61 : vector<8x64xf32>
    %cst_46 = arith.constant 0.000000e+00 : f32
    %63 = vector.broadcast %cst_46 : f32 to vector<8x64xf32>
    %64 = arith.maximumf %62, %63 : vector<8x64xf32>
    %65 = math.absf %62 : vector<8x64xf32>
    %cst_47 = arith.constant 0.000000e+00 : f32
    %66 = vector.broadcast %cst_47 : f32 to vector<8x64xf32>
    %67 = arith.subf %66, %65 : vector<8x64xf32>
    %68 = math.exp %67 : vector<8x64xf32>
    %cst_48 = arith.constant 1.000000e+00 : f32
    %69 = vector.broadcast %cst_48 : f32 to vector<8x64xf32>
    %70 = arith.addf %69, %68 : vector<8x64xf32>
    %71 = math.log %70 : vector<8x64xf32>
    %72 = arith.addf %64, %71 : vector<8x64xf32>
    %c0_49 = arith.constant 0 : index
    %c0_50 = arith.constant 0 : index
    %73 = vector.load %arg17[%c0_49, %c0_50] : memref<8x64xf32, #tpu.memory_space<vmem>>, vector<8x64xf32>
    tpu.vector_store %arg17[%c0_49, %c0_50], %72 {strides = array<i32>} : memref<8x64xf32, #tpu.memory_space<vmem>>, vector<8x64xf32>,
    %c0_51 = arith.constant 0 : index
    %c0_52 = arith.constant 0 : index
    %74 = vector.load %arg11[%c0_51, %c0_52] : memref<16x64xf32, #tpu.memory_space<vmem>>, vector<16x64xf32>
    %c0_53 = arith.constant 0 : index
    %c0_54 = arith.constant 0 : index
    %75 = vector.load %arg12[%c0_53, %c0_54] : memref<1x64xf32, #tpu.memory_space<vmem>>, vector<1x64xf32>
    %c0_i32_55 = arith.constant 0 : i32
    %c8_i32 = arith.constant 8 : i32
    %76 = arith.muli %c0_i32_55, %c8_i32 : i32
    %77 = tpu.assume_multiple %76, 8 : i32
    %78 = arith.index_cast %77 : i32 to index
    %c0_56 = arith.constant 0 : index
    %79 = vector.load %arg17[%78, %c0_56] : memref<8x64xf32, #tpu.memory_space<vmem>>, vector<8x64xf32>
    %80 = arith.index_cast %77 : i32 to index
    %c0_57 = arith.constant 0 : index
    %81 = vector.load %arg16[%80, %c0_57] : memref<8x64xf32, #tpu.memory_space<vmem>>, vector<8x64xf32>
    %82 = arith.mulf %79, %81 : vector<8x64xf32>
    %83 = arith.index_cast %77 : i32 to index
    %c0_58 = arith.constant 0 : index
    %84 = vector.load %arg20[%83, %c0_58] : memref<8x16xf32, #tpu.memory_space<vmem>>, vector<8x16xf32>
    %85 = vector.shape_cast %84 : vector<8x16xf32> to vector<8x16x1xf32>
    %86 = arith.index_cast %77 : i32 to index
    %c0_59 = arith.constant 0 : index
    %87 = vector.load %arg21[%86, %c0_59] : memref<8x16xf32, #tpu.memory_space<vmem>>, vector<8x16xf32>
    %88 = vector.shape_cast %87 : vector<8x16xf32> to vector<8x16x1xf32>
    %89 = arith.index_cast %77 : i32 to index
    %c0_60 = arith.constant 0 : index
    %90 = vector.load %arg18[%89, %c0_60] : memref<8x64xf32, #tpu.memory_space<vmem>>, vector<8x64xf32>
    %91 = vector.shape_cast %79 : vector<8x64xf32> to vector<8x1x64xf32>
    %92 = vector.shape_cast %74 : vector<16x64xf32> to vector<1x16x64xf32>
    %93 = vector.broadcast %91 : vector<8x1x64xf32> to vector<8x16x64xf32>
    %94 = vector.broadcast %92 : vector<1x16x64xf32> to vector<8x16x64xf32>
    %95 = arith.mulf %93, %94 : vector<8x16x64xf32>
    %96 = math.exp %95 : vector<8x16x64xf32>
    %97 = vector.shape_cast %82 : vector<8x64xf32> to vector<8x1x64xf32>
    %98 = vector.broadcast %97 : vector<8x1x64xf32> to vector<8x16x64xf32>
    %99 = vector.broadcast %85 : vector<8x16x1xf32> to vector<8x16x64xf32>
    %100 = arith.mulf %98, %99 : vector<8x16x64xf32>
    %c0_61 = arith.constant 0 : index
    %c0_62 = arith.constant 0 : index
    %101 = vector.load %arg22[%c0_61, %c0_62] : memref<16x64xf32, #tpu.memory_space<vmem>>, vector<16x64xf32>
    %102 = vector.extract_strided_slice %96 {offsets = [0, 0, 0], sizes = [1, 16, 64], strides = [1, 1, 1]} : vector<8x16x64xf32> to vector<1x16x64xf32>
    %103 = vector.shape_cast %102 : vector<1x16x64xf32> to vector<16x64xf32>
    %104 = arith.mulf %101, %103 : vector<16x64xf32>
    %105 = vector.extract_strided_slice %100 {offsets = [0, 0, 0], sizes = [1, 16, 64], strides = [1, 1, 1]} : vector<8x16x64xf32> to vector<1x16x64xf32>
    %106 = vector.shape_cast %105 : vector<1x16x64xf32> to vector<16x64xf32>
    %107 = arith.addf %104, %106 : vector<16x64xf32>
    %108 = vector.extract_strided_slice %96 {offsets = [1, 0, 0], sizes = [1, 16, 64], strides = [1, 1, 1]} : vector<8x16x64xf32> to vector<1x16x64xf32>
    %109 = vector.shape_cast %108 : vector<1x16x64xf32> to vector<16x64xf32>
    %110 = arith.mulf %107, %109 : vector<16x64xf32>
    %111 = vector.extract_strided_slice %100 {offsets = [1, 0, 0], sizes = [1, 16, 64], strides = [1, 1, 1]} : vector<8x16x64xf32> to vector<1x16x64xf32>
    %112 = vector.shape_cast %111 : vector<1x16x64xf32> to vector<16x64xf32>
    %113 = arith.addf %110, %112 : vector<16x64xf32>
    %114 = vector.extract_strided_slice %96 {offsets = [2, 0, 0], sizes = [1, 16, 64], strides = [1, 1, 1]} : vector<8x16x64xf32> to vector<1x16x64xf32>
    %115 = vector.shape_cast %114 : vector<1x16x64xf32> to vector<16x64xf32>
    %116 = arith.mulf %113, %115 : vector<16x64xf32>
    %117 = vector.extract_strided_slice %100 {offsets = [2, 0, 0], sizes = [1, 16, 64], strides = [1, 1, 1]} : vector<8x16x64xf32> to vector<1x16x64xf32>
    %118 = vector.shape_cast %117 : vector<1x16x64xf32> to vector<16x64xf32>
    %119 = arith.addf %116, %118 : vector<16x64xf32>
    %120 = vector.extract_strided_slice %96 {offsets = [3, 0, 0], sizes = [1, 16, 64], strides = [1, 1, 1]} : vector<8x16x64xf32> to vector<1x16x64xf32>
    %121 = vector.shape_cast %120 : vector<1x16x64xf32> to vector<16x64xf32>
    %122 = arith.mulf %119, %121 : vector<16x64xf32>
    %123 = vector.extract_strided_slice %100 {offsets = [3, 0, 0], sizes = [1, 16, 64], strides = [1, 1, 1]} : vector<8x16x64xf32> to vector<1x16x64xf32>
    %124 = vector.shape_cast %123 : vector<1x16x64xf32> to vector<16x64xf32>
    %125 = arith.addf %122, %124 : vector<16x64xf32>
    %126 = vector.extract_strided_slice %96 {offsets = [4, 0, 0], sizes = [1, 16, 64], strides = [1, 1, 1]} : vector<8x16x64xf32> to vector<1x16x64xf32>
    %127 = vector.shape_cast %126 : vector<1x16x64xf32> to vector<16x64xf32>
    %128 = arith.mulf %125, %127 : vector<16x64xf32>
    %129 = vector.extract_strided_slice %100 {offsets = [4, 0, 0], sizes = [1, 16, 64], strides = [1, 1, 1]} : vector<8x16x64xf32> to vector<1x16x64xf32>
    %130 = vector.shape_cast %129 : vector<1x16x64xf32> to vector<16x64xf32>
    %131 = arith.addf %128, %130 : vector<16x64xf32>
    %132 = vector.extract_strided_slice %96 {offsets = [5, 0, 0], sizes = [1, 16, 64], strides = [1, 1, 1]} : vector<8x16x64xf32> to vector<1x16x64xf32>
    %133 = vector.shape_cast %132 : vector<1x16x64xf32> to vector<16x64xf32>
    %134 = arith.mulf %131, %133 : vector<16x64xf32>
    %135 = vector.extract_strided_slice %100 {offsets = [5, 0, 0], sizes = [1, 16, 64], strides = [1, 1, 1]} : vector<8x16x64xf32> to vector<1x16x64xf32>
    %136 = vector.shape_cast %135 : vector<1x16x64xf32> to vector<16x64xf32>
    %137 = arith.addf %134, %136 : vector<16x64xf32>
    %138 = vector.extract_strided_slice %96 {offsets = [6, 0, 0], sizes = [1, 16, 64], strides = [1, 1, 1]} : vector<8x16x64xf32> to vector<1x16x64xf32>
    %139 = vector.shape_cast %138 : vector<1x16x64xf32> to vector<16x64xf32>
    %140 = arith.mulf %137, %139 : vector<16x64xf32>
    %141 = vector.extract_strided_slice %100 {offsets = [6, 0, 0], sizes = [1, 16, 64], strides = [1, 1, 1]} : vector<8x16x64xf32> to vector<1x16x64xf32>
    %142 = vector.shape_cast %141 : vector<1x16x64xf32> to vector<16x64xf32>
    %143 = arith.addf %140, %142 : vector<16x64xf32>
    %144 = vector.extract_strided_slice %96 {offsets = [7, 0, 0], sizes = [1, 16, 64], strides = [1, 1, 1]} : vector<8x16x64xf32> to vector<1x16x64xf32>
    %145 = vector.shape_cast %144 : vector<1x16x64xf32> to vector<16x64xf32>
    %146 = arith.mulf %143, %145 : vector<16x64xf32>
    %147 = vector.extract_strided_slice %100 {offsets = [7, 0, 0], sizes = [1, 16, 64], strides = [1, 1, 1]} : vector<8x16x64xf32> to vector<1x16x64xf32>
    %148 = vector.shape_cast %147 : vector<1x16x64xf32> to vector<16x64xf32>
    %149 = arith.addf %146, %148 : vector<16x64xf32>
    %c0_63 = arith.constant 0 : index
    %c0_64 = arith.constant 0 : index
    %150 = vector.load %arg22[%c0_63, %c0_64] : memref<16x64xf32, #tpu.memory_space<vmem>>, vector<16x64xf32>
    tpu.vector_store %arg22[%c0_63, %c0_64], %149 {strides = array<i32>} : memref<16x64xf32, #tpu.memory_space<vmem>>, vector<16x64xf32>,
    %151 = vector.shape_cast %107 : vector<16x64xf32> to vector<1x16x64xf32>
    %152 = vector.shape_cast %113 : vector<16x64xf32> to vector<1x16x64xf32>
    %153 = vector.shape_cast %119 : vector<16x64xf32> to vector<1x16x64xf32>
    %154 = vector.shape_cast %125 : vector<16x64xf32> to vector<1x16x64xf32>
    %155 = vector.shape_cast %131 : vector<16x64xf32> to vector<1x16x64xf32>
    %156 = vector.shape_cast %137 : vector<16x64xf32> to vector<1x16x64xf32>
    %157 = vector.shape_cast %143 : vector<16x64xf32> to vector<1x16x64xf32>
    %158 = vector.shape_cast %149 : vector<16x64xf32> to vector<1x16x64xf32>
    %159 = tpu.concatenate %151, %152, %153, %154, %155, %156, %157, %158 in 0 : vector<1x16x64xf32>, vector<1x16x64xf32>, vector<1x16x64xf32>, vector<1x16x64xf32>, vector<1x16x64xf32>, vector<1x16x64xf32>, vector<1x16x64xf32>, vector<1x16x64xf32> -> vector<8x16x64xf32>
    %160 = vector.broadcast %88 : vector<8x16x1xf32> to vector<8x16x64xf32>
    %161 = arith.mulf %159, %160 : vector<8x16x64xf32>
    %cst_65 = arith.constant dense<0.000000e+00> : vector<8x64xf32>
    %162 = vector.multi_reduction <add>, %161, %cst_65 [1] : vector<8x16x64xf32> to vector<8x64xf32>
    %163 = vector.broadcast %75 : vector<1x64xf32> to vector<8x64xf32>
    %164 = arith.mulf %163, %81 : vector<8x64xf32>
    %165 = arith.addf %162, %164 : vector<8x64xf32>
    %cst_66 = arith.constant 0.000000e+00 : f32
    %166 = vector.broadcast %cst_66 : f32 to vector<8x64xf32>
    %167 = arith.subf %166, %90 : vector<8x64xf32>
    %168 = math.exp %167 : vector<8x64xf32>
    %cst_67 = arith.constant 1.000000e+00 : f32
    %169 = vector.broadcast %cst_67 : f32 to vector<8x64xf32>
    %170 = arith.addf %169, %168 : vector<8x64xf32>
    %cst_68 = arith.constant 1.000000e+00 : f32
    %171 = vector.broadcast %cst_68 : f32 to vector<8x64xf32>
    %172 = arith.divf %171, %170 : vector<8x64xf32>
    %173 = arith.mulf %90, %172 : vector<8x64xf32>
    %174 = arith.mulf %165, %173 : vector<8x64xf32>
    %175 = arith.index_cast %77 : i32 to index
    %c0_69 = arith.constant 0 : index
    %176 = vector.load %arg19[%175, %c0_69] : memref<8x64xf32, #tpu.memory_space<vmem>>, vector<8x64xf32>
    tpu.vector_store %arg19[%175, %c0_69], %174 {strides = array<i32>} : memref<8x64xf32, #tpu.memory_space<vmem>>, vector<8x64xf32>,
    %c1_i32 = arith.constant 1 : i32
    %c0_70 = arith.constant 0 : index
    %c0_71 = arith.constant 0 : index
    %177 = vector.load %arg19[%c0_70, %c0_71] : memref<8x64xf32, #tpu.memory_space<vmem>>, vector<8x64xf32>
    %178 = arith.truncf %177 : vector<8x64xf32> to vector<8x64xbf16>
    %c0_72 = arith.constant 0 : index
    %c0_73 = arith.constant 0 : index
    %179 = vector.load %arg13[%c0_72, %c0_73] : memref<64x32xbf16, #tpu.memory_space<vmem>>, vector<64x32xbf16>
    %cst_74 = arith.constant dense<0.000000e+00> : vector<8x32xf32>
    %180 = tpu.matmul %178, %179, %cst_74 {dimension_numbers = #tpu.dot_dimension_numbers<[1], [0], [0], [1], [0, 0, 1, 1], [], []>} : vector<8x64xbf16>, vector<64x32xbf16>, vector<8x32xf32> -> vector<8x32xf32>
    %c0_75 = arith.constant 0 : index
    %c0_76 = arith.constant 0 : index
    %c0_77 = arith.constant 0 : index
    %181 = vector.load %arg14[%c0_75, %c0_76, %c0_77] : memref<1x8x32xf32, #tpu.memory_space<vmem>>, vector<1x8x32xf32>
    %182 = vector.shape_cast %181 : vector<1x8x32xf32> to vector<8x32xf32>
    %183 = vector.shape_cast %180 : vector<8x32xf32> to vector<1x8x32xf32>
    tpu.vector_store %arg14[%c0_75, %c0_76, %c0_77], %183 {strides = array<i32>} : memref<1x8x32xf32, #tpu.memory_space<vmem>>, vector<1x8x32xf32>,
    return
  }
  func.func @transform_0(%arg0: i32, %arg1: i32) -> (i32, i32, i32) {
    %c0_i32 = arith.constant 0 : i32
    %c0_i32_0 = arith.constant 0 : i32
    return %arg0, %arg1, %c0_i32 : i32, i32, i32
  }
  func.func @transform_1(%arg0: i32, %arg1: i32) -> (i32, i32) {
    %c0_i32 = arith.constant 0 : i32
    %c0_i32_0 = arith.constant 0 : i32
    %c0_i32_1 = arith.constant 0 : i32
    return %c0_i32, %c0_i32_0 : i32, i32
  }
  func.func @transform_2(%arg0: i32, %arg1: i32) -> (i32, i32) {
    %c0_i32 = arith.constant 0 : i32
    %c0_i32_0 = arith.constant 0 : i32
    %c0_i32_1 = arith.constant 0 : i32
    return %c0_i32, %c0_i32_0 : i32, i32
  }
  func.func @transform_3(%arg0: i32, %arg1: i32) -> (i32, i32) {
    %c0_i32 = arith.constant 0 : i32
    %c0_i32_0 = arith.constant 0 : i32
    %c0_i32_1 = arith.constant 0 : i32
    return %c0_i32, %c0_i32_0 : i32, i32
  }
  func.func @transform_4(%arg0: i32, %arg1: i32) -> (i32, i32) {
    %c0_i32 = arith.constant 0 : i32
    %c0_i32_0 = arith.constant 0 : i32
    %c0_i32_1 = arith.constant 0 : i32
    return %c0_i32, %c0_i32_0 : i32, i32
  }
  func.func @transform_5(%arg0: i32, %arg1: i32) -> (i32, i32) {
    %c0_i32 = arith.constant 0 : i32
    %c0_i32_0 = arith.constant 0 : i32
    %c0_i32_1 = arith.constant 0 : i32
    return %c0_i32, %c0_i32_0 : i32, i32
  }
  func.func @transform_6(%arg0: i32, %arg1: i32) -> (i32, i32) {
    %c0_i32 = arith.constant 0 : i32
    %c0_i32_0 = arith.constant 0 : i32
    %c0_i32_1 = arith.constant 0 : i32
    return %c0_i32, %c0_i32_0 : i32, i32
  }
  func.func @transform_7(%arg0: i32, %arg1: i32) -> (i32, i32) {
    %c0_i32 = arith.constant 0 : i32
    %c0_i32_0 = arith.constant 0 : i32
    %c0_i32_1 = arith.constant 0 : i32
    return %c0_i32, %c0_i32_0 : i32, i32
  }
  func.func @transform_8(%arg0: i32, %arg1: i32) -> (i32, i32) {
    %c0_i32 = arith.constant 0 : i32
    %c0_i32_0 = arith.constant 0 : i32
    %c0_i32_1 = arith.constant 0 : i32
    return %c0_i32, %c0_i32_0 : i32, i32
  }
  func.func @transform_9(%arg0: i32, %arg1: i32) -> (i32, i32) {
    %c0_i32 = arith.constant 0 : i32
    %c0_i32_0 = arith.constant 0 : i32
    %c0_i32_1 = arith.constant 0 : i32
    return %c0_i32, %c0_i32_0 : i32, i32
  }
  func.func @transform_10(%arg0: i32, %arg1: i32) -> (i32, i32) {
    %c0_i32 = arith.constant 0 : i32
    %c0_i32_0 = arith.constant 0 : i32
    %c0_i32_1 = arith.constant 0 : i32
    return %c0_i32, %c0_i32_0 : i32, i32
  }
  func.func @transform_11(%arg0: i32, %arg1: i32) -> (i32, i32) {
    %c0_i32 = arith.constant 0 : i32
    %c0_i32_0 = arith.constant 0 : i32
    %c0_i32_1 = arith.constant 0 : i32
    return %c0_i32, %c0_i32_0 : i32, i32
  }
  func.func @transform_12(%arg0: i32, %arg1: i32) -> (i32, i32, i32) {
    %c0_i32 = arith.constant 0 : i32
    %c0_i32_0 = arith.constant 0 : i32
    return %arg0, %arg1, %c0_i32 : i32, i32, i32
  }
}

</mosaic_0001>

<llo_original>
// kernel: tpu_custom_call.1
$region0: #{tpu_custom_call.1}
  #allocation0 [shape = 'u32[]', space=smem, size = 0x4, offset = 0x4, fixed_abs, tag = 'smem constant byte address 0x4 - core index']
  #allocation1 [shape = 'u32[72,128]{1,0:T(1,128)}', space=vmem, size = 0x9000, scoped, tag = 'internal scratch']
  #allocation2 [shape = 'f32[16,64]{1,0:T(8,128)}', space=vmem, size = 0x2000, scoped, tag = 'scratch operand']
  #allocation3 [shape = 'f32[8,64]{1,0:T(8,128)}', space=vmem, size = 0x1000, scoped, tag = 'scratch operand']
  #allocation4 [shape = 'f32[8,64]{1,0:T(8,128)}', space=vmem, size = 0x1000, scoped, tag = 'scratch operand']
  #allocation5 [shape = 'f32[8,64]{1,0:T(8,128)}', space=vmem, size = 0x1000, scoped, tag = 'scratch operand']
  #allocation6 [shape = 'f32[8,64]{1,0:T(8,128)}', space=vmem, size = 0x1000, scoped, tag = 'scratch operand']
  #allocation7 [shape = 'f32[8,16]{1,0:T(8,128)}', space=vmem, size = 0x1000, scoped, tag = 'scratch operand']
  #allocation8 [shape = 'f32[8,16]{1,0:T(8,128)}', space=vmem, size = 0x1000, scoped, tag = 'scratch operand']
  #allocation9 [shape = 'f32[16,64]{1,0:T(8,128)}', space=vmem, size = 0x2000, scoped, tag = 'scratch operand']
  %s0 = inlined_call_operand.vmem [shape: f32[2,16,32], index: 0, kind: input, shape index: {}]
  %s1 = inlined_call_operand.vmem [shape: bf16[32,128], index: 1, kind: input, shape index: {}]
  %s2 = inlined_call_operand.vmem [shape: f32[4,64], index: 2, kind: input, shape index: {}]
  %s3 = inlined_call_operand.vmem [shape: f32[1,64], index: 3, kind: input, shape index: {}]
  %s4 = inlined_call_operand.vmem [shape: bf16[64,2], index: 4, kind: input, shape index: {}]
  %s5 = inlined_call_operand.vmem [shape: bf16[64,16], index: 5, kind: input, shape index: {}]
  %s6 = inlined_call_operand.vmem [shape: bf16[64,16], index: 6, kind: input, shape index: {}]
  %s7 = inlined_call_operand.vmem [shape: bf16[2,64], index: 7, kind: input, shape index: {}]
  %s8 = inlined_call_operand.vmem [shape: f32[1,64], index: 8, kind: input, shape index: {}]
  %s9 = inlined_call_operand.vmem [shape: f32[16,64], index: 9, kind: input, shape index: {}]
  %s10 = inlined_call_operand.vmem [shape: f32[1,64], index: 10, kind: input, shape index: {}]
  %s11 = inlined_call_operand.vmem [shape: bf16[64,32], index: 11, kind: input, shape index: {}]
  %s12 = inlined_call_operand.hbm [shape: f32[2,16,32], index: 12, kind: output, shape index: {}]
  %s13 = sld [smem:[#allocation0]]
  $region89: #{tpu_custom_call.1} parent=0
    _
  %s15 = ssub.s32 1, %s13
  %s16 = scalar_select 0, %s15, %s13
  $region1: #{tpu_custom_call.1} parent=0
    #allocation10 [shape = 'u8[8192]{0}', space=vmem, size = 0x2000, scoped, tag = 'output window, operand 0']
    #allocation11 [shape = 's32[2]{0}', space=sflag, size = 0x8, scoped, tag = 'scoped memory for tpu_custom_call.1']
    %17 = vsyncpa [#allocation11], 0
    %s18 = scalar_lea.sflag [#allocation11], 1
    %19 = vsyncpa %s18, 0
    loop: start=0, step=1, limit=6
    $region2: #{tpu_custom_call.1} parent=1 // loop_pre_header
      _
    $region3: #{tpu_custom_call.1} parent=1 // loop_header
      %s21 = sphi 0, %s25
      %p22 = scmp.ge.s32.totalorder %s21, 6
      %s28 = sphi 0, %s40
      %s29 = sphi 0, %s36
      %s30 = sphi 0, %s28
      %s31 = sphi 0, %s29
      %s32 = sphi 0, %s30
      %s33 = sphi 0, %s31
      %s45 = sphi 0, %s47
      %s48 = sphi 0, %s45
      %s49 = sphi 0, %s48
      %s65 = sphi 0, %s49
      %s69 = sphi 0, %s69
      %s71 = sphi 0, %s69
      %s72 = sphi 0, %s71
      %s86 = sphi 0, %s72
      %s90 = sphi 0, %s90
      %s92 = sphi 0, %s90
      %s93 = sphi 0, %s92
      %s107 = sphi 0, %s93
      %s111 = sphi 0, %s111
      %s113 = sphi 0, %s111
      %s114 = sphi 0, %s113
      %s128 = sphi 0, %s114
      %s132 = sphi 0, %s132
      %s134 = sphi 0, %s132
      %s135 = sphi 0, %s134
      %s149 = sphi 0, %s135
      %s153 = sphi 0, %s153
      %s155 = sphi 0, %s153
      %s156 = sphi 0, %s155
      %s170 = sphi 0, %s156
      %s174 = sphi 0, %s174
      %s176 = sphi 0, %s174
      %s177 = sphi 0, %s176
      %s191 = sphi 0, %s177
      %s195 = sphi 0, %s195
      %s197 = sphi 0, %s195
      %s198 = sphi 0, %s197
      %s212 = sphi 0, %s198
      %s216 = sphi 0, %s216
      %s218 = sphi 0, %s216
      %s219 = sphi 0, %s218
      %s233 = sphi 0, %s219
      %s237 = sphi 0, %s237
      %s239 = sphi 0, %s237
      %s240 = sphi 0, %s239
      %s254 = sphi 0, %s240
      %s258 = sphi 0, %s258
      %s260 = sphi 0, %s258
      %s261 = sphi 0, %s260
      %s275 = sphi 0, %s261
      %s279 = sphi 0, %s279
      %s281 = sphi 0, %s279
      %s282 = sphi 0, %s281
      %s296 = sphi 0, %s282
      %s304 = sphi 0, %s306
      %s307 = sphi 0, %s304
      %s308 = sphi 0, %s307
      %s324 = sphi 0, %s308
    $region4: #{tpu_custom_call.1} parent=1 // loop_header_branch
      %24 = sbr.rel (%p22) target = $region8
    $region5: #{tpu_custom_call.1} parent=1 // loop_body
      %s26 = ssub.s32 %s21, 1
      %s27 = ssub.s32 %s21, 2
      %s34 = sadd.s32 1, %s29
      %p35 = scmp.ge.s32.totalorder %s34, 2
      %s36 = scalar_select %p35, 0, %s34
      %s37 = sadd.s32 1, %s28
      %s38 = scalar_select %p35, %s37, %s28
      %p39 = scmp.ge.s32.totalorder %s38, 2
      %s40 = scalar_select %p39, 0, %s38
      %s41 = ssub.s32 %s28, %s40
      %s42 = ssub.s32 %s29, %s36
      %s43 = sor.u32 %s41, %s42
      %p44 = scmp.eq.s32.totalorder %s43, 0
      %s46 = sadd.s32 %s45, 1
      %s47 = scalar_select %p44, %s45, %s46
      %p50 = pneg %p44
      %p51 = scmp.eq.s32.totalorder %s21, 3
      %p52 = por %p50, %p51
      %p53 = scmp.ne.s32.totalorder %s45, %s48
      %p54 = scmp.eq.s32.totalorder %s21, 0
      %p55 = por %p53, %p54
      %p56 = scmp.ne.s32.totalorder %s45, %s48
      %p57 = scmp.eq.s32.totalorder %s26, 3
      %p58 = por %p56, %p57
      %p59 = scmp.ne.s32.totalorder %s48, %s49
      %p60 = scmp.eq.s32.totalorder %s26, 0
      %p61 = por %p59, %p60
      %p62 = scmp.ne.s32.totalorder %s48, %s49
      %p63 = scmp.eq.s32.totalorder %s27, 3
      %p64 = por %p62, %p63
      %p66 = scmp.ne.s32.totalorder %s49, %s65
      %p67 = scmp.eq.s32.totalorder %s27, 0
      %p68 = por %p66, %p67
      %s70 = sadd.s32 %s69, 1
      %p73 = scmp.eq.s32.totalorder %s21, 3
      %p74 = scmp.ne.s32.totalorder %s69, %s71
      %p75 = scmp.eq.s32.totalorder %s21, 0
      %p76 = por %p74, %p75
      %p77 = scmp.ne.s32.totalorder %s69, %s71
      %p78 = scmp.eq.s32.totalorder %s26, 3
      %p79 = por %p77, %p78
      %p80 = scmp.ne.s32.totalorder %s71, %s72
      %p81 = scmp.eq.s32.totalorder %s26, 0
      %p82 = por %p80, %p81
      %p83 = scmp.ne.s32.totalorder %s71, %s72
      %p84 = scmp.eq.s32.totalorder %s27, 3
      %p85 = por %p83, %p84
      %p87 = scmp.ne.s32.totalorder %s72, %s86
      %p88 = scmp.eq.s32.totalorder %s27, 0
      %p89 = por %p87, %p88
      %s91 = sadd.s32 %s90, 1
      %p94 = scmp.eq.s32.totalorder %s21, 3
      %p95 = scmp.ne.s32.totalorder %s90, %s92
      %p96 = scmp.eq.s32.totalorder %s21, 0
      %p97 = por %p95, %p96
      %p98 = scmp.ne.s32.totalorder %s90, %s92
      %p99 = scmp.eq.s32.totalorder %s26, 3
      %p100 = por %p98, %p99
      %p101 = scmp.ne.s32.totalorder %s92, %s93
      %p102 = scmp.eq.s32.totalorder %s26, 0
      %p103 = por %p101, %p102
      %p104 = scmp.ne.s32.totalorder %s92, %s93
      %p105 = scmp.eq.s32.totalorder %s27, 3
      %p106 = por %p104, %p105
      %p108 = scmp.ne.s32.totalorder %s93, %s107
      %p109 = scmp.eq.s32.totalorder %s27, 0
      %p110 = por %p108, %p109
      %s112 = sadd.s32 %s111, 1
      %p115 = scmp.eq.s32.totalorder %s21, 3
      %p116 = scmp.ne.s32.totalorder %s111, %s113
      %p117 = scmp.eq.s32.totalorder %s21, 0
      %p118 = por %p116, %p117
      %p119 = scmp.ne.s32.totalorder %s111, %s113
      %p120 = scmp.eq.s32.totalorder %s26, 3
      %p121 = por %p119, %p120
      %p122 = scmp.ne.s32.totalorder %s113, %s114
      %p123 = scmp.eq.s32.totalorder %s26, 0
      %p124 = por %p122, %p123
      %p125 = scmp.ne.s32.totalorder %s113, %s114
      %p126 = scmp.eq.s32.totalorder %s27, 3
      %p127 = por %p125, %p126
      %p129 = scmp.ne.s32.totalorder %s114, %s128
      %p130 = scmp.eq.s32.totalorder %s27, 0
      %p131 = por %p129, %p130
      %s133 = sadd.s32 %s132, 1
      %p136 = scmp.eq.s32.totalorder %s21, 3
      %p137 = scmp.ne.s32.totalorder %s132, %s134
      %p138 = scmp.eq.s32.totalorder %s21, 0
      %p139 = por %p137, %p138
      %p140 = scmp.ne.s32.totalorder %s132, %s134
      %p141 = scmp.eq.s32.totalorder %s26, 3
      %p142 = por %p140, %p141
      %p143 = scmp.ne.s32.totalorder %s134, %s135
      %p144 = scmp.eq.s32.totalorder %s26, 0
      %p145 = por %p143, %p144
      %p146 = scmp.ne.s32.totalorder %s134, %s135
      %p147 = scmp.eq.s32.totalorder %s27, 3
      %p148 = por %p146, %p147
      %p150 = scmp.ne.s32.totalorder %s135, %s149
      %p151 = scmp.eq.s32.totalorder %s27, 0
      %p152 = por %p150, %p151
      %s154 = sadd.s32 %s153, 1
      %p157 = scmp.eq.s32.totalorder %s21, 3
      %p158 = scmp.ne.s32.totalorder %s153, %s155
      %p159 = scmp.eq.s32.totalorder %s21, 0
      %p160 = por %p158, %p159
      %p161 = scmp.ne.s32.totalorder %s153, %s155
      %p162 = scmp.eq.s32.totalorder %s26, 3
      %p163 = por %p161, %p162
      %p164 = scmp.ne.s32.totalorder %s155, %s156
      %p165 = scmp.eq.s32.totalorder %s26, 0
      %p166 = por %p164, %p165
      %p167 = scmp.ne.s32.totalorder %s155, %s156
      %p168 = scmp.eq.s32.totalorder %s27, 3
      %p169 = por %p167, %p168
      %p171 = scmp.ne.s32.totalorder %s156, %s170
      %p172 = scmp.eq.s32.totalorder %s27, 0
      %p173 = por %p171, %p172
      %s175 = sadd.s32 %s174, 1
      %p178 = scmp.eq.s32.totalorder %s21, 3
      %p179 = scmp.ne.s32.totalorder %s174, %s176
      %p180 = scmp.eq.s32.totalorder %s21, 0
      %p181 = por %p179, %p180
      %p182 = scmp.ne.s32.totalorder %s174, %s176
      %p183 = scmp.eq.s32.totalorder %s26, 3
      %p184 = por %p182, %p183
      %p185 = scmp.ne.s32.totalorder %s176, %s177
      %p186 = scmp.eq.s32.totalorder %s26, 0
      %p187 = por %p185, %p186
      %p188 = scmp.ne.s32.totalorder %s176, %s177
      %p189 = scmp.eq.s32.totalorder %s27, 3
      %p190 = por %p188, %p189
      %p192 = scmp.ne.s32.totalorder %s177, %s191
      %p193 = scmp.eq.s32.totalorder %s27, 0
      %p194 = por %p192, %p193
      %s196 = sadd.s32 %s195, 1
      %p199 = scmp.eq.s32.totalorder %s21, 3
      %p200 = scmp.ne.s32.totalorder %s195, %s197
      %p201 = scmp.eq.s32.totalorder %s21, 0
      %p202 = por %p200, %p201
      %p203 = scmp.ne.s32.totalorder %s195, %s197
      %p204 = scmp.eq.s32.totalorder %s26, 3
      %p205 = por %p203, %p204
      %p206 = scmp.ne.s32.totalorder %s197, %s198
      %p207 = scmp.eq.s32.totalorder %s26, 0
      %p208 = por %p206, %p207
      %p209 = scmp.ne.s32.totalorder %s197, %s198
      %p210 = scmp.eq.s32.totalorder %s27, 3
      %p211 = por %p209, %p210
      %p213 = scmp.ne.s32.totalorder %s198, %s212
      %p214 = scmp.eq.s32.totalorder %s27, 0
      %p215 = por %p213, %p214
      %s217 = sadd.s32 %s216, 1
      %p220 = scmp.eq.s32.totalorder %s21, 3
      %p221 = scmp.ne.s32.totalorder %s216, %s218
      %p222 = scmp.eq.s32.totalorder %s21, 0
      %p223 = por %p221, %p222
      %p224 = scmp.ne.s32.totalorder %s216, %s218
      %p225 = scmp.eq.s32.totalorder %s26, 3
      %p226 = por %p224, %p225
      %p227 = scmp.ne.s32.totalorder %s218, %s219
      %p228 = scmp.eq.s32.totalorder %s26, 0
      %p229 = por %p227, %p228
      %p230 = scmp.ne.s32.totalorder %s218, %s219
      %p231 = scmp.eq.s32.totalorder %s27, 3
      %p232 = por %p230, %p231
      %p234 = scmp.ne.s32.totalorder %s219, %s233
      %p235 = scmp.eq.s32.totalorder %s27, 0
      %p236 = por %p234, %p235
      %s238 = sadd.s32 %s237, 1
      %p241 = scmp.eq.s32.totalorder %s21, 3
      %p242 = scmp.ne.s32.totalorder %s237, %s239
      %p243 = scmp.eq.s32.totalorder %s21, 0
      %p244 = por %p242, %p243
      %p245 = scmp.ne.s32.totalorder %s237, %s239
      %p246 = scmp.eq.s32.totalorder %s26, 3
      %p247 = por %p245, %p246
      %p248 = scmp.ne.s32.totalorder %s239, %s240
      %p249 = scmp.eq.s32.totalorder %s26, 0
      %p250 = por %p248, %p249
      %p251 = scmp.ne.s32.totalorder %s239, %s240
      %p252 = scmp.eq.s32.totalorder %s27, 3
      %p253 = por %p251, %p252
      %p255 = scmp.ne.s32.totalorder %s240, %s254
      %p256 = scmp.eq.s32.totalorder %s27, 0
      %p257 = por %p255, %p256
      %s259 = sadd.s32 %s258, 1
      %p262 = scmp.eq.s32.totalorder %s21, 3
      %p263 = scmp.ne.s32.totalorder %s258, %s260
      %p264 = scmp.eq.s32.totalorder %s21, 0
      %p265 = por %p263, %p264
      %p266 = scmp.ne.s32.totalorder %s258, %s260
      %p267 = scmp.eq.s32.totalorder %s26, 3
      %p268 = por %p266, %p267
      %p269 = scmp.ne.s32.totalorder %s260, %s261
      %p270 = scmp.eq.s32.totalorder %s26, 0
      %p271 = por %p269, %p270
      %p272 = scmp.ne.s32.totalorder %s260, %s261
      %p273 = scmp.eq.s32.totalorder %s27, 3
      %p274 = por %p272, %p273
      %p276 = scmp.ne.s32.totalorder %s261, %s275
      %p277 = scmp.eq.s32.totalorder %s27, 0
      %p278 = por %p276, %p277
      %s280 = sadd.s32 %s279, 1
      %p283 = scmp.eq.s32.totalorder %s21, 3
      %p284 = scmp.ne.s32.totalorder %s279, %s281
      %p285 = scmp.eq.s32.totalorder %s21, 0
      %p286 = por %p284, %p285
      %p287 = scmp.ne.s32.totalorder %s279, %s281
      %p288 = scmp.eq.s32.totalorder %s26, 3
      %p289 = por %p287, %p288
      %p290 = scmp.ne.s32.totalorder %s281, %s282
      %p291 = scmp.eq.s32.totalorder %s26, 0
      %p292 = por %p290, %p291
      %p293 = scmp.ne.s32.totalorder %s281, %s282
      %p294 = scmp.eq.s32.totalorder %s27, 3
      %p295 = por %p293, %p294
      %p297 = scmp.ne.s32.totalorder %s282, %s296
      %p298 = scmp.eq.s32.totalorder %s27, 0
      %p299 = por %p297, %p298
      %s300 = ssub.s32 %s28, %s40
      %s301 = ssub.s32 %s29, %s36
      %s302 = sor.u32 %s300, %s301
      %p303 = scmp.eq.s32.totalorder %s302, 0
      %s305 = sadd.s32 %s304, 1
      %s306 = scalar_select %p303, %s304, %s305
      %p309 = pneg %p303
      %p310 = scmp.eq.s32.totalorder %s21, 3
      %p311 = por %p309, %p310
      %p312 = scmp.ne.s32.totalorder %s304, %s307
      %p313 = scmp.eq.s32.totalorder %s21, 0
      %p314 = por %p312, %p313
      %p315 = scmp.ne.s32.totalorder %s304, %s307
      %p316 = scmp.eq.s32.totalorder %s26, 3
      %p317 = por %p315, %p316
      %p318 = scmp.ne.s32.totalorder %s307, %s308
      %p319 = scmp.eq.s32.totalorder %s26, 0
      %p320 = por %p318, %p319
      %p321 = scmp.ne.s32.totalorder %s307, %s308
      %p322 = scmp.eq.s32.totalorder %s27, 3
      %p323 = por %p321, %p322
      %p325 = scmp.ne.s32.totalorder %s308, %s324
      %p326 = scmp.eq.s32.totalorder %s27, 0
      %p327 = por %p325, %p326
      %p328 = scmp.le.s32.totalorder 1, %s21
      %p329 = scmp.lt.s32.totalorder %s21, 5
      %p330 = pnand %p328, %p329
      %p331 = pneg %p330
      // Predicated region
      $region9: #{tpu_custom_call.1} parent=5 // pred_check
        _
      $region10: #{tpu_custom_call.1} parent=5 // pred_check_branch
        %333 = sbr.rel (%p330) target = $region12
      $region11: #{tpu_custom_call.1} parent=5 // pred_region
        %s334 = ssub.s32 %s21, 1
        // Predicated region
        $region13: #{tpu_custom_call.1} parent=11 // pred_check
          %p335 = pneg %p82
        $region14: #{tpu_custom_call.1} parent=11 // pred_check_branch
          %337 = sbr.rel (%p335) target = $region16
        $region15: #{tpu_custom_call.1} parent=11 // pred_region
          _
        $region16: #{tpu_custom_call.1} parent=11 // pred_fallthru
          _
        // Predicated region
        $region17: #{tpu_custom_call.1} parent=11 // pred_check
          %p338 = pneg %p103
        $region18: #{tpu_custom_call.1} parent=11 // pred_check_branch
          %340 = sbr.rel (%p338) target = $region20
        $region19: #{tpu_custom_call.1} parent=11 // pred_region
          _
        $region20: #{tpu_custom_call.1} parent=11 // pred_fallthru
          _
        // Predicated region
        $region21: #{tpu_custom_call.1} parent=11 // pred_check
          %p341 = pneg %p124
        $region22: #{tpu_custom_call.1} parent=11 // pred_check_branch
          %343 = sbr.rel (%p341) target = $region24
        $region23: #{tpu_custom_call.1} parent=11 // pred_region
          _
        $region24: #{tpu_custom_call.1} parent=11 // pred_fallthru
          _
        // Predicated region
        $region25: #{tpu_custom_call.1} parent=11 // pred_check
          %p344 = pneg %p145
        $region26: #{tpu_custom_call.1} parent=11 // pred_check_branch
          %346 = sbr.rel (%p344) target = $region28
        $region27: #{tpu_custom_call.1} parent=11 // pred_region
          _
        $region28: #{tpu_custom_call.1} parent=11 // pred_fallthru
          _
        // Predicated region
        $region29: #{tpu_custom_call.1} parent=11 // pred_check
          %p347 = pneg %p166
        $region30: #{tpu_custom_call.1} parent=11 // pred_check_branch
          %349 = sbr.rel (%p347) target = $region32
        $region31: #{tpu_custom_call.1} parent=11 // pred_region
          _
        $region32: #{tpu_custom_call.1} parent=11 // pred_fallthru
          _
        // Predicated region
        $region33: #{tpu_custom_call.1} parent=11 // pred_check
          %p350 = pneg %p187
        $region34: #{tpu_custom_call.1} parent=11 // pred_check_branch
          %352 = sbr.rel (%p350) target = $region36
        $region35: #{tpu_custom_call.1} parent=11 // pred_region
          _
        $region36: #{tpu_custom_call.1} parent=11 // pred_fallthru
          _
        // Predicated region
        $region37: #{tpu_custom_call.1} parent=11 // pred_check
          %p353 = pneg %p208
        $region38: #{tpu_custom_call.1} parent=11 // pred_check_branch
          %355 = sbr.rel (%p353) target = $region40
        $region39: #{tpu_custom_call.1} parent=11 // pred_region
          _
        $region40: #{tpu_custom_call.1} parent=11 // pred_fallthru
          _
        // Predicated region
        $region41: #{tpu_custom_call.1} parent=11 // pred_check
          %p356 = pneg %p229
        $region42: #{tpu_custom_call.1} parent=11 // pred_check_branch
          %358 = sbr.rel (%p356) target = $region44
        $region43: #{tpu_custom_call.1} parent=11 // pred_region
          _
        $region44: #{tpu_custom_call.1} parent=11 // pred_fallthru
          _
        // Predicated region
        $region45: #{tpu_custom_call.1} parent=11 // pred_check
          %p359 = pneg %p250
        $region46: #{tpu_custom_call.1} parent=11 // pred_check_branch
          %361 = sbr.rel (%p359) target = $region48
        $region47: #{tpu_custom_call.1} parent=11 // pred_region
          _
        $region48: #{tpu_custom_call.1} parent=11 // pred_fallthru
          _
        // Predicated region
        $region49: #{tpu_custom_call.1} parent=11 // pred_check
          %p362 = pneg %p271
        $region50: #{tpu_custom_call.1} parent=11 // pred_check_branch
          %364 = sbr.rel (%p362) target = $region52
        $region51: #{tpu_custom_call.1} parent=11 // pred_region
          _
        $region52: #{tpu_custom_call.1} parent=11 // pred_fallthru
          _
        // Predicated region
        $region53: #{tpu_custom_call.1} parent=11 // pred_check
          %p365 = pneg %p292
        $region54: #{tpu_custom_call.1} parent=11 // pred_check_branch
          %367 = sbr.rel (%p365) target = $region56
        $region55: #{tpu_custom_call.1} parent=11 // pred_region
          _
        $region56: #{tpu_custom_call.1} parent=11 // pred_fallthru
          _
      $region12: #{tpu_custom_call.1} parent=5 // pred_fallthru
        _
      %p368 = scmp.lt.s32.totalorder %s21, 4
      // Predicated region
      $region57: #{tpu_custom_call.1} parent=5 // pred_check
        %p369 = pneg %p368
      $region58: #{tpu_custom_call.1} parent=5 // pred_check_branch
        %371 = sbr.rel (%p369) target = $region60
      $region59: #{tpu_custom_call.1} parent=5 // pred_region
        // Predicated region
        $region61: #{tpu_custom_call.1} parent=59 // pred_check
          %p372 = pneg %p55
        $region62: #{tpu_custom_call.1} parent=59 // pred_check_branch
          %374 = sbr.rel (%p372) target = $region64
        $region63: #{tpu_custom_call.1} parent=59 // pred_region
          %p375 = scmp.lt.s32.totalorder %s28, 1
          %s376 = scalar_select %p375, %s28, 1
          %p377 = scmp.lt.s32.totalorder %s29, 1
          %s378 = scalar_select %p377, %s29, 1
          %s379 = smul.addr %s376, 2
          %s380 = sadd.s32 %s378, %s379
          %s381 = smul.addr %s380, 8
          %s382 = scalar_lea.vmem %s0, %s381
        $region64: #{tpu_custom_call.1} parent=59 // pred_fallthru
          _
      $region60: #{tpu_custom_call.1} parent=5 // pred_fallthru
        _
      %p383 = scmp.le.s32.totalorder 1, %s21
      %p384 = scmp.lt.s32.totalorder %s21, 5
      %p385 = pnand %p383, %p384
      %p386 = pneg %p385
      // Predicated region
      $region65: #{tpu_custom_call.1} parent=5 // pred_check
        _
      $region66: #{tpu_custom_call.1} parent=5 // pred_check_branch
        %388 = sbr.rel (%p385) target = $region68
      $region67: #{tpu_custom_call.1} parent=5 // pred_region
        %s389 = ssub.s32 %s21, 1
        %p390 = scmp.lt.s32.totalorder %s30, 1
        %s391 = scalar_select %p390, %s30, 1
        %p392 = scmp.lt.s32.totalorder %s31, 1
        %s393 = scalar_select %p392, %s31, 1
        %s394 = smul.addr %s391, 2
        %s395 = sadd.s32 %s393, %s394
        %s396 = smul.addr %s395, 8
        %s397 = scalar_lea.vmem %s0, %s396
        %p398 = pneg %p61
        %p399 = pneg %p58
        %p400 = pneg %p82
        %p401 = pneg %p79
        %p402 = pneg %p103
        %p403 = pneg %p100
        %p404 = pneg %p124
        %p405 = pneg %p121
        %p406 = pneg %p145
        %p407 = pneg %p142
        %p408 = pneg %p166
        %p409 = pneg %p163
        %p410 = pneg %p187
        %p411 = pneg %p184
        %p412 = pneg %p208
        %p413 = pneg %p205
        %p414 = pneg %p229
        %p415 = pneg %p226
        %p416 = pneg %p250
        %p417 = pneg %p247
        %p418 = pneg %p271
        %p419 = pneg %p268
        %p420 = pneg %p292
        %p421 = pneg %p289
        %p422 = pneg %p320
        %p423 = pneg %p317
        %s424 = sand.u32 %s307, 1
        %s425 = scalar_lea.sflag [#allocation11], %s424
        %s426 = sand.u32 %s307, 1
        %s427 = smul.addr %s426, 8
        %s428 = scalar_lea.vmem [#allocation10], %s427
        %p429 = scmp.lt.s32.totalorder %s30, 1
        %s430 = scalar_select %p429, %s30, 1
        %p431 = scmp.lt.s32.totalorder %s31, 1
        %s432 = scalar_select %p431, %s31, 1
        %s433 = smul.addr %s430, 2
        %s434 = sadd.s32 %s432, %s433
        %s435 = smul.addr %s434, 8
        %s436 = scalar_lea.vmem %s0, %s435
        %p438 = scmp.eq.s32.totalorder %s31, 0
        // Predicated region
        $region69: #{tpu_custom_call.1} parent=67 // pred_check
          %p439 = pneg %p438
        $region70: #{tpu_custom_call.1} parent=67 // pred_check_branch
          %441 = sbr.rel (%p439) target = $region72
        $region71: #{tpu_custom_call.1} parent=67 // pred_region
          %vm442 = vcmask 523264
          %443 = vst.msk [vmem:[#allocation9] sm:$0xff] %vm442, 0.0
          %444 = vst.msk [vmem:[#allocation9 + $0x8] sm:$0xff] %vm442, 0.0
          %445 = vst.msk [vmem:[#allocation2] sm:$0xff] %vm442, 0.0
        $region72: #{tpu_custom_call.1} parent=67 // pred_fallthru
          _
        %p446 = scmp.gt.s32.totalorder %s31, 0
        // Predicated region
        $region73: #{tpu_custom_call.1} parent=67 // pred_check
          %p447 = pneg %p446
        $region74: #{tpu_custom_call.1} parent=67 // pred_check_branch
          %449 = sbr.rel (%p447) target = $region76
        $region75: #{tpu_custom_call.1} parent=67 // pred_region
          %v450 = vld [vmem:[#allocation2 + $0x8] sm:$0xff]
          %vm451 = vcmask 523264
          %452 = vst.msk [vmem:[#allocation2] sm:$0xff] %vm451, %v450
        $region76: #{tpu_custom_call.1} parent=67 // pred_fallthru
          _
        %v453 = vld [vmem:[%s436] sm:$0xff]
        %v454 = vpack.c.bf16 %v453, %v453
        %v455 = vld [vmem:[%s1] sm:$0xf]
        %v456 = vld [vmem:[%s1 + $0x4] sm:$0xf]
        %v457 = vld [vmem:[%s1 + $0x8] sm:$0xf]
        %v458 = vld [vmem:[%s1 + $0xc] sm:$0xf]
        %v463 = vunpack.c.l.b16 %v455
        %v464 = vunpack.c.l.b16 %v456
        %v465 = vunpack.c.l.b16 %v457
        %v466 = vunpack.c.l.b16 %v458
        %v467 = vpack.c.b16 %v464, %v463
        %v468 = vpack.c.b16 %v466, %v465
        %vm471 = vcmask 261120
        %v473 = vsel %vm471, %v454, 0
        %475 = vmatpush.bf16.msra.mxu0 0
        %476 = vmatpush.bf16.msra.mxu0 0
        %477 = vmatpush.bf16.msra.mxu0 0
        %478 = vmatpush.bf16.msra.mxu0 0
        %479 = vmatpush.bf16.msra.mxu0 0
        %480 = vmatpush.bf16.msra.mxu0 0
        %481 = vmatpush.bf16.msra.mxu0 %v468
        %482 = vmatpush.bf16.msra.mxu0 %v467
        %483 = vmatmul.bf16.gmra.mxu0 %v473
        %v484 = vpop.f32.mrf.mxu0
        %v485 = vadd.f32 0.0, %v484
        %v486 = vpop.f32.mrf.mxu0
        %487 = vdwg.mxu0
        %489 = vrot.lane.b32.xlu0 %v485, 64
        %v490 = vpop.permute.xlu0 %489
        %vm492 = vcmask 523264
        %493 = vst.msk [vmem:[#allocation5] sm:$0xff] %vm492, %v490
        %494 = vst.msk [vmem:[#allocation2 + $0x8] sm:$0xff] %vm492, %v485
        %v495 = vld [vmem:[#allocation2 + $0x5] sm:$0xff]
        %v496 = vld [vmem:[%s2] sm:$0x1]
        %v497 = vperm.slane %v496, 0
        %v498 = vmul.f32 %v495, %v497
        %v499 = vadd.f32 %v498, 0.0
        %v500 = vld [vmem:[#allocation2 + $0x6] sm:$0xff]
        %v501 = vld [vmem:[%s2 + $0x1] sm:$0x1]
        %v502 = vperm.slane %v501, 0
        %v503 = vmul.f32 %v500, %v502
        %v504 = vadd.f32 %v499, %v503
        %v505 = vld [vmem:[#allocation2 + $0x7] sm:$0xff]
        %v506 = vld [vmem:[%s2 + $0x2] sm:$0x1]
        %v507 = vperm.slane %v506, 0
        %v508 = vmul.f32 %v505, %v507
        %v509 = vadd.f32 %v504, %v508
        %v510 = vld [vmem:[#allocation2 + $0x8] sm:$0xff]
        %v511 = vld [vmem:[%s2 + $0x3] sm:$0x1]
        %v512 = vperm.slane %v511, 0
        %v513 = vmul.f32 %v510, %v512
        %v514 = vadd.f32 %v509, %v513
        %v515 = vld [vmem:[%s3] sm:$0x1]
        %v517 = vperm.slane %v515, 0
        %v519 = vadd.f32 %v514, %v517
        %v520 = vsub.f32 0.0, %v519
        %v521 = vmul.f32 %v520, 1.442695
        %v522 = vpow.pop %v521
        %v523 = vadd.f32 %v522, 1.0
        %v524 = vrcp.pop %v523
        %v525 = vmul.f32 %v523, %v524
        %v526 = vsub.f32 1.0, %v525
        %v527 = vmul.f32 %v524, %v526
        %v528 = vadd.f32 %v524, %v527
        %vm529 = vweird.f32 %v523
        %vm530 = vweird.f32 %v524
        %vm531 = vmor %vm529, %vm530
        %v532 = vsel %vm531, %v524, %v528
        %v533 = vand.u32 2147483647, %v523
        %vm534 = vcmp.eq.f32.partialorder %v533, 8.507059e+37
        %v535 = vand.u32 %v523, 2147483648
        %v536 = vor.u32 1.1754944e-38, %v535
        %v537 = vsel %vm534, %v536, %v532
        %v538 = vmul.f32 1.0, %v537
        %v539 = vmul.f32 %v519, %v538
        %540 = vst.msk [vmem:[#allocation3] sm:$0xff] %vm492, %v539
        %v541 = vpack.c.bf16 %v539, %v539
        %v542 = vld [vmem:[%s5] sm:$0xf]
        %v543 = vld [vmem:[%s5 + $0x4] sm:$0xf]
        %v544 = vld [vmem:[%s5 + $0x8] sm:$0xf]
        %v545 = vld [vmem:[%s5 + $0xc] sm:$0xf]
        %v546 = vld [vmem:[%s5 + $0x10] sm:$0xf]
        %v547 = vld [vmem:[%s5 + $0x14] sm:$0xf]
        %v548 = vld [vmem:[%s5 + $0x18] sm:$0xf]
        %v549 = vld [vmem:[%s5 + $0x1c] sm:$0xf]
        %v558 = vunpack.c.l.b16 %v542
        %v559 = vunpack.c.l.b16 %v543
        %v560 = vunpack.c.l.b16 %v544
        %v561 = vunpack.c.l.b16 %v545
        %v562 = vunpack.c.l.b16 %v546
        %v563 = vunpack.c.l.b16 %v547
        %v564 = vunpack.c.l.b16 %v548
        %v565 = vunpack.c.l.b16 %v549
        %v566 = vpack.c.b16 %v559, %v558
        %v567 = vpack.c.b16 %v561, %v560
        %v568 = vpack.c.b16 %v563, %v562
        %v569 = vpack.c.b16 %v565, %v564
        %v575 = vsel %vm492, %v541, 0
        %577 = vmatpush.bf16.msra.mxu0 0
        %578 = vmatpush.bf16.msra.mxu0 0
        %579 = vmatpush.bf16.msra.mxu0 0
        %580 = vmatpush.bf16.msra.mxu0 0
        %581 = vmatpush.bf16.msra.mxu0 %v569
        %582 = vmatpush.bf16.msra.mxu0 %v568
        %583 = vmatpush.bf16.msra.mxu0 %v567
        %584 = vmatpush.bf16.msra.mxu0 %v566
        %585 = vmatmul.bf16.gmra.mxu0 %v575
        %v586 = vpop.f32.mrf.mxu0
        %v587 = vadd.f32 0.0, %v586
        %v588 = vpop.f32.mrf.mxu0
        %589 = vdwg.mxu0
        %vm590 = vcmask 130048
        %591 = vst.msk [vmem:[#allocation7] sm:$0xff] %vm590, %v587
        %v592 = vld [vmem:[%s6] sm:$0xf]
        %v593 = vld [vmem:[%s6 + $0x4] sm:$0xf]
        %v594 = vld [vmem:[%s6 + $0x8] sm:$0xf]
        %v595 = vld [vmem:[%s6 + $0xc] sm:$0xf]
        %v596 = vld [vmem:[%s6 + $0x10] sm:$0xf]
        %v597 = vld [vmem:[%s6 + $0x14] sm:$0xf]
        %v598 = vld [vmem:[%s6 + $0x18] sm:$0xf]
        %v599 = vld [vmem:[%s6 + $0x1c] sm:$0xf]
        %v608 = vunpack.c.l.b16 %v592
        %v609 = vunpack.c.l.b16 %v593
        %v610 = vunpack.c.l.b16 %v594
        %v611 = vunpack.c.l.b16 %v595
        %v612 = vunpack.c.l.b16 %v596
        %v613 = vunpack.c.l.b16 %v597
        %v614 = vunpack.c.l.b16 %v598
        %v615 = vunpack.c.l.b16 %v599
        %v616 = vpack.c.b16 %v609, %v608
        %v617 = vpack.c.b16 %v611, %v610
        %v618 = vpack.c.b16 %v613, %v612
        %v619 = vpack.c.b16 %v615, %v614
        %624 = vmatpush.bf16.msra.mxu0 0
        %625 = vmatpush.bf16.msra.mxu0 0
        %626 = vmatpush.bf16.msra.mxu0 0
        %627 = vmatpush.bf16.msra.mxu0 0
        %628 = vmatpush.bf16.msra.mxu0 %v619
        %629 = vmatpush.bf16.msra.mxu0 %v618
        %630 = vmatpush.bf16.msra.mxu0 %v617
        %631 = vmatpush.bf16.msra.mxu0 %v616
        %632 = vmatmul.bf16.gmra.mxu0 %v575
        %v633 = vpop.f32.mrf.mxu0
        %v634 = vadd.f32 0.0, %v633
        %v635 = vpop.f32.mrf.mxu0
        %636 = vdwg.mxu0
        %637 = vst.msk [vmem:[#allocation8] sm:$0xff] %vm590, %v634
        %v638 = vld [vmem:[%s4] sm:$0xf]
        %v639 = vld [vmem:[%s4 + $0x4] sm:$0xf]
        %v640 = vld [vmem:[%s4 + $0x8] sm:$0xf]
        %v641 = vld [vmem:[%s4 + $0xc] sm:$0xf]
        %v642 = vld [vmem:[%s4 + $0x10] sm:$0xf]
        %v643 = vld [vmem:[%s4 + $0x14] sm:$0xf]
        %v644 = vld [vmem:[%s4 + $0x18] sm:$0xf]
        %v645 = vld [vmem:[%s4 + $0x1c] sm:$0xf]
        %v654 = vunpack.c.l.b16 %v638
        %v655 = vunpack.c.l.b16 %v639
        %v656 = vunpack.c.l.b16 %v640
        %v657 = vunpack.c.l.b16 %v641
        %v658 = vunpack.c.l.b16 %v642
        %v659 = vunpack.c.l.b16 %v643
        %v660 = vunpack.c.l.b16 %v644
        %v661 = vunpack.c.l.b16 %v645
        %v662 = vpack.c.b16 %v655, %v654
        %v663 = vpack.c.b16 %v657, %v656
        %v664 = vpack.c.b16 %v659, %v658
        %v665 = vpack.c.b16 %v661, %v660
        %670 = vmatpush.bf16.msra.mxu0 0
        %671 = vmatpush.bf16.msra.mxu0 0
        %672 = vmatpush.bf16.msra.mxu0 0
        %673 = vmatpush.bf16.msra.mxu0 0
        %674 = vmatpush.bf16.msra.mxu0 %v665
        %675 = vmatpush.bf16.msra.mxu0 %v664
        %676 = vmatpush.bf16.msra.mxu0 %v663
        %677 = vmatpush.bf16.msra.mxu0 %v662
        %678 = vmatmul.bf16.gmra.mxu0 %v575
        %v679 = vpop.f32.mrf.mxu0
        %v680 = vadd.f32 0.0, %v679
        %v681 = vpop.f32.mrf.mxu0
        %682 = vdwg.mxu0
        %v683 = vpack.c.bf16 %v680, %v680
        %v684 = vld [vmem:[%s7] sm:$0x1]
        %v685 = vld [vmem:[%s8] sm:$0x1]
        %v687 = vperm.slane %v685, 0
        %vm689 = vcmask 15360
        %v691 = vsel %vm689, %v683, 0
        %vm693 = vcmask 1040384
        %v695 = vsel %vm693, %v684, 0
        %697 = vmatpush.bf16.msra.mxu0 0
        %698 = vmatpush.bf16.msra.mxu0 0
        %699 = vmatpush.bf16.msra.mxu0 0
        %700 = vmatpush.bf16.msra.mxu0 0
        %701 = vmatpush.bf16.msra.mxu0 0
        %702 = vmatpush.bf16.msra.mxu0 0
        %703 = vmatpush.bf16.msra.mxu0 0
        %704 = vmatpush.bf16.msra.mxu0 %v695
        %705 = vmatmul.bf16.gmra.mxu0 %v691
        %v706 = vpop.f32.mrf.mxu0
        %v707 = vadd.f32 %v687, %v706
        %v708 = vpop.f32.mrf.mxu0
        %709 = vdwg.mxu0
        %v710 = vmax.f32 %v707, 0.0
        %v711 = vand.u32 2147483647, %v707
        %v712 = vsub.f32 0.0, %v711
        %v713 = vmul.f32 %v712, 1.442695
        %v714 = vpow.pop %v713
        %v715 = vadd.f32 %v714, 1.0
        %v716 = vlog2.pop %v715
        %v717 = vmul.f32 %v716, 0.6931472
        %v718 = vadd.f32 %v710, %v717
        %719 = vst.msk [vmem:[#allocation4] sm:$0xff] %vm492, %v718
        %v720 = vld [vmem:[%s9] sm:$0xff]
        %v721 = vld [vmem:[%s9 + $0x8] sm:$0xff]
        %v722 = vld [vmem:[%s10] sm:$0x1]
        %v723 = vld [vmem:[#allocation4] sm:$0xff]
        %v724 = vld [vmem:[#allocation3] sm:$0xff]
        %v725 = vmul.f32 %v723, %v724
        %v726 = vld [vmem:[#allocation7] sm:$0xff]
        %v727 = vperm.slane %v726, 0
        %v728 = vlaneseq
        %v729 = vshrl.u32 %v728, 7
        %731 = vset.pattern.permute.xlu0 %v729
        %732 = vperm.xlu0 %731, %v727
        %v733 = vpop.permute.xlu0 %732
        %v734 = vlaneseq
        %v735 = vshrl.u32 %v734, 7
        %v736 = vadd.s32 %v735, 8
        %737 = vset.pattern.permute.xlu0 %v736
        %738 = vperm.xlu0 %737, %v727
        %v739 = vpop.permute.xlu0 %738
        %v740 = vperm.slane %v726, 1
        %v741 = vlaneseq
        %v742 = vshrl.u32 %v741, 7
        %744 = vset.pattern.permute.xlu0 %v742
        %745 = vperm.xlu0 %744, %v740
        %v746 = vpop.permute.xlu0 %745
        %v747 = vlaneseq
        %v748 = vshrl.u32 %v747, 7
        %v749 = vadd.s32 %v748, 8
        %750 = vset.pattern.permute.xlu0 %v749
        %751 = vperm.xlu0 %750, %v740
        %v752 = vpop.permute.xlu0 %751
        %v753 = vperm.slane %v726, 2
        %v754 = vlaneseq
        %v755 = vshrl.u32 %v754, 7
        %757 = vset.pattern.permute.xlu0 %v755
        %758 = vperm.xlu0 %757, %v753
        %v759 = vpop.permute.xlu0 %758
        %v760 = vlaneseq
        %v761 = vshrl.u32 %v760, 7
        %v762 = vadd.s32 %v761, 8
        %763 = vset.pattern.permute.xlu0 %v762
        %764 = vperm.xlu0 %763, %v753
        %v765 = vpop.permute.xlu0 %764
        %v766 = vperm.slane %v726, 3
        %v767 = vlaneseq
        %v768 = vshrl.u32 %v767, 7
        %770 = vset.pattern.permute.xlu0 %v768
        %771 = vperm.xlu0 %770, %v766
        %v772 = vpop.permute.xlu0 %771
        %v773 = vlaneseq
        %v774 = vshrl.u32 %v773, 7
        %v775 = vadd.s32 %v774, 8
        %776 = vset.pattern.permute.xlu0 %v775
        %777 = vperm.xlu0 %776, %v766
        %v778 = vpop.permute.xlu0 %777
        %v779 = vperm.slane %v726, 4
        %v780 = vlaneseq
        %v781 = vshrl.u32 %v780, 7
        %783 = vset.pattern.permute.xlu0 %v781
        %784 = vperm.xlu0 %783, %v779
        %v785 = vpop.permute.xlu0 %784
        %v786 = vlaneseq
        %v787 = vshrl.u32 %v786, 7
        %v788 = vadd.s32 %v787, 8
        %789 = vset.pattern.permute.xlu0 %v788
        %790 = vperm.xlu0 %789, %v779
        %v791 = vpop.permute.xlu0 %790
        %v792 = vperm.slane %v726, 5
        %v793 = vlaneseq
        %v794 = vshrl.u32 %v793, 7
        %796 = vset.pattern.permute.xlu0 %v794
        %797 = vperm.xlu0 %796, %v792
        %v798 = vpop.permute.xlu0 %797
        %v799 = vlaneseq
        %v800 = vshrl.u32 %v799, 7
        %v801 = vadd.s32 %v800, 8
        %802 = vset.pattern.permute.xlu0 %v801
        %803 = vperm.xlu0 %802, %v792
        %v804 = vpop.permute.xlu0 %803
        %v805 = vperm.slane %v726, 6
        %v806 = vlaneseq
        %v807 = vshrl.u32 %v806, 7
        %809 = vset.pattern.permute.xlu0 %v807
        %810 = vperm.xlu0 %809, %v805
        %v811 = vpop.permute.xlu0 %810
        %v812 = vlaneseq
        %v813 = vshrl.u32 %v812, 7
        %v814 = vadd.s32 %v813, 8
        %815 = vset.pattern.permute.xlu0 %v814
        %816 = vperm.xlu0 %815, %v805
        %v817 = vpop.permute.xlu0 %816
        %v818 = vperm.slane %v726, 7
        %v819 = vlaneseq
        %v820 = vshrl.u32 %v819, 7
        %822 = vset.pattern.permute.xlu0 %v820
        %823 = vperm.xlu0 %822, %v818
        %v824 = vpop.permute.xlu0 %823
        %v825 = vlaneseq
        %v826 = vshrl.u32 %v825, 7
        %v827 = vadd.s32 %v826, 8
        %828 = vset.pattern.permute.xlu0 %v827
        %829 = vperm.xlu0 %828, %v818
        %v830 = vpop.permute.xlu0 %829
        %v831 = vld [vmem:[#allocation8] sm:$0xff]
        %v832 = vperm.slane %v831, 0
        %v833 = vlaneseq
        %v834 = vshrl.u32 %v833, 7
        %836 = vset.pattern.permute.xlu0 %v834
        %837 = vperm.xlu0 %836, %v832
        %v838 = vpop.permute.xlu0 %837
        %v839 = vlaneseq
        %v840 = vshrl.u32 %v839, 7
        %v841 = vadd.s32 %v840, 8
        %842 = vset.pattern.permute.xlu0 %v841
        %843 = vperm.xlu0 %842, %v832
        %v844 = vpop.permute.xlu0 %843
        %v845 = vperm.slane %v831, 1
        %v846 = vlaneseq
        %v847 = vshrl.u32 %v846, 7
        %849 = vset.pattern.permute.xlu0 %v847
        %850 = vperm.xlu0 %849, %v845
        %v851 = vpop.permute.xlu0 %850
        %v852 = vlaneseq
        %v853 = vshrl.u32 %v852, 7
        %v854 = vadd.s32 %v853, 8
        %855 = vset.pattern.permute.xlu0 %v854
        %856 = vperm.xlu0 %855, %v845
        %v857 = vpop.permute.xlu0 %856
        %v858 = vperm.slane %v831, 2
        %v859 = vlaneseq
        %v860 = vshrl.u32 %v859, 7
        %862 = vset.pattern.permute.xlu0 %v860
        %863 = vperm.xlu0 %862, %v858
        %v864 = vpop.permute.xlu0 %863
        %v865 = vlaneseq
        %v866 = vshrl.u32 %v865, 7
        %v867 = vadd.s32 %v866, 8
        %868 = vset.pattern.permute.xlu0 %v867
        %869 = vperm.xlu0 %868, %v858
        %v870 = vpop.permute.xlu0 %869
        %v871 = vperm.slane %v831, 3
        %v872 = vlaneseq
        %v873 = vshrl.u32 %v872, 7
        %875 = vset.pattern.permute.xlu0 %v873
        %876 = vperm.xlu0 %875, %v871
        %v877 = vpop.permute.xlu0 %876
        %v878 = vlaneseq
        %v879 = vshrl.u32 %v878, 7
        %v880 = vadd.s32 %v879, 8
        %881 = vset.pattern.permute.xlu0 %v880
        %882 = vperm.xlu0 %881, %v871
        %v883 = vpop.permute.xlu0 %882
        %v884 = vperm.slane %v831, 4
        %v885 = vlaneseq
        %v886 = vshrl.u32 %v885, 7
        %888 = vset.pattern.permute.xlu0 %v886
        %889 = vperm.xlu0 %888, %v884
        %v890 = vpop.permute.xlu0 %889
        %v891 = vlaneseq
        %v892 = vshrl.u32 %v891, 7
        %v893 = vadd.s32 %v892, 8
        %894 = vset.pattern.permute.xlu0 %v893
        %895 = vperm.xlu0 %894, %v884
        %v896 = vpop.permute.xlu0 %895
        %v897 = vperm.slane %v831, 5
        %v898 = vlaneseq
        %v899 = vshrl.u32 %v898, 7
        %901 = vset.pattern.permute.xlu0 %v899
        %902 = vperm.xlu0 %901, %v897
        %v903 = vpop.permute.xlu0 %902
        %v904 = vlaneseq
        %v905 = vshrl.u32 %v904, 7
        %v906 = vadd.s32 %v905, 8
        %907 = vset.pattern.permute.xlu0 %v906
        %908 = vperm.xlu0 %907, %v897
        %v909 = vpop.permute.xlu0 %908
        %v910 = vperm.slane %v831, 6
        %v911 = vlaneseq
        %v912 = vshrl.u32 %v911, 7
        %914 = vset.pattern.permute.xlu0 %v912
        %915 = vperm.xlu0 %914, %v910
        %v916 = vpop.permute.xlu0 %915
        %v917 = vlaneseq
        %v918 = vshrl.u32 %v917, 7
        %v919 = vadd.s32 %v918, 8
        %920 = vset.pattern.permute.xlu0 %v919
        %921 = vperm.xlu0 %920, %v910
        %v922 = vpop.permute.xlu0 %921
        %v923 = vperm.slane %v831, 7
        %v924 = vlaneseq
        %v925 = vshrl.u32 %v924, 7
        %927 = vset.pattern.permute.xlu0 %v925
        %928 = vperm.xlu0 %927, %v923
        %v929 = vpop.permute.xlu0 %928
        %v930 = vlaneseq
        %v931 = vshrl.u32 %v930, 7
        %v932 = vadd.s32 %v931, 8
        %933 = vset.pattern.permute.xlu0 %v932
        %934 = vperm.xlu0 %933, %v923
        %v935 = vpop.permute.xlu0 %934
        %v936 = vld [vmem:[#allocation5] sm:$0xff]
        %v938 = vrot.slane %v723, 1
        %v939 = vrot.slane %v723, 2
        %v940 = vrot.slane %v723, 3
        %v941 = vrot.slane %v723, 4
        %v942 = vrot.slane %v723, 5
        %v943 = vrot.slane %v723, 6
        %v944 = vrot.slane %v723, 7
        %v945 = vperm.slane %v723, 0
        %v946 = vperm.slane %v938, 0
        %v947 = vperm.slane %v939, 0
        %v948 = vperm.slane %v940, 0
        %v949 = vperm.slane %v941, 0
        %v950 = vperm.slane %v942, 0
        %v951 = vperm.slane %v943, 0
        %v952 = vperm.slane %v944, 0
        %v961 = vmul.f32 %v945, %v720
        %v962 = vmul.f32 %v945, %v721
        %v963 = vmul.f32 %v946, %v720
        %v964 = vmul.f32 %v946, %v721
        %v965 = vmul.f32 %v947, %v720
        %v966 = vmul.f32 %v947, %v721
        %v967 = vmul.f32 %v948, %v720
        %v968 = vmul.f32 %v948, %v721
        %v969 = vmul.f32 %v949, %v720
        %v970 = vmul.f32 %v949, %v721
        %v971 = vmul.f32 %v950, %v720
        %v972 = vmul.f32 %v950, %v721
        %v973 = vmul.f32 %v951, %v720
        %v974 = vmul.f32 %v951, %v721
        %v975 = vmul.f32 %v952, %v720
        %v976 = vmul.f32 %v952, %v721
        %v977 = vmul.f32 %v961, 1.442695
        %v978 = vpow.pop %v977
        %v979 = vmul.f32 %v962, 1.442695
        %v980 = vpow.pop %v979
        %v981 = vmul.f32 %v963, 1.442695
        %v982 = vpow.pop %v981
        %v983 = vmul.f32 %v964, 1.442695
        %v984 = vpow.pop %v983
        %v985 = vmul.f32 %v965, 1.442695
        %v986 = vpow.pop %v985
        %v987 = vmul.f32 %v966, 1.442695
        %v988 = vpow.pop %v987
        %v989 = vmul.f32 %v967, 1.442695
        %v990 = vpow.pop %v989
        %v991 = vmul.f32 %v968, 1.442695
        %v992 = vpow.pop %v991
        %v993 = vmul.f32 %v969, 1.442695
        %v994 = vpow.pop %v993
        %v995 = vmul.f32 %v970, 1.442695
        %v996 = vpow.pop %v995
        %v997 = vmul.f32 %v971, 1.442695
        %v998 = vpow.pop %v997
        %v999 = vmul.f32 %v972, 1.442695
        %v1000 = vpow.pop %v999
        %v1001 = vmul.f32 %v973, 1.442695
        %v1002 = vpow.pop %v1001
        %v1003 = vmul.f32 %v974, 1.442695
        %v1004 = vpow.pop %v1003
        %v1005 = vmul.f32 %v975, 1.442695
        %v1006 = vpow.pop %v1005
        %v1007 = vmul.f32 %v976, 1.442695
        %v1008 = vpow.pop %v1007
        %v1010 = vrot.slane %v725, 1
        %v1011 = vrot.slane %v725, 2
        %v1012 = vrot.slane %v725, 3
        %v1013 = vrot.slane %v725, 4
        %v1014 = vrot.slane %v725, 5
        %v1015 = vrot.slane %v725, 6
        %v1016 = vrot.slane %v725, 7
        %v1017 = vperm.slane %v725, 0
        %v1018 = vperm.slane %v1010, 0
        %v1019 = vperm.slane %v1011, 0
        %v1020 = vperm.slane %v1012, 0
        %v1021 = vperm.slane %v1013, 0
        %v1022 = vperm.slane %v1014, 0
        %v1023 = vperm.slane %v1015, 0
        %v1024 = vperm.slane %v1016, 0
        %v1033 = vmul.f32 %v1017, %v733
        %v1034 = vmul.f32 %v1017, %v739
        %v1035 = vmul.f32 %v1018, %v746
        %v1036 = vmul.f32 %v1018, %v752
        %v1037 = vmul.f32 %v1019, %v759
        %v1038 = vmul.f32 %v1019, %v765
        %v1039 = vmul.f32 %v1020, %v772
        %v1040 = vmul.f32 %v1020, %v778
        %v1041 = vmul.f32 %v1021, %v785
        %v1042 = vmul.f32 %v1021, %v791
        %v1043 = vmul.f32 %v1022, %v798
        %v1044 = vmul.f32 %v1022, %v804
        %v1045 = vmul.f32 %v1023, %v811
        %v1046 = vmul.f32 %v1023, %v817
        %v1047 = vmul.f32 %v1024, %v824
        %v1048 = vmul.f32 %v1024, %v830
        %v1049 = vld [vmem:[#allocation9] sm:$0xff]
        %v1050 = vld [vmem:[#allocation9 + $0x8] sm:$0xff]
        %v1051 = vmul.f32 %v1049, %v978
        %v1052 = vmul.f32 %v1050, %v980
        %v1053 = vadd.f32 %v1051, %v1033
        %v1054 = vadd.f32 %v1052, %v1034
        %v1055 = vmul.f32 %v1053, %v982
        %v1056 = vmul.f32 %v1054, %v984
        %v1057 = vadd.f32 %v1055, %v1035
        %v1058 = vadd.f32 %v1056, %v1036
        %v1059 = vmul.f32 %v1057, %v986
        %v1060 = vmul.f32 %v1058, %v988
        %v1061 = vadd.f32 %v1059, %v1037
        %v1062 = vadd.f32 %v1060, %v1038
        %v1063 = vmul.f32 %v1061, %v990
        %v1064 = vmul.f32 %v1062, %v992
        %v1065 = vadd.f32 %v1063, %v1039
        %v1066 = vadd.f32 %v1064, %v1040
        %v1067 = vmul.f32 %v1065, %v994
        %v1068 = vmul.f32 %v1066, %v996
        %v1069 = vadd.f32 %v1067, %v1041
        %v1070 = vadd.f32 %v1068, %v1042
        %v1071 = vmul.f32 %v1069, %v998
        %v1072 = vmul.f32 %v1070, %v1000
        %v1073 = vadd.f32 %v1071, %v1043
        %v1074 = vadd.f32 %v1072, %v1044
        %v1075 = vmul.f32 %v1073, %v1002
        %v1076 = vmul.f32 %v1074, %v1004
        %v1077 = vadd.f32 %v1075, %v1045
        %v1078 = vadd.f32 %v1076, %v1046
        %v1079 = vmul.f32 %v1077, %v1006
        %v1080 = vmul.f32 %v1078, %v1008
        %v1081 = vadd.f32 %v1079, %v1047
        %v1082 = vadd.f32 %v1080, %v1048
        %1083 = vst.msk [vmem:[#allocation9] sm:$0xff] %vm492, %v1081
        %1084 = vst.msk [vmem:[#allocation9 + $0x8] sm:$0xff] %vm492, %v1082
        %v1085 = vmul.f32 %v1053, %v838
        %v1086 = vmul.f32 %v1054, %v844
        %v1087 = vmul.f32 %v1057, %v851
        %v1088 = vmul.f32 %v1058, %v857
        %v1089 = vmul.f32 %v1061, %v864
        %v1090 = vmul.f32 %v1062, %v870
        %v1091 = vmul.f32 %v1065, %v877
        %v1092 = vmul.f32 %v1066, %v883
        %v1093 = vmul.f32 %v1069, %v890
        %v1094 = vmul.f32 %v1070, %v896
        %v1095 = vmul.f32 %v1073, %v903
        %v1096 = vmul.f32 %v1074, %v909
        %v1097 = vmul.f32 %v1077, %v916
        %v1098 = vmul.f32 %v1078, %v922
        %v1099 = vmul.f32 %v1081, %v929
        %v1100 = vmul.f32 %v1082, %v935
        %v1101 = vsel %vm492, %v1085, 0.0
        %v1102 = vsel %vm492, %v1086, 0.0
        %v1103 = vadd.f32 %v1101, %v1102
        %v1104 = vrot.slane %v1103, 4
        %v1105 = vadd.f32 %v1103, %v1104
        %v1106 = vrot.slane %v1105, 2
        %v1107 = vadd.f32 %v1105, %v1106
        %v1108 = vrot.slane %v1107, 1
        %v1109 = vadd.f32 %v1107, %v1108
        %v1110 = vsel %vm492, %v1087, 0.0
        %v1111 = vsel %vm492, %v1088, 0.0
        %v1112 = vadd.f32 %v1110, %v1111
        %v1113 = vrot.slane %v1112, 4
        %v1114 = vadd.f32 %v1112, %v1113
        %v1115 = vrot.slane %v1114, 2
        %v1116 = vadd.f32 %v1114, %v1115
        %v1117 = vrot.slane %v1116, 1
        %v1118 = vadd.f32 %v1116, %v1117
        %v1119 = vsel %vm492, %v1089, 0.0
        %v1120 = vsel %vm492, %v1090, 0.0
        %v1121 = vadd.f32 %v1119, %v1120
        %v1122 = vrot.slane %v1121, 4
        %v1123 = vadd.f32 %v1121, %v1122
        %v1124 = vrot.slane %v1123, 2
        %v1125 = vadd.f32 %v1123, %v1124
        %v1126 = vrot.slane %v1125, 1
        %v1127 = vadd.f32 %v1125, %v1126
        %v1128 = vsel %vm492, %v1091, 0.0
        %v1129 = vsel %vm492, %v1092, 0.0
        %v1130 = vadd.f32 %v1128, %v1129
        %v1131 = vrot.slane %v1130, 4
        %v1132 = vadd.f32 %v1130, %v1131
        %v1133 = vrot.slane %v1132, 2
        %v1134 = vadd.f32 %v1132, %v1133
        %v1135 = vrot.slane %v1134, 1
        %v1136 = vadd.f32 %v1134, %v1135
        %v1137 = vsel %vm492, %v1093, 0.0
        %v1138 = vsel %vm492, %v1094, 0.0
        %v1139 = vadd.f32 %v1137, %v1138
        %v1140 = vrot.slane %v1139, 4
        %v1141 = vadd.f32 %v1139, %v1140
        %v1142 = vrot.slane %v1141, 2
        %v1143 = vadd.f32 %v1141, %v1142
        %v1144 = vrot.slane %v1143, 1
        %v1145 = vadd.f32 %v1143, %v1144
        %v1146 = vsel %vm492, %v1095, 0.0
        %v1147 = vsel %vm492, %v1096, 0.0
        %v1148 = vadd.f32 %v1146, %v1147
        %v1149 = vrot.slane %v1148, 4
        %v1150 = vadd.f32 %v1148, %v1149
        %v1151 = vrot.slane %v1150, 2
        %v1152 = vadd.f32 %v1150, %v1151
        %v1153 = vrot.slane %v1152, 1
        %v1154 = vadd.f32 %v1152, %v1153
        %v1155 = vsel %vm492, %v1097, 0.0
        %v1156 = vsel %vm492, %v1098, 0.0
        %v1157 = vadd.f32 %v1155, %v1156
        %v1158 = vrot.slane %v1157, 4
        %v1159 = vadd.f32 %v1157, %v1158
        %v1160 = vrot.slane %v1159, 2
        %v1161 = vadd.f32 %v1159, %v1160
        %v1162 = vrot.slane %v1161, 1
        %v1163 = vadd.f32 %v1161, %v1162
        %v1164 = vsel %vm492, %v1099, 0.0
        %v1165 = vsel %vm492, %v1100, 0.0
        %v1166 = vadd.f32 %v1164, %v1165
        %v1167 = vrot.slane %v1166, 4
        %v1168 = vadd.f32 %v1166, %v1167
        %v1169 = vrot.slane %v1168, 2
        %v1170 = vadd.f32 %v1168, %v1169
        %v1171 = vrot.slane %v1170, 1
        %v1172 = vadd.f32 %v1170, %v1171
        %v1174 = vperm.slane %v722, 0
        %v1176 = vmul.f32 %v1174, %v724
        %v1178 = vrot.slane %v1176, 1
        %v1179 = vrot.slane %v1176, 2
        %v1180 = vrot.slane %v1176, 3
        %v1181 = vrot.slane %v1176, 4
        %v1182 = vrot.slane %v1176, 5
        %v1183 = vrot.slane %v1176, 6
        %v1184 = vrot.slane %v1176, 7
        %v1193 = vadd.f32 %v1109, %v1176
        %v1194 = vadd.f32 %v1118, %v1178
        %v1195 = vadd.f32 %v1127, %v1179
        %v1196 = vadd.f32 %v1136, %v1180
        %v1197 = vadd.f32 %v1145, %v1181
        %v1198 = vadd.f32 %v1154, %v1182
        %v1199 = vadd.f32 %v1163, %v1183
        %v1200 = vadd.f32 %v1172, %v1184
        %v1201 = vsub.f32 0.0, %v936
        %v1202 = vmul.f32 %v1201, 1.442695
        %v1203 = vpow.pop %v1202
        %v1204 = vadd.f32 %v1203, 1.0
        %v1205 = vrcp.pop %v1204
        %v1206 = vmul.f32 %v1204, %v1205
        %v1207 = vsub.f32 1.0, %v1206
        %v1208 = vmul.f32 %v1205, %v1207
        %v1209 = vadd.f32 %v1205, %v1208
        %vm1210 = vweird.f32 %v1204
        %vm1211 = vweird.f32 %v1205
        %vm1212 = vmor %vm1210, %vm1211
        %v1213 = vsel %vm1212, %v1205, %v1209
        %v1214 = vand.u32 2147483647, %v1204
        %vm1215 = vcmp.eq.f32.partialorder %v1214, 8.507059e+37
        %v1216 = vand.u32 %v1204, 2147483648
        %v1217 = vor.u32 1.1754944e-38, %v1216
        %v1218 = vsel %vm1215, %v1217, %v1213
        %v1219 = vmul.f32 1.0, %v1218
        %v1220 = vmul.f32 %v936, %v1219
        %v1222 = vrot.slane %v1220, 1
        %v1223 = vrot.slane %v1220, 2
        %v1224 = vrot.slane %v1220, 3
        %v1225 = vrot.slane %v1220, 4
        %v1226 = vrot.slane %v1220, 5
        %v1227 = vrot.slane %v1220, 6
        %v1228 = vrot.slane %v1220, 7
        %v1237 = vmul.f32 %v1193, %v1220
        %v1238 = vmul.f32 %v1194, %v1222
        %v1239 = vmul.f32 %v1195, %v1223
        %v1240 = vmul.f32 %v1196, %v1224
        %v1241 = vmul.f32 %v1197, %v1225
        %v1242 = vmul.f32 %v1198, %v1226
        %v1243 = vmul.f32 %v1199, %v1227
        %v1244 = vmul.f32 %v1200, %v1228
        %v1253 = vrot.slane %v1238, 7
        %vm1254 = vcmask 1041409
        %v1255 = vsel %vm1254, %v1253, %v1237
        %v1256 = vrot.slane %v1239, 6
        %vm1257 = vcmask 1042434
        %v1258 = vsel %vm1257, %v1256, %v1255
        %v1259 = vrot.slane %v1240, 5
        %vm1260 = vcmask 1043459
        %v1261 = vsel %vm1260, %v1259, %v1258
        %v1262 = vrot.slane %v1241, 4
        %vm1263 = vcmask 1044484
        %v1264 = vsel %vm1263, %v1262, %v1261
        %v1265 = vrot.slane %v1242, 3
        %vm1266 = vcmask 1045509
        %v1267 = vsel %vm1266, %v1265, %v1264
        %v1268 = vrot.slane %v1243, 2
        %vm1269 = vcmask 1046534
        %v1270 = vsel %vm1269, %v1268, %v1267
        %v1271 = vrot.slane %v1244, 1
        %vm1272 = vcmask 1047559
        %v1273 = vsel %vm1272, %v1271, %v1270
        %1275 = vst.msk [vmem:[#allocation6] sm:$0xff] %vm492, %v1273
        %v1276 = vld [vmem:[#allocation6] sm:$0xff]
        %v1277 = vpack.c.bf16 %v1276, %v1276
        %v1278 = vld [vmem:[%s11] sm:$0xf]
        %v1279 = vld [vmem:[%s11 + $0x4] sm:$0xf]
        %v1280 = vld [vmem:[%s11 + $0x8] sm:$0xf]
        %v1281 = vld [vmem:[%s11 + $0xc] sm:$0xf]
        %v1282 = vld [vmem:[%s11 + $0x10] sm:$0xf]
        %v1283 = vld [vmem:[%s11 + $0x14] sm:$0xf]
        %v1284 = vld [vmem:[%s11 + $0x18] sm:$0xf]
        %v1285 = vld [vmem:[%s11 + $0x1c] sm:$0xf]
        %v1294 = vunpack.c.l.b16 %v1278
        %v1295 = vunpack.c.l.b16 %v1279
        %v1296 = vunpack.c.l.b16 %v1280
        %v1297 = vunpack.c.l.b16 %v1281
        %v1298 = vunpack.c.l.b16 %v1282
        %v1299 = vunpack.c.l.b16 %v1283
        %v1300 = vunpack.c.l.b16 %v1284
        %v1301 = vunpack.c.l.b16 %v1285
        %v1302 = vpack.c.b16 %v1295, %v1294
        %v1303 = vpack.c.b16 %v1297, %v1296
        %v1304 = vpack.c.b16 %v1299, %v1298
        %v1305 = vpack.c.b16 %v1301, %v1300
        %v1311 = vsel %vm492, %v1277, 0
        %1313 = vmatpush.bf16.msra.mxu0 0
        %1314 = vmatpush.bf16.msra.mxu0 0
        %1315 = vmatpush.bf16.msra.mxu0 0
        %1316 = vmatpush.bf16.msra.mxu0 0
        %1317 = vmatpush.bf16.msra.mxu0 %v1305
        %1318 = vmatpush.bf16.msra.mxu0 %v1304
        %1319 = vmatpush.bf16.msra.mxu0 %v1303
        %1320 = vmatpush.bf16.msra.mxu0 %v1302
        %1321 = vmatmul.bf16.gmra.mxu0 %v1311
        %v1322 = vpop.f32.mrf.mxu0
        %v1323 = vadd.f32 0.0, %v1322
        %v1324 = vpop.f32.mrf.mxu0
        %1325 = vdwg.mxu0
        %1326 = vst.msk [vmem:[%s428] sm:$0xff] %vm471, %v1323
        %s1327 = sand.u32 %s307, 1
        %s1328 = scalar_lea.sflag [#allocation11], %s1327
        %s1329 = sand.u32 %s307, 1
        %s1330 = smul.addr %s1329, 8
        %s1331 = scalar_lea.vmem [#allocation10], %s1330
        // Predicated region
        $region77: #{tpu_custom_call.1} parent=67 // pred_check
          %p1332 = pneg %p317
        $region78: #{tpu_custom_call.1} parent=67 // pred_check_branch
          %1334 = sbr.rel (%p1332) target = $region80
        $region79: #{tpu_custom_call.1} parent=67 // pred_region
          %1336 = vsyncadd %s1328, 0
          %s1337 = smul.addr %s30, 2
          %s1338 = sadd.s32 %s31, %s1337
          %s1339 = smul.addr %s1338, 8
          %s1340 = scalar_lea.hbm %s12, %s1339
          %s1342 = sshll.u32 %s1331, 4
          %s1343 = int_to_ptr.vmem [resolvable:$true] %s1342
          %s1344 = sshll.u32 %s1340, 4
          %s1345 = int_to_ptr.hbm [resolvable:$true] %s1344
          %1347 = dma.vmem_to_hbm [thread:$0]  %s1343, 128, %s1345, %s1328
        $region80: #{tpu_custom_call.1} parent=67 // pred_fallthru
          _
      $region68: #{tpu_custom_call.1} parent=5 // pred_fallthru
        _
      %p1348 = scmp.le.s32.totalorder 2, %s21
      // Predicated region
      $region81: #{tpu_custom_call.1} parent=5 // pred_check
        %p1349 = pneg %p1348
      $region82: #{tpu_custom_call.1} parent=5 // pred_check_branch
        %1351 = sbr.rel (%p1349) target = $region84
      $region83: #{tpu_custom_call.1} parent=5 // pred_region
        %s1352 = ssub.s32 %s21, 2
        // Predicated region
        $region85: #{tpu_custom_call.1} parent=83 // pred_check
          %p1353 = pneg %p323
        $region86: #{tpu_custom_call.1} parent=83 // pred_check_branch
          %1355 = sbr.rel (%p1353) target = $region88
        $region87: #{tpu_custom_call.1} parent=83 // pred_region
          %s1356 = sand.u32 %s308, 1
          %s1357 = scalar_lea.sflag [#allocation11], %s1356
          %s1358 = sand.u32 %s308, 1
          %s1359 = smul.addr %s1358, 8
          %s1360 = scalar_lea.vmem [#allocation10], %s1359
          %1362 = dma.done %s1357, 128
        $region88: #{tpu_custom_call.1} parent=83 // pred_fallthru
          _
      $region84: #{tpu_custom_call.1} parent=5 // pred_fallthru
        _
    $region6: #{tpu_custom_call.1} parent=1 // loop_footer
      %s25 = sadd.s32 1, %s21
    $region7: #{tpu_custom_call.1} parent=1 // loop_footer_branch
      %20 = sbr.rel target = $region3
    $region8: #{tpu_custom_call.1} parent=1 // loop_exit
      _
    %1363 = vsyncpa [#allocation11], 1
    %s1364 = scalar_lea.sflag [#allocation11], 1
    %1365 = vsyncpa %s1364, 1

// kernel: tpu_custom_call.1
$region0: #{tpu_custom_call.1}
  #allocation0 [shape = 'u32[]', space=smem, size = 0x4, offset = 0x4, fixed_abs, tag = 'smem constant byte address 0x4 - core index']
  #allocation1 [shape = 'u32[72,128]{1,0:T(1,128)}', space=vmem, size = 0x9000, scoped, tag = 'internal scratch']
  #allocation2 [shape = 'f32[16,64]{1,0:T(8,128)}', space=vmem, size = 0x2000, scoped, tag = 'scratch operand']
  #allocation3 [shape = 'f32[8,64]{1,0:T(8,128)}', space=vmem, size = 0x1000, scoped, tag = 'scratch operand']
  #allocation4 [shape = 'f32[8,64]{1,0:T(8,128)}', space=vmem, size = 0x1000, scoped, tag = 'scratch operand']
  #allocation5 [shape = 'f32[8,64]{1,0:T(8,128)}', space=vmem, size = 0x1000, scoped, tag = 'scratch operand']
  #allocation6 [shape = 'f32[8,64]{1,0:T(8,128)}', space=vmem, size = 0x1000, scoped, tag = 'scratch operand']
  #allocation7 [shape = 'f32[8,16]{1,0:T(8,128)}', space=vmem, size = 0x1000, scoped, tag = 'scratch operand']
  #allocation8 [shape = 'f32[8,16]{1,0:T(8,128)}', space=vmem, size = 0x1000, scoped, tag = 'scratch operand']
  #allocation9 [shape = 'f32[16,64]{1,0:T(8,128)}', space=vmem, size = 0x2000, scoped, tag = 'scratch operand']
  %s0 = inlined_call_operand.vmem [shape: f32[2,16,32], index: 0, kind: input, shape index: {}]
  %s1 = inlined_call_operand.vmem [shape: bf16[32,128], index: 1, kind: input, shape index: {}]
  %s2 = inlined_call_operand.vmem [shape: f32[4,64], index: 2, kind: input, shape index: {}]
  %s3 = inlined_call_operand.vmem [shape: f32[1,64], index: 3, kind: input, shape index: {}]
  %s4 = inlined_call_operand.vmem [shape: bf16[64,2], index: 4, kind: input, shape index: {}]
  %s5 = inlined_call_operand.vmem [shape: bf16[64,16], index: 5, kind: input, shape index: {}]
  %s6 = inlined_call_operand.vmem [shape: bf16[64,16], index: 6, kind: input, shape index: {}]
  %s7 = inlined_call_operand.vmem [shape: bf16[2,64], index: 7, kind: input, shape index: {}]
  %s8 = inlined_call_operand.vmem [shape: f32[1,64], index: 8, kind: input, shape index: {}]
  %s9 = inlined_call_operand.vmem [shape: f32[16,64], index: 9, kind: input, shape index: {}]
  %s10 = inlined_call_operand.vmem [shape: f32[1,64], index: 10, kind: input, shape index: {}]
  %s11 = inlined_call_operand.vmem [shape: bf16[64,32], index: 11, kind: input, shape index: {}]
  %s12 = inlined_call_operand.hbm [shape: f32[2,16,32], index: 12, kind: output, shape index: {}]
  %s13 = sld [smem:[#allocation0]]
  $region89: #{tpu_custom_call.1} parent=0
    _
  %s15 = ssub.s32 1, %s13
  %s16 = scalar_select 0, %s15, %s13
  $region1: #{tpu_custom_call.1} parent=0
    #allocation10 [shape = 'u8[8192]{0}', space=vmem, size = 0x2000, scoped, tag = 'output window, operand 0']
    #allocation11 [shape = 's32[2]{0}', space=sflag, size = 0x8, scoped, tag = 'scoped memory for tpu_custom_call.1']
    %17 = vsyncpa [#allocation11], 0
    %s18 = scalar_lea.sflag [#allocation11], 1
    %19 = vsyncpa %s18, 0
    loop: start=0, step=1, limit=6
    $region2: #{tpu_custom_call.1} parent=1 // loop_pre_header
      _
    $region3: #{tpu_custom_call.1} parent=1 // loop_header
      %s21 = sphi 0, %s25
      %p22 = scmp.ge.s32.totalorder %s21, 6
      %s28 = sphi 0, %s40
      %s29 = sphi 0, %s36
      %s30 = sphi 0, %s28
      %s31 = sphi 0, %s29
      %s32 = sphi 0, %s30
      %s33 = sphi 0, %s31
      %s45 = sphi 0, %s47
      %s48 = sphi 0, %s45
      %s49 = sphi 0, %s48
      %s65 = sphi 0, %s49
      %s69 = sphi 0, %s69
      %s71 = sphi 0, %s69
      %s72 = sphi 0, %s71
      %s86 = sphi 0, %s72
      %s90 = sphi 0, %s90
      %s92 = sphi 0, %s90
      %s93 = sphi 0, %s92
      %s107 = sphi 0, %s93
      %s111 = sphi 0, %s111
      %s113 = sphi 0, %s111
      %s114 = sphi 0, %s113
      %s128 = sphi 0, %s114
      %s132 = sphi 0, %s132
      %s134 = sphi 0, %s132
      %s135 = sphi 0, %s134
      %s149 = sphi 0, %s135
      %s153 = sphi 0, %s153
      %s155 = sphi 0, %s153
      %s156 = sphi 0, %s155
      %s170 = sphi 0, %s156
      %s174 = sphi 0, %s174
      %s176 = sphi 0, %s174
      %s177 = sphi 0, %s176
      %s191 = sphi 0, %s177
      %s195 = sphi 0, %s195
      %s197 = sphi 0, %s195
      %s198 = sphi 0, %s197
      %s212 = sphi 0, %s198
      %s216 = sphi 0, %s216
      %s218 = sphi 0, %s216
      %s219 = sphi 0, %s218
      %s233 = sphi 0, %s219
      %s237 = sphi 0, %s237
      %s239 = sphi 0, %s237
      %s240 = sphi 0, %s239
      %s254 = sphi 0, %s240
      %s258 = sphi 0, %s258
      %s260 = sphi 0, %s258
      %s261 = sphi 0, %s260
      %s275 = sphi 0, %s261
      %s279 = sphi 0, %s279
      %s281 = sphi 0, %s279
      %s282 = sphi 0, %s281
      %s296 = sphi 0, %s282
      %s304 = sphi 0, %s306
      %s307 = sphi 0, %s304
      %s308 = sphi 0, %s307
      %s324 = sphi 0, %s308
    $region4: #{tpu_custom_call.1} parent=1 // loop_header_branch
      %24 = sbr.rel (%p22) target = $region8
    $region5: #{tpu_custom_call.1} parent=1 // loop_body
      %s26 = ssub.s32 %s21, 1
      %s27 = ssub.s32 %s21, 2
      %s34 = sadd.s32 1, %s29
      %p35 = scmp.ge.s32.totalorder %s34, 2
      %s36 = scalar_select %p35, 0, %s34
      %s37 = sadd.s32 1, %s28
      %s38 = scalar_select %p35, %s37, %s28
      %p39 = scmp.ge.s32.totalorder %s38, 2
      %s40 = scalar_select %p39, 0, %s38
      %s41 = ssub.s32 %s28, %s40
      %s42 = ssub.s32 %s29, %s36
      %s43 = sor.u32 %s41, %s42
      %p44 = scmp.eq.s32.totalorder %s43, 0
      %s46 = sadd.s32 %s45, 1
      %s47 = scalar_select %p44, %s45, %s46
      %p50 = pneg %p44
      %p51 = scmp.eq.s32.totalorder %s21, 3
      %p52 = por %p50, %p51
      %p53 = scmp.ne.s32.totalorder %s45, %s48
      %p54 = scmp.eq.s32.totalorder %s21, 0
      %p55 = por %p53, %p54
      %p56 = scmp.ne.s32.totalorder %s45, %s48
      %p57 = scmp.eq.s32.totalorder %s26, 3
      %p58 = por %p56, %p57
      %p59 = scmp.ne.s32.totalorder %s48, %s49
      %p60 = scmp.eq.s32.totalorder %s26, 0
      %p61 = por %p59, %p60
      %p62 = scmp.ne.s32.totalorder %s48, %s49
      %p63 = scmp.eq.s32.totalorder %s27, 3
      %p64 = por %p62, %p63
      %p66 = scmp.ne.s32.totalorder %s49, %s65
      %p67 = scmp.eq.s32.totalorder %s27, 0
      %p68 = por %p66, %p67
      %s70 = sadd.s32 %s69, 1
      %p73 = scmp.eq.s32.totalorder %s21, 3
      %p74 = scmp.ne.s32.totalorder %s69, %s71
      %p75 = scmp.eq.s32.totalorder %s21, 0
      %p76 = por %p74, %p75
      %p77 = scmp.ne.s32.totalorder %s69, %s71
      %p78 = scmp.eq.s32.totalorder %s26, 3
      %p79 = por %p77, %p78
      %p80 = scmp.ne.s32.totalorder %s71, %s72
      %p81 = scmp.eq.s32.totalorder %s26, 0
      %p82 = por %p80, %p81
      %p83 = scmp.ne.s32.totalorder %s71, %s72
      %p84 = scmp.eq.s32.totalorder %s27, 3
      %p85 = por %p83, %p84
      %p87 = scmp.ne.s32.totalorder %s72, %s86
      %p88 = scmp.eq.s32.totalorder %s27, 0
      %p89 = por %p87, %p88
      %s91 = sadd.s32 %s90, 1
      %p94 = scmp.eq.s32.totalorder %s21, 3
      %p95 = scmp.ne.s32.totalorder %s90, %s92
      %p96 = scmp.eq.s32.totalorder %s21, 0
      %p97 = por %p95, %p96
      %p98 = scmp.ne.s32.totalorder %s90, %s92
      %p99 = scmp.eq.s32.totalorder %s26, 3
      %p100 = por %p98, %p99
      %p101 = scmp.ne.s32.totalorder %s92, %s93
      %p102 = scmp.eq.s32.totalorder %s26, 0
      %p103 = por %p101, %p102
      %p104 = scmp.ne.s32.totalorder %s92, %s93
      %p105 = scmp.eq.s32.totalorder %s27, 3
      %p106 = por %p104, %p105
      %p108 = scmp.ne.s32.totalorder %s93, %s107
      %p109 = scmp.eq.s32.totalorder %s27, 0
      %p110 = por %p108, %p109
      %s112 = sadd.s32 %s111, 1
      %p115 = scmp.eq.s32.totalorder %s21, 3
      %p116 = scmp.ne.s32.totalorder %s111, %s113
      %p117 = scmp.eq.s32.totalorder %s21, 0
      %p118 = por %p116, %p117
      %p119 = scmp.ne.s32.totalorder %s111, %s113
      %p120 = scmp.eq.s32.totalorder %s26, 3
      %p121 = por %p119, %p120
      %p122 = scmp.ne.s32.totalorder %s113, %s114
      %p123 = scmp.eq.s32.totalorder %s26, 0
      %p124 = por %p122, %p123
      %p125 = scmp.ne.s32.totalorder %s113, %s114
      %p126 = scmp.eq.s32.totalorder %s27, 3
      %p127 = por %p125, %p126
      %p129 = scmp.ne.s32.totalorder %s114, %s128
      %p130 = scmp.eq.s32.totalorder %s27, 0
      %p131 = por %p129, %p130
      %s133 = sadd.s32 %s132, 1
      %p136 = scmp.eq.s32.totalorder %s21, 3
      %p137 = scmp.ne.s32.totalorder %s132, %s134
      %p138 = scmp.eq.s32.totalorder %s21, 0
      %p139 = por %p137, %p138
      %p140 = scmp.ne.s32.totalorder %s132, %s134
      %p141 = scmp.eq.s32.totalorder %s26, 3
      %p142 = por %p140, %p141
      %p143 = scmp.ne.s32.totalorder %s134, %s135
      %p144 = scmp.eq.s32.totalorder %s26, 0
      %p145 = por %p143, %p144
      %p146 = scmp.ne.s32.totalorder %s134, %s135
      %p147 = scmp.eq.s32.totalorder %s27, 3
      %p148 = por %p146, %p147
      %p150 = scmp.ne.s32.totalorder %s135, %s149
      %p151 = scmp.eq.s32.totalorder %s27, 0
      %p152 = por %p150, %p151
      %s154 = sadd.s32 %s153, 1
      %p157 = scmp.eq.s32.totalorder %s21, 3
      %p158 = scmp.ne.s32.totalorder %s153, %s155
      %p159 = scmp.eq.s32.totalorder %s21, 0
      %p160 = por %p158, %p159
      %p161 = scmp.ne.s32.totalorder %s153, %s155
      %p162 = scmp.eq.s32.totalorder %s26, 3
      %p163 = por %p161, %p162
      %p164 = scmp.ne.s32.totalorder %s155, %s156
      %p165 = scmp.eq.s32.totalorder %s26, 0
      %p166 = por %p164, %p165
      %p167 = scmp.ne.s32.totalorder %s155, %s156
      %p168 = scmp.eq.s32.totalorder %s27, 3
      %p169 = por %p167, %p168
      %p171 = scmp.ne.s32.totalorder %s156, %s170
      %p172 = scmp.eq.s32.totalorder %s27, 0
      %p173 = por %p171, %p172
      %s175 = sadd.s32 %s174, 1
      %p178 = scmp.eq.s32.totalorder %s21, 3
      %p179 = scmp.ne.s32.totalorder %s174, %s176
      %p180 = scmp.eq.s32.totalorder %s21, 0
      %p181 = por %p179, %p180
      %p182 = scmp.ne.s32.totalorder %s174, %s176
      %p183 = scmp.eq.s32.totalorder %s26, 3
      %p184 = por %p182, %p183
      %p185 = scmp.ne.s32.totalorder %s176, %s177
      %p186 = scmp.eq.s32.totalorder %s26, 0
      %p187 = por %p185, %p186
      %p188 = scmp.ne.s32.totalorder %s176, %s177
      %p189 = scmp.eq.s32.totalorder %s27, 3
      %p190 = por %p188, %p189
      %p192 = scmp.ne.s32.totalorder %s177, %s191
      %p193 = scmp.eq.s32.totalorder %s27, 0
      %p194 = por %p192, %p193
      %s196 = sadd.s32 %s195, 1
      %p199 = scmp.eq.s32.totalorder %s21, 3
      %p200 = scmp.ne.s32.totalorder %s195, %s197
      %p201 = scmp.eq.s32.totalorder %s21, 0
      %p202 = por %p200, %p201
      %p203 = scmp.ne.s32.totalorder %s195, %s197
      %p204 = scmp.eq.s32.totalorder %s26, 3
      %p205 = por %p203, %p204
      %p206 = scmp.ne.s32.totalorder %s197, %s198
      %p207 = scmp.eq.s32.totalorder %s26, 0
      %p208 = por %p206, %p207
      %p209 = scmp.ne.s32.totalorder %s197, %s198
      %p210 = scmp.eq.s32.totalorder %s27, 3
      %p211 = por %p209, %p210
      %p213 = scmp.ne.s32.totalorder %s198, %s212
      %p214 = scmp.eq.s32.totalorder %s27, 0
      %p215 = por %p213, %p214
      %s217 = sadd.s32 %s216, 1
      %p220 = scmp.eq.s32.totalorder %s21, 3
      %p221 = scmp.ne.s32.totalorder %s216, %s218
      %p222 = scmp.eq.s32.totalorder %s21, 0
      %p223 = por %p221, %p222
      %p224 = scmp.ne.s32.totalorder %s216, %s218
      %p225 = scmp.eq.s32.totalorder %s26, 3
      %p226 = por %p224, %p225
      %p227 = scmp.ne.s32.totalorder %s218, %s219
      %p228 = scmp.eq.s32.totalorder %s26, 0
      %p229 = por %p227, %p228
      %p230 = scmp.ne.s32.totalorder %s218, %s219
      %p231 = scmp.eq.s32.totalorder %s27, 3
      %p232 = por %p230, %p231
      %p234 = scmp.ne.s32.totalorder %s219, %s233
      %p235 = scmp.eq.s32.totalorder %s27, 0
      %p236 = por %p234, %p235
      %s238 = sadd.s32 %s237, 1
      %p241 = scmp.eq.s32.totalorder %s21, 3
      %p242 = scmp.ne.s32.totalorder %s237, %s239
      %p243 = scmp.eq.s32.totalorder %s21, 0
      %p244 = por %p242, %p243
      %p245 = scmp.ne.s32.totalorder %s237, %s239
      %p246 = scmp.eq.s32.totalorder %s26, 3
      %p247 = por %p245, %p246
      %p248 = scmp.ne.s32.totalorder %s239, %s240
      %p249 = scmp.eq.s32.totalorder %s26, 0
      %p250 = por %p248, %p249
      %p251 = scmp.ne.s32.totalorder %s239, %s240
      %p252 = scmp.eq.s32.totalorder %s27, 3
      %p253 = por %p251, %p252
      %p255 = scmp.ne.s32.totalorder %s240, %s254
      %p256 = scmp.eq.s32.totalorder %s27, 0
      %p257 = por %p255, %p256
      %s259 = sadd.s32 %s258, 1
      %p262 = scmp.eq.s32.totalorder %s21, 3
      %p263 = scmp.ne.s32.totalorder %s258, %s260
      %p264 = scmp.eq.s32.totalorder %s21, 0
      %p265 = por %p263, %p264
      %p266 = scmp.ne.s32.totalorder %s258, %s260
      %p267 = scmp.eq.s32.totalorder %s26, 3
      %p268 = por %p266, %p267
      %p269 = scmp.ne.s32.totalorder %s260, %s261
      %p270 = scmp.eq.s32.totalorder %s26, 0
      %p271 = por %p269, %p270
      %p272 = scmp.ne.s32.totalorder %s260, %s261
      %p273 = scmp.eq.s32.totalorder %s27, 3
      %p274 = por %p272, %p273
      %p276 = scmp.ne.s32.totalorder %s261, %s275
      %p277 = scmp.eq.s32.totalorder %s27, 0
      %p278 = por %p276, %p277
      %s280 = sadd.s32 %s279, 1
      %p283 = scmp.eq.s32.totalorder %s21, 3
      %p284 = scmp.ne.s32.totalorder %s279, %s281
      %p285 = scmp.eq.s32.totalorder %s21, 0
      %p286 = por %p284, %p285
      %p287 = scmp.ne.s32.totalorder %s279, %s281
      %p288 = scmp.eq.s32.totalorder %s26, 3
      %p289 = por %p287, %p288
      %p290 = scmp.ne.s32.totalorder %s281, %s282
      %p291 = scmp.eq.s32.totalorder %s26, 0
      %p292 = por %p290, %p291
      %p293 = scmp.ne.s32.totalorder %s281, %s282
      %p294 = scmp.eq.s32.totalorder %s27, 3
      %p295 = por %p293, %p294
      %p297 = scmp.ne.s32.totalorder %s282, %s296
      %p298 = scmp.eq.s32.totalorder %s27, 0
      %p299 = por %p297, %p298
      %s300 = ssub.s32 %s28, %s40
      %s301 = ssub.s32 %s29, %s36
      %s302 = sor.u32 %s300, %s301
      %p303 = scmp.eq.s32.totalorder %s302, 0
      %s305 = sadd.s32 %s304, 1
      %s306 = scalar_select %p303, %s304, %s305
      %p309 = pneg %p303
      %p310 = scmp.eq.s32.totalorder %s21, 3
      %p311 = por %p309, %p310
      %p312 = scmp.ne.s32.totalorder %s304, %s307
      %p313 = scmp.eq.s32.totalorder %s21, 0
      %p314 = por %p312, %p313
      %p315 = scmp.ne.s32.totalorder %s304, %s307
      %p316 = scmp.eq.s32.totalorder %s26, 3
      %p317 = por %p315, %p316
      %p318 = scmp.ne.s32.totalorder %s307, %s308
      %p319 = scmp.eq.s32.totalorder %s26, 0
      %p320 = por %p318, %p319
      %p321 = scmp.ne.s32.totalorder %s307, %s308
      %p322 = scmp.eq.s32.totalorder %s27, 3
      %p323 = por %p321, %p322
      %p325 = scmp.ne.s32.totalorder %s308, %s324
      %p326 = scmp.eq.s32.totalorder %s27, 0
      %p327 = por %p325, %p326
      %p328 = scmp.le.s32.totalorder 1, %s21
      %p329 = scmp.lt.s32.totalorder %s21, 5
      %p330 = pnand %p328, %p329
      %p331 = pneg %p330
      // Predicated region
      $region9: #{tpu_custom_call.1} parent=5 // pred_check
        _
      $region10: #{tpu_custom_call.1} parent=5 // pred_check_branch
        %333 = sbr.rel (%p330) target = $region12
      $region11: #{tpu_custom_call.1} parent=5 // pred_region
        %s334 = ssub.s32 %s21, 1
        // Predicated region
        $region13: #{tpu_custom_call.1} parent=11 // pred_check
          %p335 = pneg %p82
        $region14: #{tpu_custom_call.1} parent=11 // pred_check_branch
          %337 = sbr.rel (%p335) target = $region16
        $region15: #{tpu_custom_call.1} parent=11 // pred_region
          _
        $region16: #{tpu_custom_call.1} parent=11 // pred_fallthru
          _
        // Predicated region
        $region17: #{tpu_custom_call.1} parent=11 // pred_check
          %p338 = pneg %p103
        $region18: #{tpu_custom_call.1} parent=11 // pred_check_branch
          %340 = sbr.rel (%p338) target = $region20
        $region19: #{tpu_custom_call.1} parent=11 // pred_region
          _
        $region20: #{tpu_custom_call.1} parent=11 // pred_fallthru
          _
        // Predicated region
        $region21: #{tpu_custom_call.1} parent=11 // pred_check
          %p341 = pneg %p124
        $region22: #{tpu_custom_call.1} parent=11 // pred_check_branch
          %343 = sbr.rel (%p341) target = $region24
        $region23: #{tpu_custom_call.1} parent=11 // pred_region
          _
        $region24: #{tpu_custom_call.1} parent=11 // pred_fallthru
          _
        // Predicated region
        $region25: #{tpu_custom_call.1} parent=11 // pred_check
          %p344 = pneg %p145
        $region26: #{tpu_custom_call.1} parent=11 // pred_check_branch
          %346 = sbr.rel (%p344) target = $region28
        $region27: #{tpu_custom_call.1} parent=11 // pred_region
          _
        $region28: #{tpu_custom_call.1} parent=11 // pred_fallthru
          _
        // Predicated region
        $region29: #{tpu_custom_call.1} parent=11 // pred_check
          %p347 = pneg %p166
        $region30: #{tpu_custom_call.1} parent=11 // pred_check_branch
          %349 = sbr.rel (%p347) target = $region32
        $region31: #{tpu_custom_call.1} parent=11 // pred_region
          _
        $region32: #{tpu_custom_call.1} parent=11 // pred_fallthru
          _
        // Predicated region
        $region33: #{tpu_custom_call.1} parent=11 // pred_check
          %p350 = pneg %p187
        $region34: #{tpu_custom_call.1} parent=11 // pred_check_branch
          %352 = sbr.rel (%p350) target = $region36
        $region35: #{tpu_custom_call.1} parent=11 // pred_region
          _
        $region36: #{tpu_custom_call.1} parent=11 // pred_fallthru
          _
        // Predicated region
        $region37: #{tpu_custom_call.1} parent=11 // pred_check
          %p353 = pneg %p208
        $region38: #{tpu_custom_call.1} parent=11 // pred_check_branch
          %355 = sbr.rel (%p353) target = $region40
        $region39: #{tpu_custom_call.1} parent=11 // pred_region
          _
        $region40: #{tpu_custom_call.1} parent=11 // pred_fallthru
          _
        // Predicated region
        $region41: #{tpu_custom_call.1} parent=11 // pred_check
          %p356 = pneg %p229
        $region42: #{tpu_custom_call.1} parent=11 // pred_check_branch
          %358 = sbr.rel (%p356) target = $region44
        $region43: #{tpu_custom_call.1} parent=11 // pred_region
          _
        $region44: #{tpu_custom_call.1} parent=11 // pred_fallthru
          _
        // Predicated region
        $region45: #{tpu_custom_call.1} parent=11 // pred_check
          %p359 = pneg %p250
        $region46: #{tpu_custom_call.1} parent=11 // pred_check_branch
          %361 = sbr.rel (%p359) target = $region48
        $region47: #{tpu_custom_call.1} parent=11 // pred_region
          _
        $region48: #{tpu_custom_call.1} parent=11 // pred_fallthru
          _
        // Predicated region
        $region49: #{tpu_custom_call.1} parent=11 // pred_check
          %p362 = pneg %p271
        $region50: #{tpu_custom_call.1} parent=11 // pred_check_branch
          %364 = sbr.rel (%p362) target = $region52
        $region51: #{tpu_custom_call.1} parent=11 // pred_region
          _
        $region52: #{tpu_custom_call.1} parent=11 // pred_fallthru
          _
        // Predicated region
        $region53: #{tpu_custom_call.1} parent=11 // pred_check
          %p365 = pneg %p292
        $region54: #{tpu_custom_call.1} parent=11 // pred_check_branch
          %367 = sbr.rel (%p365) target = $region56
        $region55: #{tpu_custom_call.1} parent=11 // pred_region
          _
        $region56: #{tpu_custom_call.1} parent=11 // pred_fallthru
          _
      $region12: #{tpu_custom_call.1} parent=5 // pred_fallthru
        _
      %p368 = scmp.lt.s32.totalorder %s21, 4
      // Predicated region
      $region57: #{tpu_custom_call.1} parent=5 // pred_check
        %p369 = pneg %p368
      $region58: #{tpu_custom_call.1} parent=5 // pred_check_branch
        %371 = sbr.rel (%p369) target = $region60
      $region59: #{tpu_custom_call.1} parent=5 // pred_region
        // Predicated region
        $region61: #{tpu_custom_call.1} parent=59 // pred_check
          %p372 = pneg %p55
        $region62: #{tpu_custom_call.1} parent=59 // pred_check_branch
          %374 = sbr.rel (%p372) target = $region64
        $region63: #{tpu_custom_call.1} parent=59 // pred_region
          %p375 = scmp.lt.s32.totalorder %s28, 1
          %s376 = scalar_select %p375, %s28, 1
          %p377 = scmp.lt.s32.totalorder %s29, 1
          %s378 = scalar_select %p377, %s29, 1
          %s379 = smul.addr %s376, 2
          %s380 = sadd.s32 %s378, %s379
          %s381 = smul.addr %s380, 8
          %s382 = scalar_lea.vmem %s0, %s381
        $region64: #{tpu_custom_call.1} parent=59 // pred_fallthru
          _
      $region60: #{tpu_custom_call.1} parent=5 // pred_fallthru
        _
      %p383 = scmp.le.s32.totalorder 1, %s21
      %p384 = scmp.lt.s32.totalorder %s21, 5
      %p385 = pnand %p383, %p384
      %p386 = pneg %p385
      // Predicated region
      $region65: #{tpu_custom_call.1} parent=5 // pred_check
        _
      $region66: #{tpu_custom_call.1} parent=5 // pred_check_branch
        %388 = sbr.rel (%p385) target = $region68
      $region67: #{tpu_custom_call.1} parent=5 // pred_region
        %s389 = ssub.s32 %s21, 1
        %p390 = scmp.lt.s32.totalorder %s30, 1
        %s391 = scalar_select %p390, %s30, 1
        %p392 = scmp.lt.s32.totalorder %s31, 1
        %s393 = scalar_select %p392, %s31, 1
        %s394 = smul.addr %s391, 2
        %s395 = sadd.s32 %s393, %s394
        %s396 = smul.addr %s395, 8
        %s397 = scalar_lea.vmem %s0, %s396
        %p398 = pneg %p61
        %p399 = pneg %p58
        %p400 = pneg %p82
        %p401 = pneg %p79
        %p402 = pneg %p103
        %p403 = pneg %p100
        %p404 = pneg %p124
        %p405 = pneg %p121
        %p406 = pneg %p145
        %p407 = pneg %p142
        %p408 = pneg %p166
        %p409 = pneg %p163
        %p410 = pneg %p187
        %p411 = pneg %p184
        %p412 = pneg %p208
        %p413 = pneg %p205
        %p414 = pneg %p229
        %p415 = pneg %p226
        %p416 = pneg %p250
        %p417 = pneg %p247
        %p418 = pneg %p271
        %p419 = pneg %p268
        %p420 = pneg %p292
        %p421 = pneg %p289
        %p422 = pneg %p320
        %p423 = pneg %p317
        %s424 = sand.u32 %s307, 1
        %s425 = scalar_lea.sflag [#allocation11], %s424
        %s426 = sand.u32 %s307, 1
        %s427 = smul.addr %s426, 8
        %s428 = scalar_lea.vmem [#allocation10], %s427
        %p429 = scmp.lt.s32.totalorder %s30, 1
        %s430 = scalar_select %p429, %s30, 1
        %p431 = scmp.lt.s32.totalorder %s31, 1
        %s432 = scalar_select %p431, %s31, 1
        %s433 = smul.addr %s430, 2
        %s434 = sadd.s32 %s432, %s433
        %s435 = smul.addr %s434, 8
        %s436 = scalar_lea.vmem %s0, %s435
        %p438 = scmp.eq.s32.totalorder %s31, 0
        // Predicated region
        $region69: #{tpu_custom_call.1} parent=67 // pred_check
          %p439 = pneg %p438
        $region70: #{tpu_custom_call.1} parent=67 // pred_check_branch
          %441 = sbr.rel (%p439) target = $region72
        $region71: #{tpu_custom_call.1} parent=67 // pred_region
          %vm442 = vcmask 523264
          %443 = vst.msk [vmem:[#allocation9] sm:$0xff] %vm442, 0.0
          %444 = vst.msk [vmem:[#allocation9 + $0x8] sm:$0xff] %vm442, 0.0
          %445 = vst.msk [vmem:[#allocation2] sm:$0xff] %vm442, 0.0
        $region72: #{tpu_custom_call.1} parent=67 // pred_fallthru
          _
        %p446 = scmp.gt.s32.totalorder %s31, 0
        // Predicated region
        $region73: #{tpu_custom_call.1} parent=67 // pred_check
          %p447 = pneg %p446
        $region74: #{tpu_custom_call.1} parent=67 // pred_check_branch
          %449 = sbr.rel (%p447) target = $region76
        $region75: #{tpu_custom_call.1} parent=67 // pred_region
          %v450 = vld [vmem:[#allocation2 + $0x8] sm:$0xff]
          %vm451 = vcmask 523264
          %452 = vst.msk [vmem:[#allocation2] sm:$0xff] %vm451, %v450
        $region76: #{tpu_custom_call.1} parent=67 // pred_fallthru
          _
        %v453 = vld [vmem:[%s436] sm:$0xff]
        %v454 = vpack.c.bf16 %v453, %v453
        %v455 = vld [vmem:[%s1] sm:$0xf]
        %v456 = vld [vmem:[%s1 + $0x4] sm:$0xf]
        %v457 = vld [vmem:[%s1 + $0x8] sm:$0xf]
        %v458 = vld [vmem:[%s1 + $0xc] sm:$0xf]
        %v463 = vunpack.c.l.b16 %v455
        %v464 = vunpack.c.l.b16 %v456
        %v465 = vunpack.c.l.b16 %v457
        %v466 = vunpack.c.l.b16 %v458
        %v467 = vpack.c.b16 %v464, %v463
        %v468 = vpack.c.b16 %v466, %v465
        %vm471 = vcmask 261120
        %v473 = vsel %vm471, %v454, 0
        %475 = vmatpush.bf16.msra.mxu0 0
        %476 = vmatpush.bf16.msra.mxu0 0
        %477 = vmatpush.bf16.msra.mxu0 0
        %478 = vmatpush.bf16.msra.mxu0 0
        %479 = vmatpush.bf16.msra.mxu0 0
        %480 = vmatpush.bf16.msra.mxu0 0
        %481 = vmatpush.bf16.msra.mxu0 %v468
        %482 = vmatpush.bf16.msra.mxu0 %v467
        %483 = vmatmul.bf16.gmra.mxu0 %v473
        %v484 = vpop.f32.mrf.mxu0
        %v485 = vadd.f32 0.0, %v484
        %v486 = vpop.f32.mrf.mxu0
        %487 = vdwg.mxu0
        %489 = vrot.lane.b32.xlu0 %v485, 64
        %v490 = vpop.permute.xlu0 %489
        %vm492 = vcmask 523264
        %493 = vst.msk [vmem:[#allocation5] sm:$0xff] %vm492, %v490
        %494 = vst.msk [vmem:[#allocation2 + $0x8] sm:$0xff] %vm492, %v485
        %v495 = vld [vmem:[#allocation2 + $0x5] sm:$0xff]
        %v496 = vld [vmem:[%s2] sm:$0x1]
        %v497 = vperm.slane %v496, 0
        %v498 = vmul.f32 %v495, %v497
        %v499 = vadd.f32 %v498, 0.0
        %v500 = vld [vmem:[#allocation2 + $0x6] sm:$0xff]
        %v501 = vld [vmem:[%s2 + $0x1] sm:$0x1]
        %v502 = vperm.slane %v501, 0
        %v503 = vmul.f32 %v500, %v502
        %v504 = vadd.f32 %v499, %v503
        %v505 = vld [vmem:[#allocation2 + $0x7] sm:$0xff]
        %v506 = vld [vmem:[%s2 + $0x2] sm:$0x1]
        %v507 = vperm.slane %v506, 0
        %v508 = vmul.f32 %v505, %v507
        %v509 = vadd.f32 %v504, %v508
        %v510 = vld [vmem:[#allocation2 + $0x8] sm:$0xff]
        %v511 = vld [vmem:[%s2 + $0x3] sm:$0x1]
        %v512 = vperm.slane %v511, 0
        %v513 = vmul.f32 %v510, %v512
        %v514 = vadd.f32 %v509, %v513
        %v515 = vld [vmem:[%s3] sm:$0x1]
        %v517 = vperm.slane %v515, 0
        %v519 = vadd.f32 %v514, %v517
        %v520 = vsub.f32 0.0, %v519
        %v521 = vmul.f32 %v520, 1.442695
        %v522 = vpow.pop %v521
        %v523 = vadd.f32 %v522, 1.0
        %v524 = vrcp.pop %v523
        %v525 = vmul.f32 %v523, %v524
        %v526 = vsub.f32 1.0, %v525
        %v527 = vmul.f32 %v524, %v526
        %v528 = vadd.f32 %v524, %v527
        %vm529 = vweird.f32 %v523
        %vm530 = vweird.f32 %v524
        %vm531 = vmor %vm529, %vm530
        %v532 = vsel %vm531, %v524, %v528
        %v533 = vand.u32 2147483647, %v523
        %vm534 = vcmp.eq.f32.partialorder %v533, 8.507059e+37
        %v535 = vand.u32 %v523, 2147483648
        %v536 = vor.u32 1.1754944e-38, %v535
        %v537 = vsel %vm534, %v536, %v532
        %v538 = vmul.f32 1.0, %v537
        %v539 = vmul.f32 %v519, %v538
        %540 = vst.msk [vmem:[#allocation3] sm:$0xff] %vm492, %v539
        %v541 = vpack.c.bf16 %v539, %v539
        %v542 = vld [vmem:[%s5] sm:$0xf]
        %v543 = vld [vmem:[%s5 + $0x4] sm:$0xf]
        %v544 = vld [vmem:[%s5 + $0x8] sm:$0xf]
        %v545 = vld [vmem:[%s5 + $0xc] sm:$0xf]
        %v546 = vld [vmem:[%s5 + $0x10] sm:$0xf]
        %v547 = vld [vmem:[%s5 + $0x14] sm:$0xf]
        %v548 = vld [vmem:[%s5 + $0x18] sm:$0xf]
        %v549 = vld [vmem:[%s5 + $0x1c] sm:$0xf]
        %v558 = vunpack.c.l.b16 %v542
        %v559 = vunpack.c.l.b16 %v543
        %v560 = vunpack.c.l.b16 %v544
        %v561 = vunpack.c.l.b16 %v545
        %v562 = vunpack.c.l.b16 %v546
        %v563 = vunpack.c.l.b16 %v547
        %v564 = vunpack.c.l.b16 %v548
        %v565 = vunpack.c.l.b16 %v549
        %v566 = vpack.c.b16 %v559, %v558
        %v567 = vpack.c.b16 %v561, %v560
        %v568 = vpack.c.b16 %v563, %v562
        %v569 = vpack.c.b16 %v565, %v564
        %v575 = vsel %vm492, %v541, 0
        %577 = vmatpush.bf16.msra.mxu0 0
        %578 = vmatpush.bf16.msra.mxu0 0
        %579 = vmatpush.bf16.msra.mxu0 0
        %580 = vmatpush.bf16.msra.mxu0 0
        %581 = vmatpush.bf16.msra.mxu0 %v569
        %582 = vmatpush.bf16.msra.mxu0 %v568
        %583 = vmatpush.bf16.msra.mxu0 %v567
        %584 = vmatpush.bf16.msra.mxu0 %v566
        %585 = vmatmul.bf16.gmra.mxu0 %v575
        %v586 = vpop.f32.mrf.mxu0
        %v587 = vadd.f32 0.0, %v586
        %v588 = vpop.f32.mrf.mxu0
        %589 = vdwg.mxu0
        %vm590 = vcmask 130048
        %591 = vst.msk [vmem:[#allocation7] sm:$0xff] %vm590, %v587
        %v592 = vld [vmem:[%s6] sm:$0xf]
        %v593 = vld [vmem:[%s6 + $0x4] sm:$0xf]
        %v594 = vld [vmem:[%s6 + $0x8] sm:$0xf]
        %v595 = vld [vmem:[%s6 + $0xc] sm:$0xf]
        %v596 = vld [vmem:[%s6 + $0x10] sm:$0xf]
        %v597 = vld [vmem:[%s6 + $0x14] sm:$0xf]
        %v598 = vld [vmem:[%s6 + $0x18] sm:$0xf]
        %v599 = vld [vmem:[%s6 + $0x1c] sm:$0xf]
        %v608 = vunpack.c.l.b16 %v592
        %v609 = vunpack.c.l.b16 %v593
        %v610 = vunpack.c.l.b16 %v594
        %v611 = vunpack.c.l.b16 %v595
        %v612 = vunpack.c.l.b16 %v596
        %v613 = vunpack.c.l.b16 %v597
        %v614 = vunpack.c.l.b16 %v598
        %v615 = vunpack.c.l.b16 %v599
        %v616 = vpack.c.b16 %v609, %v608
        %v617 = vpack.c.b16 %v611, %v610
        %v618 = vpack.c.b16 %v613, %v612
        %v619 = vpack.c.b16 %v615, %v614
        %624 = vmatpush.bf16.msra.mxu0 0
        %625 = vmatpush.bf16.msra.mxu0 0
        %626 = vmatpush.bf16.msra.mxu0 0
        %627 = vmatpush.bf16.msra.mxu0 0
        %628 = vmatpush.bf16.msra.mxu0 %v619
        %629 = vmatpush.bf16.msra.mxu0 %v618
        %630 = vmatpush.bf16.msra.mxu0 %v617
        %631 = vmatpush.bf16.msra.mxu0 %v616
        %632 = vmatmul.bf16.gmra.mxu0 %v575
        %v633 = vpop.f32.mrf.mxu0
        %v634 = vadd.f32 0.0, %v633
        %v635 = vpop.f32.mrf.mxu0
        %636 = vdwg.mxu0
        %637 = vst.msk [vmem:[#allocation8] sm:$0xff] %vm590, %v634
        %v638 = vld [vmem:[%s4] sm:$0xf]
        %v639 = vld [vmem:[%s4 + $0x4] sm:$0xf]
        %v640 = vld [vmem:[%s4 + $0x8] sm:$0xf]
        %v641 = vld [vmem:[%s4 + $0xc] sm:$0xf]
        %v642 = vld [vmem:[%s4 + $0x10] sm:$0xf]
        %v643 = vld [vmem:[%s4 + $0x14] sm:$0xf]
        %v644 = vld [vmem:[%s4 + $0x18] sm:$0xf]
        %v645 = vld [vmem:[%s4 + $0x1c] sm:$0xf]
        %v654 = vunpack.c.l.b16 %v638
        %v655 = vunpack.c.l.b16 %v639
        %v656 = vunpack.c.l.b16 %v640
        %v657 = vunpack.c.l.b16 %v641
        %v658 = vunpack.c.l.b16 %v642
        %v659 = vunpack.c.l.b16 %v643
        %v660 = vunpack.c.l.b16 %v644
        %v661 = vunpack.c.l.b16 %v645
        %v662 = vpack.c.b16 %v655, %v654
        %v663 = vpack.c.b16 %v657, %v656
        %v664 = vpack.c.b16 %v659, %v658
        %v665 = vpack.c.b16 %v661, %v660
        %670 = vmatpush.bf16.msra.mxu0 0
        %671 = vmatpush.bf16.msra.mxu0 0
        %672 = vmatpush.bf16.msra.mxu0 0
        %673 = vmatpush.bf16.msra.mxu0 0
        %674 = vmatpush.bf16.msra.mxu0 %v665
        %675 = vmatpush.bf16.msra.mxu0 %v664
        %676 = vmatpush.bf16.msra.mxu0 %v663
        %677 = vmatpush.bf16.msra.mxu0 %v662
        %678 = vmatmul.bf16.gmra.mxu0 %v575
        %v679 = vpop.f32.mrf.mxu0
        %v680 = vadd.f32 0.0, %v679
        %v681 = vpop.f32.mrf.mxu0
        %682 = vdwg.mxu0
        %v683 = vpack.c.bf16 %v680, %v680
        %v684 = vld [vmem:[%s7] sm:$0x1]
        %v685 = vld [vmem:[%s8] sm:$0x1]
        %v687 = vperm.slane %v685, 0
        %vm689 = vcmask 15360
        %v691 = vsel %vm689, %v683, 0
        %vm693 = vcmask 1040384
        %v695 = vsel %vm693, %v684, 0
        %697 = vmatpush.bf16.msra.mxu0 0
        %698 = vmatpush.bf16.msra.mxu0 0
        %699 = vmatpush.bf16.msra.mxu0 0
        %700 = vmatpush.bf16.msra.mxu0 0
        %701 = vmatpush.bf16.msra.mxu0 0
        %702 = vmatpush.bf16.msra.mxu0 0
        %703 = vmatpush.bf16.msra.mxu0 0
        %704 = vmatpush.bf16.msra.mxu0 %v695
        %705 = vmatmul.bf16.gmra.mxu0 %v691
        %v706 = vpop.f32.mrf.mxu0
        %v707 = vadd.f32 %v687, %v706
        %v708 = vpop.f32.mrf.mxu0
        %709 = vdwg.mxu0
        %v710 = vmax.f32 %v707, 0.0
        %v711 = vand.u32 2147483647, %v707
        %v712 = vsub.f32 0.0, %v711
        %v713 = vmul.f32 %v712, 1.442695
        %v714 = vpow.pop %v713
        %v715 = vadd.f32 %v714, 1.0
        %v716 = vlog2.pop %v715
        %v717 = vmul.f32 %v716, 0.6931472
        %v718 = vadd.f32 %v710, %v717
        %719 = vst.msk [vmem:[#allocation4] sm:$0xff] %vm492, %v718
        %v720 = vld [vmem:[%s9] sm:$0xff]
        %v721 = vld [vmem:[%s9 + $0x8] sm:$0xff]
        %v722 = vld [vmem:[%s10] sm:$0x1]
        %v723 = vld [vmem:[#allocation4] sm:$0xff]
        %v724 = vld [vmem:[#allocation3] sm:$0xff]
        %v725 = vmul.f32 %v723, %v724
        %v726 = vld [vmem:[#allocation7] sm:$0xff]
        %v727 = vperm.slane %v726, 0
        %v728 = vlaneseq
        %v729 = vshrl.u32 %v728, 7
        %731 = vset.pattern.permute.xlu0 %v729
        %732 = vperm.xlu0 %731, %v727
        %v733 = vpop.permute.xlu0 %732
        %v734 = vlaneseq
        %v735 = vshrl.u32 %v734, 7
        %v736 = vadd.s32 %v735, 8
        %737 = vset.pattern.permute.xlu0 %v736
        %738 = vperm.xlu0 %737, %v727
        %v739 = vpop.permute.xlu0 %738
        %v740 = vperm.slane %v726, 1
        %v741 = vlaneseq
        %v742 = vshrl.u32 %v741, 7
        %744 = vset.pattern.permute.xlu0 %v742
        %745 = vperm.xlu0 %744, %v740
        %v746 = vpop.permute.xlu0 %745
        %v747 = vlaneseq
        %v748 = vshrl.u32 %v747, 7
        %v749 = vadd.s32 %v748, 8
        %750 = vset.pattern.permute.xlu0 %v749
        %751 = vperm.xlu0 %750, %v740
        %v752 = vpop.permute.xlu0 %751
        %v753 = vperm.slane %v726, 2
        %v754 = vlaneseq
        %v755 = vshrl.u32 %v754, 7
        %757 = vset.pattern.permute.xlu0 %v755
        %758 = vperm.xlu0 %757, %v753
        %v759 = vpop.permute.xlu0 %758
        %v760 = vlaneseq
        %v761 = vshrl.u32 %v760, 7
        %v762 = vadd.s32 %v761, 8
        %763 = vset.pattern.permute.xlu0 %v762
        %764 = vperm.xlu0 %763, %v753
        %v765 = vpop.permute.xlu0 %764
        %v766 = vperm.slane %v726, 3
        %v767 = vlaneseq
        %v768 = vshrl.u32 %v767, 7
        %770 = vset.pattern.permute.xlu0 %v768
        %771 = vperm.xlu0 %770, %v766
        %v772 = vpop.permute.xlu0 %771
        %v773 = vlaneseq
        %v774 = vshrl.u32 %v773, 7
        %v775 = vadd.s32 %v774, 8
        %776 = vset.pattern.permute.xlu0 %v775
        %777 = vperm.xlu0 %776, %v766
        %v778 = vpop.permute.xlu0 %777
        %v779 = vperm.slane %v726, 4
        %v780 = vlaneseq
        %v781 = vshrl.u32 %v780, 7
        %783 = vset.pattern.permute.xlu0 %v781
        %784 = vperm.xlu0 %783, %v779
        %v785 = vpop.permute.xlu0 %784
        %v786 = vlaneseq
        %v787 = vshrl.u32 %v786, 7
        %v788 = vadd.s32 %v787, 8
        %789 = vset.pattern.permute.xlu0 %v788
        %790 = vperm.xlu0 %789, %v779
        %v791 = vpop.permute.xlu0 %790
        %v792 = vperm.slane %v726, 5
        %v793 = vlaneseq
        %v794 = vshrl.u32 %v793, 7
        %796 = vset.pattern.permute.xlu0 %v794
        %797 = vperm.xlu0 %796, %v792
        %v798 = vpop.permute.xlu0 %797
        %v799 = vlaneseq
        %v800 = vshrl.u32 %v799, 7
        %v801 = vadd.s32 %v800, 8
        %802 = vset.pattern.permute.xlu0 %v801
        %803 = vperm.xlu0 %802, %v792
        %v804 = vpop.permute.xlu0 %803
        %v805 = vperm.slane %v726, 6
        %v806 = vlaneseq
        %v807 = vshrl.u32 %v806, 7
        %809 = vset.pattern.permute.xlu0 %v807
        %810 = vperm.xlu0 %809, %v805
        %v811 = vpop.permute.xlu0 %810
        %v812 = vlaneseq
        %v813 = vshrl.u32 %v812, 7
        %v814 = vadd.s32 %v813, 8
        %815 = vset.pattern.permute.xlu0 %v814
        %816 = vperm.xlu0 %815, %v805
        %v817 = vpop.permute.xlu0 %816
        %v818 = vperm.slane %v726, 7
        %v819 = vlaneseq
        %v820 = vshrl.u32 %v819, 7
        %822 = vset.pattern.permute.xlu0 %v820
        %823 = vperm.xlu0 %822, %v818
        %v824 = vpop.permute.xlu0 %823
        %v825 = vlaneseq
        %v826 = vshrl.u32 %v825, 7
        %v827 = vadd.s32 %v826, 8
        %828 = vset.pattern.permute.xlu0 %v827
        %829 = vperm.xlu0 %828, %v818
        %v830 = vpop.permute.xlu0 %829
        %v831 = vld [vmem:[#allocation8] sm:$0xff]
        %v832 = vperm.slane %v831, 0
        %v833 = vlaneseq
        %v834 = vshrl.u32 %v833, 7
        %836 = vset.pattern.permute.xlu0 %v834
        %837 = vperm.xlu0 %836, %v832
        %v838 = vpop.permute.xlu0 %837
        %v839 = vlaneseq
        %v840 = vshrl.u32 %v839, 7
        %v841 = vadd.s32 %v840, 8
        %842 = vset.pattern.permute.xlu0 %v841
        %843 = vperm.xlu0 %842, %v832
        %v844 = vpop.permute.xlu0 %843
        %v845 = vperm.slane %v831, 1
        %v846 = vlaneseq
        %v847 = vshrl.u32 %v846, 7
        %849 = vset.pattern.permute.xlu0 %v847
        %850 = vperm.xlu0 %849, %v845
        %v851 = vpop.permute.xlu0 %850
        %v852 = vlaneseq
        %v853 = vshrl.u32 %v852, 7
        %v854 = vadd.s32 %v853, 8
        %855 = vset.pattern.permute.xlu0 %v854
        %856 = vperm.xlu0 %855, %v845
        %v857 = vpop.permute.xlu0 %856
        %v858 = vperm.slane %v831, 2
        %v859 = vlaneseq
        %v860 = vshrl.u32 %v859, 7
        %862 = vset.pattern.permute.xlu0 %v860
        %863 = vperm.xlu0 %862, %v858
        %v864 = vpop.permute.xlu0 %863
        %v865 = vlaneseq
        %v866 = vshrl.u32 %v865, 7
        %v867 = vadd.s32 %v866, 8
        %868 = vset.pattern.permute.xlu0 %v867
        %869 = vperm.xlu0 %868, %v858
        %v870 = vpop.permute.xlu0 %869
        %v871 = vperm.slane %v831, 3
        %v872 = vlaneseq
        %v873 = vshrl.u32 %v872, 7
        %875 = vset.pattern.permute.xlu0 %v873
        %876 = vperm.xlu0 %875, %v871
        %v877 = vpop.permute.xlu0 %876
        %v878 = vlaneseq
        %v879 = vshrl.u32 %v878, 7
        %v880 = vadd.s32 %v879, 8
        %881 = vset.pattern.permute.xlu0 %v880
        %882 = vperm.xlu0 %881, %v871
        %v883 = vpop.permute.xlu0 %882
        %v884 = vperm.slane %v831, 4
        %v885 = vlaneseq
        %v886 = vshrl.u32 %v885, 7
        %888 = vset.pattern.permute.xlu0 %v886
        %889 = vperm.xlu0 %888, %v884
        %v890 = vpop.permute.xlu0 %889
        %v891 = vlaneseq
        %v892 = vshrl.u32 %v891, 7
        %v893 = vadd.s32 %v892, 8
        %894 = vset.pattern.permute.xlu0 %v893
        %895 = vperm.xlu0 %894, %v884
        %v896 = vpop.permute.xlu0 %895
        %v897 = vperm.slane %v831, 5
        %v898 = vlaneseq
        %v899 = vshrl.u32 %v898, 7
        %901 = vset.pattern.permute.xlu0 %v899
        %902 = vperm.xlu0 %901, %v897
        %v903 = vpop.permute.xlu0 %902
        %v904 = vlaneseq
        %v905 = vshrl.u32 %v904, 7
        %v906 = vadd.s32 %v905, 8
        %907 = vset.pattern.permute.xlu0 %v906
        %908 = vperm.xlu0 %907, %v897
        %v909 = vpop.permute.xlu0 %908
        %v910 = vperm.slane %v831, 6
        %v911 = vlaneseq
        %v912 = vshrl.u32 %v911, 7
        %914 = vset.pattern.permute.xlu0 %v912
        %915 = vperm.xlu0 %914, %v910
        %v916 = vpop.permute.xlu0 %915
        %v917 = vlaneseq
        %v918 = vshrl.u32 %v917, 7
        %v919 = vadd.s32 %v918, 8
        %920 = vset.pattern.permute.xlu0 %v919
        %921 = vperm.xlu0 %920, %v910
        %v922 = vpop.permute.xlu0 %921
        %v923 = vperm.slane %v831, 7
        %v924 = vlaneseq
        %v925 = vshrl.u32 %v924, 7
        %927 = vset.pattern.permute.xlu0 %v925
        %928 = vperm.xlu0 %927, %v923
        %v929 = vpop.permute.xlu0 %928
        %v930 = vlaneseq
        %v931 = vshrl.u32 %v930, 7
        %v932 = vadd.s32 %v931, 8
        %933 = vset.pattern.permute.xlu0 %v932
        %934 = vperm.xlu0 %933, %v923
        %v935 = vpop.permute.xlu0 %934
        %v936 = vld [vmem:[#allocation5] sm:$0xff]
        %v938 = vrot.slane %v723, 1
        %v939 = vrot.slane %v723, 2
        %v940 = vrot.slane %v723, 3
        %v941 = vrot.slane %v723, 4
        %v942 = vrot.slane %v723, 5
        %v943 = vrot.slane %v723, 6
        %v944 = vrot.slane %v723, 7
        %v945 = vperm.slane %v723, 0
        %v946 = vperm.slane %v938, 0
        %v947 = vperm.slane %v939, 0
        %v948 = vperm.slane %v940, 0
        %v949 = vperm.slane %v941, 0
        %v950 = vperm.slane %v942, 0
        %v951 = vperm.slane %v943, 0
        %v952 = vperm.slane %v944, 0
        %v961 = vmul.f32 %v945, %v720
        %v962 = vmul.f32 %v945, %v721
        %v963 = vmul.f32 %v946, %v720
        %v964 = vmul.f32 %v946, %v721
        %v965 = vmul.f32 %v947, %v720
        %v966 = vmul.f32 %v947, %v721
        %v967 = vmul.f32 %v948, %v720
        %v968 = vmul.f32 %v948, %v721
        %v969 = vmul.f32 %v949, %v720
        %v970 = vmul.f32 %v949, %v721
        %v971 = vmul.f32 %v950, %v720
        %v972 = vmul.f32 %v950, %v721
        %v973 = vmul.f32 %v951, %v720
        %v974 = vmul.f32 %v951, %v721
        %v975 = vmul.f32 %v952, %v720
        %v976 = vmul.f32 %v952, %v721
        %v977 = vmul.f32 %v961, 1.442695
        %v978 = vpow.pop %v977
        %v979 = vmul.f32 %v962, 1.442695
        %v980 = vpow.pop %v979
        %v981 = vmul.f32 %v963, 1.442695
        %v982 = vpow.pop %v981
        %v983 = vmul.f32 %v964, 1.442695
        %v984 = vpow.pop %v983
        %v985 = vmul.f32 %v965, 1.442695
        %v986 = vpow.pop %v985
        %v987 = vmul.f32 %v966, 1.442695
        %v988 = vpow.pop %v987
        %v989 = vmul.f32 %v967, 1.442695
        %v990 = vpow.pop %v989
        %v991 = vmul.f32 %v968, 1.442695
        %v992 = vpow.pop %v991
        %v993 = vmul.f32 %v969, 1.442695
        %v994 = vpow.pop %v993
        %v995 = vmul.f32 %v970, 1.442695
        %v996 = vpow.pop %v995
        %v997 = vmul.f32 %v971, 1.442695
        %v998 = vpow.pop %v997
        %v999 = vmul.f32 %v972, 1.442695
        %v1000 = vpow.pop %v999
        %v1001 = vmul.f32 %v973, 1.442695
        %v1002 = vpow.pop %v1001
        %v1003 = vmul.f32 %v974, 1.442695
        %v1004 = vpow.pop %v1003
        %v1005 = vmul.f32 %v975, 1.442695
        %v1006 = vpow.pop %v1005
        %v1007 = vmul.f32 %v976, 1.442695
        %v1008 = vpow.pop %v1007
        %v1010 = vrot.slane %v725, 1
        %v1011 = vrot.slane %v725, 2
        %v1012 = vrot.slane %v725, 3
        %v1013 = vrot.slane %v725, 4
        %v1014 = vrot.slane %v725, 5
        %v1015 = vrot.slane %v725, 6
        %v1016 = vrot.slane %v725, 7
        %v1017 = vperm.slane %v725, 0
        %v1018 = vperm.slane %v1010, 0
        %v1019 = vperm.slane %v1011, 0
        %v1020 = vperm.slane %v1012, 0
        %v1021 = vperm.slane %v1013, 0
        %v1022 = vperm.slane %v1014, 0
        %v1023 = vperm.slane %v1015, 0
        %v1024 = vperm.slane %v1016, 0
        %v1033 = vmul.f32 %v1017, %v733
        %v1034 = vmul.f32 %v1017, %v739
        %v1035 = vmul.f32 %v1018, %v746
        %v1036 = vmul.f32 %v1018, %v752
        %v1037 = vmul.f32 %v1019, %v759
        %v1038 = vmul.f32 %v1019, %v765
        %v1039 = vmul.f32 %v1020, %v772
        %v1040 = vmul.f32 %v1020, %v778
        %v1041 = vmul.f32 %v1021, %v785
        %v1042 = vmul.f32 %v1021, %v791
        %v1043 = vmul.f32 %v1022, %v798
        %v1044 = vmul.f32 %v1022, %v804
        %v1045 = vmul.f32 %v1023, %v811
        %v1046 = vmul.f32 %v1023, %v817
        %v1047 = vmul.f32 %v1024, %v824
        %v1048 = vmul.f32 %v1024, %v830
        %v1049 = vld [vmem:[#allocation9] sm:$0xff]
        %v1050 = vld [vmem:[#allocation9 + $0x8] sm:$0xff]
        %v1051 = vmul.f32 %v1049, %v978
        %v1052 = vmul.f32 %v1050, %v980
        %v1053 = vadd.f32 %v1051, %v1033
        %v1054 = vadd.f32 %v1052, %v1034
        %v1055 = vmul.f32 %v1053, %v982
        %v1056 = vmul.f32 %v1054, %v984
        %v1057 = vadd.f32 %v1055, %v1035
        %v1058 = vadd.f32 %v1056, %v1036
        %v1059 = vmul.f32 %v1057, %v986
        %v1060 = vmul.f32 %v1058, %v988
        %v1061 = vadd.f32 %v1059, %v1037
        %v1062 = vadd.f32 %v1060, %v1038
        %v1063 = vmul.f32 %v1061, %v990
        %v1064 = vmul.f32 %v1062, %v992
        %v1065 = vadd.f32 %v1063, %v1039
        %v1066 = vadd.f32 %v1064, %v1040
        %v1067 = vmul.f32 %v1065, %v994
        %v1068 = vmul.f32 %v1066, %v996
        %v1069 = vadd.f32 %v1067, %v1041
        %v1070 = vadd.f32 %v1068, %v1042
        %v1071 = vmul.f32 %v1069, %v998
        %v1072 = vmul.f32 %v1070, %v1000
        %v1073 = vadd.f32 %v1071, %v1043
        %v1074 = vadd.f32 %v1072, %v1044
        %v1075 = vmul.f32 %v1073, %v1002
        %v1076 = vmul.f32 %v1074, %v1004
        %v1077 = vadd.f32 %v1075, %v1045
        %v1078 = vadd.f32 %v1076, %v1046
        %v1079 = vmul.f32 %v1077, %v1006
        %v1080 = vmul.f32 %v1078, %v1008
        %v1081 = vadd.f32 %v1079, %v1047
        %v1082 = vadd.f32 %v1080, %v1048
        %1083 = vst.msk [vmem:[#allocation9] sm:$0xff] %vm492, %v1081
        %1084 = vst.msk [vmem:[#allocation9 + $0x8] sm:$0xff] %vm492, %v1082
        %v1085 = vmul.f32 %v1053, %v838
        %v1086 = vmul.f32 %v1054, %v844
        %v1087 = vmul.f32 %v1057, %v851
        %v1088 = vmul.f32 %v1058, %v857
        %v1089 = vmul.f32 %v1061, %v864
        %v1090 = vmul.f32 %v1062, %v870
        %v1091 = vmul.f32 %v1065, %v877
        %v1092 = vmul.f32 %v1066, %v883
        %v1093 = vmul.f32 %v1069, %v890
        %v1094 = vmul.f32 %v1070, %v896
        %v1095 = vmul.f32 %v1073, %v903
        %v1096 = vmul.f32 %v1074, %v909
        %v1097 = vmul.f32 %v1077, %v916
        %v1098 = vmul.f32 %v1078, %v922
        %v1099 = vmul.f32 %v1081, %v929
        %v1100 = vmul.f32 %v1082, %v935
        %v1101 = vsel %vm492, %v1085, 0.0
        %v1102 = vsel %vm492, %v1086, 0.0
        %v1103 = vadd.f32 %v1101, %v1102
        %v1104 = vrot.slane %v1103, 4
        %v1105 = vadd.f32 %v1103, %v1104
        %v1106 = vrot.slane %v1105, 2
        %v1107 = vadd.f32 %v1105, %v1106
        %v1108 = vrot.slane %v1107, 1
        %v1109 = vadd.f32 %v1107, %v1108
        %v1110 = vsel %vm492, %v1087, 0.0
        %v1111 = vsel %vm492, %v1088, 0.0
        %v1112 = vadd.f32 %v1110, %v1111
        %v1113 = vrot.slane %v1112, 4
        %v1114 = vadd.f32 %v1112, %v1113
        %v1115 = vrot.slane %v1114, 2
        %v1116 = vadd.f32 %v1114, %v1115
        %v1117 = vrot.slane %v1116, 1
        %v1118 = vadd.f32 %v1116, %v1117
        %v1119 = vsel %vm492, %v1089, 0.0
        %v1120 = vsel %vm492, %v1090, 0.0
        %v1121 = vadd.f32 %v1119, %v1120
        %v1122 = vrot.slane %v1121, 4
        %v1123 = vadd.f32 %v1121, %v1122
        %v1124 = vrot.slane %v1123, 2
        %v1125 = vadd.f32 %v1123, %v1124
        %v1126 = vrot.slane %v1125, 1
        %v1127 = vadd.f32 %v1125, %v1126
        %v1128 = vsel %vm492, %v1091, 0.0
        %v1129 = vsel %vm492, %v1092, 0.0
        %v1130 = vadd.f32 %v1128, %v1129
        %v1131 = vrot.slane %v1130, 4
        %v1132 = vadd.f32 %v1130, %v1131
        %v1133 = vrot.slane %v1132, 2
        %v1134 = vadd.f32 %v1132, %v1133
        %v1135 = vrot.slane %v1134, 1
        %v1136 = vadd.f32 %v1134, %v1135
        %v1137 = vsel %vm492, %v1093, 0.0
        %v1138 = vsel %vm492, %v1094, 0.0
        %v1139 = vadd.f32 %v1137, %v1138
        %v1140 = vrot.slane %v1139, 4
        %v1141 = vadd.f32 %v1139, %v1140
        %v1142 = vrot.slane %v1141, 2
        %v1143 = vadd.f32 %v1141, %v1142
        %v1144 = vrot.slane %v1143, 1
        %v1145 = vadd.f32 %v1143, %v1144
        %v1146 = vsel %vm492, %v1095, 0.0
        %v1147 = vsel %vm492, %v1096, 0.0
        %v1148 = vadd.f32 %v1146, %v1147
        %v1149 = vrot.slane %v1148, 4
        %v1150 = vadd.f32 %v1148, %v1149
        %v1151 = vrot.slane %v1150, 2
        %v1152 = vadd.f32 %v1150, %v1151
        %v1153 = vrot.slane %v1152, 1
        %v1154 = vadd.f32 %v1152, %v1153
        %v1155 = vsel %vm492, %v1097, 0.0
        %v1156 = vsel %vm492, %v1098, 0.0
        %v1157 = vadd.f32 %v1155, %v1156
        %v1158 = vrot.slane %v1157, 4
        %v1159 = vadd.f32 %v1157, %v1158
        %v1160 = vrot.slane %v1159, 2
        %v1161 = vadd.f32 %v1159, %v1160
        %v1162 = vrot.slane %v1161, 1
        %v1163 = vadd.f32 %v1161, %v1162
        %v1164 = vsel %vm492, %v1099, 0.0
        %v1165 = vsel %vm492, %v1100, 0.0
        %v1166 = vadd.f32 %v1164, %v1165
        %v1167 = vrot.slane %v1166, 4
        %v1168 = vadd.f32 %v1166, %v1167
        %v1169 = vrot.slane %v1168, 2
        %v1170 = vadd.f32 %v1168, %v1169
        %v1171 = vrot.slane %v1170, 1
        %v1172 = vadd.f32 %v1170, %v1171
        %v1174 = vperm.slane %v722, 0
        %v1176 = vmul.f32 %v1174, %v724
        %v1178 = vrot.slane %v1176, 1
        %v1179 = vrot.slane %v1176, 2
        %v1180 = vrot.slane %v1176, 3
        %v1181 = vrot.slane %v1176, 4
        %v1182 = vrot.slane %v1176, 5
        %v1183 = vrot.slane %v1176, 6
        %v1184 = vrot.slane %v1176, 7
        %v1193 = vadd.f32 %v1109, %v1176
        %v1194 = vadd.f32 %v1118, %v1178
        %v1195 = vadd.f32 %v1127, %v1179
        %v1196 = vadd.f32 %v1136, %v1180
        %v1197 = vadd.f32 %v1145, %v1181
        %v1198 = vadd.f32 %v1154, %v1182
        %v1199 = vadd.f32 %v1163, %v1183
        %v1200 = vadd.f32 %v1172, %v1184
        %v1201 = vsub.f32 0.0, %v936
        %v1202 = vmul.f32 %v1201, 1.442695
        %v1203 = vpow.pop %v1202
        %v1204 = vadd.f32 %v1203, 1.0
        %v1205 = vrcp.pop %v1204
        %v1206 = vmul.f32 %v1204, %v1205
        %v1207 = vsub.f32 1.0, %v1206
        %v1208 = vmul.f32 %v1205, %v1207
        %v1209 = vadd.f32 %v1205, %v1208
        %vm1210 = vweird.f32 %v1204
        %vm1211 = vweird.f32 %v1205
        %vm1212 = vmor %vm1210, %vm1211
        %v1213 = vsel %vm1212, %v1205, %v1209
        %v1214 = vand.u32 2147483647, %v1204
        %vm1215 = vcmp.eq.f32.partialorder %v1214, 8.507059e+37
        %v1216 = vand.u32 %v1204, 2147483648
        %v1217 = vor.u32 1.1754944e-38, %v1216
        %v1218 = vsel %vm1215, %v1217, %v1213
        %v1219 = vmul.f32 1.0, %v1218
        %v1220 = vmul.f32 %v936, %v1219
        %v1222 = vrot.slane %v1220, 1
        %v1223 = vrot.slane %v1220, 2
        %v1224 = vrot.slane %v1220, 3
        %v1225 = vrot.slane %v1220, 4
        %v1226 = vrot.slane %v1220, 5
        %v1227 = vrot.slane %v1220, 6
        %v1228 = vrot.slane %v1220, 7
        %v1237 = vmul.f32 %v1193, %v1220
        %v1238 = vmul.f32 %v1194, %v1222
        %v1239 = vmul.f32 %v1195, %v1223
        %v1240 = vmul.f32 %v1196, %v1224
        %v1241 = vmul.f32 %v1197, %v1225
        %v1242 = vmul.f32 %v1198, %v1226
        %v1243 = vmul.f32 %v1199, %v1227
        %v1244 = vmul.f32 %v1200, %v1228
        %v1253 = vrot.slane %v1238, 7
        %vm1254 = vcmask 1041409
        %v1255 = vsel %vm1254, %v1253, %v1237
        %v1256 = vrot.slane %v1239, 6
        %vm1257 = vcmask 1042434
        %v1258 = vsel %vm1257, %v1256, %v1255
        %v1259 = vrot.slane %v1240, 5
        %vm1260 = vcmask 1043459
        %v1261 = vsel %vm1260, %v1259, %v1258
        %v1262 = vrot.slane %v1241, 4
        %vm1263 = vcmask 1044484
        %v1264 = vsel %vm1263, %v1262, %v1261
        %v1265 = vrot.slane %v1242, 3
        %vm1266 = vcmask 1045509
        %v1267 = vsel %vm1266, %v1265, %v1264
        %v1268 = vrot.slane %v1243, 2
        %vm1269 = vcmask 1046534
        %v1270 = vsel %vm1269, %v1268, %v1267
        %v1271 = vrot.slane %v1244, 1
        %vm1272 = vcmask 1047559
        %v1273 = vsel %vm1272, %v1271, %v1270
        %1275 = vst.msk [vmem:[#allocation6] sm:$0xff] %vm492, %v1273
        %v1276 = vld [vmem:[#allocation6] sm:$0xff]
        %v1277 = vpack.c.bf16 %v1276, %v1276
        %v1278 = vld [vmem:[%s11] sm:$0xf]
        %v1279 = vld [vmem:[%s11 + $0x4] sm:$0xf]
        %v1280 = vld [vmem:[%s11 + $0x8] sm:$0xf]
        %v1281 = vld [vmem:[%s11 + $0xc] sm:$0xf]
        %v1282 = vld [vmem:[%s11 + $0x10] sm:$0xf]
        %v1283 = vld [vmem:[%s11 + $0x14] sm:$0xf]
        %v1284 = vld [vmem:[%s11 + $0x18] sm:$0xf]
        %v1285 = vld [vmem:[%s11 + $0x1c] sm:$0xf]
        %v1294 = vunpack.c.l.b16 %v1278
        %v1295 = vunpack.c.l.b16 %v1279
        %v1296 = vunpack.c.l.b16 %v1280
        %v1297 = vunpack.c.l.b16 %v1281
        %v1298 = vunpack.c.l.b16 %v1282
        %v1299 = vunpack.c.l.b16 %v1283
        %v1300 = vunpack.c.l.b16 %v1284
        %v1301 = vunpack.c.l.b16 %v1285
        %v1302 = vpack.c.b16 %v1295, %v1294
        %v1303 = vpack.c.b16 %v1297, %v1296
        %v1304 = vpack.c.b16 %v1299, %v1298
        %v1305 = vpack.c.b16 %v1301, %v1300
        %v1311 = vsel %vm492, %v1277, 0
        %1313 = vmatpush.bf16.msra.mxu0 0
        %1314 = vmatpush.bf16.msra.mxu0 0
        %1315 = vmatpush.bf16.msra.mxu0 0
        %1316 = vmatpush.bf16.msra.mxu0 0
        %1317 = vmatpush.bf16.msra.mxu0 %v1305
        %1318 = vmatpush.bf16.msra.mxu0 %v1304
        %1319 = vmatpush.bf16.msra.mxu0 %v1303
        %1320 = vmatpush.bf16.msra.mxu0 %v1302
        %1321 = vmatmul.bf16.gmra.mxu0 %v1311
        %v1322 = vpop.f32.mrf.mxu0
        %v1323 = vadd.f32 0.0, %v1322
        %v1324 = vpop.f32.mrf.mxu0
        %1325 = vdwg.mxu0
        %1326 = vst.msk [vmem:[%s428] sm:$0xff] %vm471, %v1323
        %s1327 = sand.u32 %s307, 1
        %s1328 = scalar_lea.sflag [#allocation11], %s1327
        %s1329 = sand.u32 %s307, 1
        %s1330 = smul.addr %s1329, 8
        %s1331 = scalar_lea.vmem [#allocation10], %s1330
        // Predicated region
        $region77: #{tpu_custom_call.1} parent=67 // pred_check
          %p1332 = pneg %p317
        $region78: #{tpu_custom_call.1} parent=67 // pred_check_branch
          %1334 = sbr.rel (%p1332) target = $region80
        $region79: #{tpu_custom_call.1} parent=67 // pred_region
          %1336 = vsyncadd %s1328, 0
          %s1337 = smul.addr %s30, 2
          %s1338 = sadd.s32 %s31, %s1337
          %s1339 = smul.addr %s1338, 8
          %s1340 = scalar_lea.hbm %s12, %s1339
          %s1342 = sshll.u32 %s1331, 4
          %s1343 = int_to_ptr.vmem [resolvable:$true] %s1342
          %s1344 = sshll.u32 %s1340, 4
          %s1345 = int_to_ptr.hbm [resolvable:$true] %s1344
          %1347 = dma.vmem_to_hbm [thread:$0]  %s1343, 128, %s1345, %s1328
        $region80: #{tpu_custom_call.1} parent=67 // pred_fallthru
          _
      $region68: #{tpu_custom_call.1} parent=5 // pred_fallthru
        _
      %p1348 = scmp.le.s32.totalorder 2, %s21
      // Predicated region
      $region81: #{tpu_custom_call.1} parent=5 // pred_check
        %p1349 = pneg %p1348
      $region82: #{tpu_custom_call.1} parent=5 // pred_check_branch
        %1351 = sbr.rel (%p1349) target = $region84
      $region83: #{tpu_custom_call.1} parent=5 // pred_region
        %s1352 = ssub.s32 %s21, 2
        // Predicated region
        $region85: #{tpu_custom_call.1} parent=83 // pred_check
          %p1353 = pneg %p323
        $region86: #{tpu_custom_call.1} parent=83 // pred_check_branch
          %1355 = sbr.rel (%p1353) target = $region88
        $region87: #{tpu_custom_call.1} parent=83 // pred_region
          %s1356 = sand.u32 %s308, 1
          %s1357 = scalar_lea.sflag [#allocation11], %s1356
          %s1358 = sand.u32 %s308, 1
          %s1359 = smul.addr %s1358, 8
          %s1360 = scalar_lea.vmem [#allocation10], %s1359
          %1362 = dma.done %s1357, 128
        $region88: #{tpu_custom_call.1} parent=83 // pred_fallthru
          _
      $region84: #{tpu_custom_call.1} parent=5 // pred_fallthru
        _
    $region6: #{tpu_custom_call.1} parent=1 // loop_footer
      %s25 = sadd.s32 1, %s21
    $region7: #{tpu_custom_call.1} parent=1 // loop_footer_branch
      %20 = sbr.rel target = $region3
    $region8: #{tpu_custom_call.1} parent=1 // loop_exit
      _
    %1363 = vsyncpa [#allocation11], 1
    %s1364 = scalar_lea.sflag [#allocation11], 1
    %1365 = vsyncpa %s1364, 1

</llo_original>
